<compile_context>
chip_gen: v7x
topology: tpu7x:2x2x1
jax: 0.10.0
libtpu: 0.0.40
codegen_flags: <defaults>
</compile_context>

<pallas_src>
import functools

import jax
import jax.numpy as jnp
from jax.experimental import pallas as pl
from jax.experimental.pallas import tpu as pltpu


LANE = 128   # lane width (fan_out dims padded to this for lane-dense stores)
SUB = 16     # bf16 sublane-packing granularity (fan_in / tiny-width padding)


def _ru(n, m):
    return ((n + m - 1) // m) * m


def _forward_dims(input_dim, hid_dim):
    """True and padded widths of the 9 activation interfaces (x, 7 hidden, xhat)."""
    true = [input_dim, 500, 500, 2000, hid_dim, 2000, 500, 500, input_dim]
    padded = [_ru(input_dim, SUB), 512, 512, 2048, _ru(hid_dim, SUB),
              2048, 512, 512, _ru(input_dim, LANE)]
    return true, padded


# ----------------------------------------------------------------------------
# Fused kernel: encoder (4 Linear) + decoder (4 Linear), one launch per batch
# tile.  Weights arrive via manual async HBM->VMEM copies overlapped with the
# matmuls of earlier layers.
# ----------------------------------------------------------------------------
def _aae_fused_kernel(x_ref, b_ref, *refs):
    n = (len(refs) - 3) // 2          # number of Linear layers (= 8)
    w_hbm = refs[:n]                  # raw HBM refs (memory_space=pl.ANY)
    z_ref, xhat_ref = refs[n], refs[n + 1]
    w_vmem = refs[n + 2:2 * n + 2]    # per-layer VMEM scratch (single-buffered)
    sem = refs[2 * n + 2]             # DMA semaphores, shape (n,)

    # Kick off every weight copy up-front; layer k only waits on copy k, so
    # copies k+1..n-1 stream in underneath layer k's matmul.
    copies = [pltpu.make_async_copy(w_hbm[k], w_vmem[k], sem.at[k])
              for k in range(n)]
    for c in copies:
        c.start()

    # Dropout(p=0.1) is the identity in the eval-mode forward.
    h = x_ref[...].astype(jnp.bfloat16)
    for k in range(n):
        copies[k].wait()
        fo = w_vmem[k].shape[1]
        # bf16 operands on the MXU, f32 accumulation, f32 epilogue on the VPU.
        y = jnp.dot(h, w_vmem[k][...], preferred_element_type=jnp.float32)
        y = y + b_ref[k:k + 1, :fo]          # (1, fo) broadcast over batch tile
        if k == 3:                            # encoder bottleneck z (no ReLU)
            z_ref[...] = y
            h = y.astype(jnp.bfloat16)
        elif k == n - 1:                      # decoder output (no ReLU)
            xhat_ref[...] = y
        else:
            h = jnp.maximum(y, 0.0).astype(jnp.bfloat16)


def aae_forward(params, x, alpha, *, input_dim, hid_dim, batch_tile=512):
    """Returns (z, xhat, y) matching AAE.forward; y = GRL(z, alpha) = z in forward."""
    del alpha  # GRL's alpha only affects the backward pass
    w = params["w"]
    b_packed = params["b_packed"]
    n_layers = len(w)
    in_sub = w[0].shape[0]
    hid_pad = w[3].shape[1]
    out_lane = w[-1].shape[1]
    bias_w = b_packed.shape[1]

    B = x.shape[0]
    TB = min(batch_tile, _ru(B, 8))
    B_pad = _ru(B, TB)
    x_p = jnp.pad(x, ((0, B_pad - B), (0, in_sub - input_dim)))

    grid = (B_pad // TB,)
    in_specs = [pl.BlockSpec((TB, in_sub), lambda i: (i, 0)),
                pl.BlockSpec((n_layers, bias_w), lambda i: (0, 0))]
    in_specs += [pl.BlockSpec(memory_space=pl.ANY) for _ in range(n_layers)]
    out_specs = (pl.BlockSpec((TB, hid_pad), lambda i: (i, 0)),
                 pl.BlockSpec((TB, out_lane), lambda i: (i, 0)))
    scratch = [pltpu.VMEM(wk.shape, jnp.bfloat16) for wk in w]
    scratch += [pltpu.SemaphoreType.DMA((n_layers,))]

    z_full, xhat_full = pl.pallas_call(
        _aae_fused_kernel,
        out_shape=(jax.ShapeDtypeStruct((B_pad, hid_pad), jnp.float32),
                   jax.ShapeDtypeStruct((B_pad, out_lane), jnp.float32)),
        grid_spec=pltpu.PrefetchScalarGridSpec(
            num_scalar_prefetch=0,
            grid=grid,
            in_specs=in_specs,
            out_specs=out_specs,
            scratch_shapes=scratch),
        compiler_params=pltpu.CompilerParams(
            dimension_semantics=("parallel",),   # batch tiles split across TCs on v7x
            vmem_limit_bytes=32 << 20),
    )(x_p, b_packed, *w)

    z = z_full[:B, :hid_dim]
    xhat = xhat_full[:B, :input_dim]
    y = z  # GRL is identity in forward
    return z, xhat, y


# ----------------------------------------------------------------------------
# Parameter construction (deterministic, PyTorch nn.Linear-style init).
# Kernel weights: zero-padded bf16; biases: packed (8, 2048) f32.
# f32 unpadded copies kept for the fidelity reference.
# ----------------------------------------------------------------------------
def init_aae_params(key, input_dim, hid_dim):
    true, padded = _forward_dims(input_dim, hid_dim)
    n_layers = 8
    bias_w = max(padded[1:])
    keys = jax.random.split(key, n_layers + 4)

    layers_f32, w_pad = [], []
    b_packed = jnp.zeros((n_layers, bias_w), jnp.float32)
    for k in range(n_layers):
        fi, fo = true[k], true[k + 1]
        kw, kb = jax.random.split(keys[k])
        bound = 1.0 / (fi ** 0.5)
        w = jax.random.uniform(kw, (fi, fo), jnp.float32, -bound, bound)
        b = jax.random.uniform(kb, (fo,), jnp.float32, -bound, bound)
        layers_f32.append((w, b))
        wp = jnp.zeros((padded[k], padded[k + 1]), jnp.bfloat16)
        w_pad.append(wp.at[:fi, :fo].set(w.astype(jnp.bfloat16)))
        b_packed = b_packed.at[k, :fo].set(b)

    # Discriminator: part of the module, but AAE.forward() never uses it
    # (it returns y = GRL(z) = z).  Kept only for structural fidelity.
    dis_dims = [(hid_dim, 500), (500, 500), (500, 2000), (2000, 2)]
    disc = []
    for k, (fi, fo) in enumerate(dis_dims):
        kw, kb = jax.random.split(keys[n_layers + k])
        bound = 1.0 / (fi ** 0.5)
        disc.append((jax.random.uniform(kw, (fi, fo), jnp.float32, -bound, bound),
                     jax.random.uniform(kb, (fo,), jnp.float32, -bound, bound)))

    return {"w": w_pad, "b_packed": b_packed,
            "layers_f32": layers_f32, "discriminator_f32": disc}


# ----------------------------------------------------------------------------
# References.
#  * _reference_bf16 mirrors the kernel math exactly (padded bf16 weights,
#    f32 accumulation, bf16 inter-layer activations)  -> tight check.
#  * _reference_f32 is the true f32 module semantics     -> bounds bf16 drift.
# ----------------------------------------------------------------------------
def _reference_bf16(params, x, input_dim, hid_dim):
    w, b_packed = params["w"], params["b_packed"]
    in_sub = w[0].shape[0]
    h = jnp.pad(x, ((0, 0), (0, in_sub - input_dim))).astype(jnp.bfloat16)
    z = xhat = None
    for k in range(len(w)):
        fo = w[k].shape[1]
        y = jnp.dot(h, w[k], preferred_element_type=jnp.float32) + b_packed[k:k + 1, :fo]
        if k == 3:
            z = y
            h = y.astype(jnp.bfloat16)
        elif k == len(w) - 1:
            xhat = y
        else:
            h = jnp.maximum(y, 0.0).astype(jnp.bfloat16)
    return z[:, :hid_dim], xhat[:, :input_dim]


def _reference_f32(params, x):
    layers = params["layers_f32"]
    h = x
    z = None
    for k, (w, b) in enumerate(layers):
        h = h @ w + b
        if k == 3:
            z = h
        elif k != len(layers) - 1:
            h = jnp.maximum(h, 0.0)
    return z, h


def _rel_err(a, b):
    return float(jnp.linalg.norm(a - b) / (jnp.linalg.norm(b) + 1e-12))


# ----------------------------------------------------------------------------
if __name__ == "__main__":
    input_dim = 64
    hid_dim = 32
    batch = 8
    alpha = 0.5

    key = jax.random.PRNGKey(0)
    k_params, k_x = jax.random.split(key)
    params = init_aae_params(k_params, input_dim, hid_dim)
    x = jax.random.normal(k_x, (batch, input_dim), dtype=jnp.float32)

    forward = jax.jit(functools.partial(aae_forward,
                                        input_dim=input_dim, hid_dim=hid_dim))
    z, xhat, y = forward(params, x, alpha)
    jax.block_until_ready((z, xhat, y))

    assert z.shape == (batch, hid_dim)
    assert xhat.shape == (batch, input_dim)
    assert y.shape == (batch, hid_dim)
    assert bool(jnp.all(y == z))  # GRL is identity in forward

    # Tight check against a reference that mirrors the kernel's bf16/f32 math.
    z_bf, xhat_bf = _reference_bf16(params, x, input_dim, hid_dim)
    assert bool(jnp.allclose(z, z_bf, rtol=1e-3, atol=1e-3))
    assert bool(jnp.allclose(xhat, xhat_bf, rtol=1e-3, atol=1e-3))

    # Bound the drift vs. the true f32 module semantics (bf16 weight quantization).
    z_f32, xhat_f32 = _reference_f32(params, x)
    assert _rel_err(z, z_f32) < 5e-2
    assert _rel_err(xhat, xhat_f32) < 5e-2

    print("KERNEL_OK")
</pallas_src>

<mosaic_0001>
module attributes {stable_mosaic.version = 11 : i64} {
  func.func @_aae_fused_kernel(%arg0: i32, %arg1: memref<8x64xf32, #tpu.memory_space<vmem>>, %arg2: memref<8x2048xf32, #tpu.memory_space<vmem>>, %arg3: memref<64x512xbf16, #tpu.memory_space<any>>, %arg4: memref<512x512xbf16, #tpu.memory_space<any>>, %arg5: memref<512x2048xbf16, #tpu.memory_space<any>>, %arg6: memref<2048x32xbf16, #tpu.memory_space<any>>, %arg7: memref<32x2048xbf16, #tpu.memory_space<any>>, %arg8: memref<2048x512xbf16, #tpu.memory_space<any>>, %arg9: memref<512x512xbf16, #tpu.memory_space<any>>, %arg10: memref<512x128xbf16, #tpu.memory_space<any>>, %arg11: memref<8x32xf32, #tpu.memory_space<vmem>>, %arg12: memref<8x128xf32, #tpu.memory_space<vmem>>, %arg13: memref<64x512xbf16, #tpu.memory_space<vmem>>, %arg14: memref<512x512xbf16, #tpu.memory_space<vmem>>, %arg15: memref<512x2048xbf16, #tpu.memory_space<vmem>>, %arg16: memref<2048x32xbf16, #tpu.memory_space<vmem>>, %arg17: memref<32x2048xbf16, #tpu.memory_space<vmem>>, %arg18: memref<2048x512xbf16, #tpu.memory_space<vmem>>, %arg19: memref<512x512xbf16, #tpu.memory_space<vmem>>, %arg20: memref<512x128xbf16, #tpu.memory_space<vmem>>, %arg21: memref<8x!tpu.dma_semaphore, #tpu.memory_space<semaphore_mem>>) attributes {dimension_semantics = [#tpu.dimension_semantics<parallel>], iteration_bounds = array<i64: 1>, scalar_prefetch = 0 : i64, scratch_operands = 9 : i64, tpu.core_type = #tpu.core_type<tc>, window_params = [{transform_indices = @transform_0, window_bounds = array<i64: 8, 64>}, {pipeline_mode = #tpu.pipeline_mode<synchronous>, transform_indices = @transform_1, window_bounds = array<i64: 8, 2048>}, {}, {}, {}, {}, {}, {}, {}, {}, {transform_indices = @transform_10, window_bounds = array<i64: 8, 32>}, {transform_indices = @transform_11, window_bounds = array<i64: 8, 128>}]} {
    %c0_i32 = arith.constant 0 : i32
    %0 = tpu.memref_slice %arg21[%c0_i32] : memref<8x!tpu.dma_semaphore, #tpu.memory_space<semaphore_mem>> -> memref<1x!tpu.dma_semaphore, #tpu.memory_space<semaphore_mem>>
    %1 = tpu.memref_squeeze %0 : memref<1x!tpu.dma_semaphore, #tpu.memory_space<semaphore_mem>> -> memref<!tpu.dma_semaphore, #tpu.memory_space<semaphore_mem>>
    tpu.enqueue_dma source(%arg3 : memref<64x512xbf16, #tpu.memory_space<any>>) target(%arg13 : memref<64x512xbf16, #tpu.memory_space<vmem>>) target_semaphore(%1 : memref<!tpu.dma_semaphore, #tpu.memory_space<semaphore_mem>>)
    %c1_i32 = arith.constant 1 : i32
    %2 = tpu.memref_slice %arg21[%c1_i32] : memref<8x!tpu.dma_semaphore, #tpu.memory_space<semaphore_mem>> -> memref<1x!tpu.dma_semaphore, #tpu.memory_space<semaphore_mem>>
    %3 = tpu.memref_squeeze %2 : memref<1x!tpu.dma_semaphore, #tpu.memory_space<semaphore_mem>> -> memref<!tpu.dma_semaphore, #tpu.memory_space<semaphore_mem>>
    tpu.enqueue_dma source(%arg4 : memref<512x512xbf16, #tpu.memory_space<any>>) target(%arg14 : memref<512x512xbf16, #tpu.memory_space<vmem>>) target_semaphore(%3 : memref<!tpu.dma_semaphore, #tpu.memory_space<semaphore_mem>>)
    %c2_i32 = arith.constant 2 : i32
    %4 = tpu.memref_slice %arg21[%c2_i32] : memref<8x!tpu.dma_semaphore, #tpu.memory_space<semaphore_mem>> -> memref<1x!tpu.dma_semaphore, #tpu.memory_space<semaphore_mem>>
    %5 = tpu.memref_squeeze %4 : memref<1x!tpu.dma_semaphore, #tpu.memory_space<semaphore_mem>> -> memref<!tpu.dma_semaphore, #tpu.memory_space<semaphore_mem>>
    tpu.enqueue_dma source(%arg5 : memref<512x2048xbf16, #tpu.memory_space<any>>) target(%arg15 : memref<512x2048xbf16, #tpu.memory_space<vmem>>) target_semaphore(%5 : memref<!tpu.dma_semaphore, #tpu.memory_space<semaphore_mem>>)
    %c3_i32 = arith.constant 3 : i32
    %6 = tpu.memref_slice %arg21[%c3_i32] : memref<8x!tpu.dma_semaphore, #tpu.memory_space<semaphore_mem>> -> memref<1x!tpu.dma_semaphore, #tpu.memory_space<semaphore_mem>>
    %7 = tpu.memref_squeeze %6 : memref<1x!tpu.dma_semaphore, #tpu.memory_space<semaphore_mem>> -> memref<!tpu.dma_semaphore, #tpu.memory_space<semaphore_mem>>
    tpu.enqueue_dma source(%arg6 : memref<2048x32xbf16, #tpu.memory_space<any>>) target(%arg16 : memref<2048x32xbf16, #tpu.memory_space<vmem>>) target_semaphore(%7 : memref<!tpu.dma_semaphore, #tpu.memory_space<semaphore_mem>>)
    %c4_i32 = arith.constant 4 : i32
    %8 = tpu.memref_slice %arg21[%c4_i32] : memref<8x!tpu.dma_semaphore, #tpu.memory_space<semaphore_mem>> -> memref<1x!tpu.dma_semaphore, #tpu.memory_space<semaphore_mem>>
    %9 = tpu.memref_squeeze %8 : memref<1x!tpu.dma_semaphore, #tpu.memory_space<semaphore_mem>> -> memref<!tpu.dma_semaphore, #tpu.memory_space<semaphore_mem>>
    tpu.enqueue_dma source(%arg7 : memref<32x2048xbf16, #tpu.memory_space<any>>) target(%arg17 : memref<32x2048xbf16, #tpu.memory_space<vmem>>) target_semaphore(%9 : memref<!tpu.dma_semaphore, #tpu.memory_space<semaphore_mem>>)
    %c5_i32 = arith.constant 5 : i32
    %10 = tpu.memref_slice %arg21[%c5_i32] : memref<8x!tpu.dma_semaphore, #tpu.memory_space<semaphore_mem>> -> memref<1x!tpu.dma_semaphore, #tpu.memory_space<semaphore_mem>>
    %11 = tpu.memref_squeeze %10 : memref<1x!tpu.dma_semaphore, #tpu.memory_space<semaphore_mem>> -> memref<!tpu.dma_semaphore, #tpu.memory_space<semaphore_mem>>
    tpu.enqueue_dma source(%arg8 : memref<2048x512xbf16, #tpu.memory_space<any>>) target(%arg18 : memref<2048x512xbf16, #tpu.memory_space<vmem>>) target_semaphore(%11 : memref<!tpu.dma_semaphore, #tpu.memory_space<semaphore_mem>>)
    %c6_i32 = arith.constant 6 : i32
    %12 = tpu.memref_slice %arg21[%c6_i32] : memref<8x!tpu.dma_semaphore, #tpu.memory_space<semaphore_mem>> -> memref<1x!tpu.dma_semaphore, #tpu.memory_space<semaphore_mem>>
    %13 = tpu.memref_squeeze %12 : memref<1x!tpu.dma_semaphore, #tpu.memory_space<semaphore_mem>> -> memref<!tpu.dma_semaphore, #tpu.memory_space<semaphore_mem>>
    tpu.enqueue_dma source(%arg9 : memref<512x512xbf16, #tpu.memory_space<any>>) target(%arg19 : memref<512x512xbf16, #tpu.memory_space<vmem>>) target_semaphore(%13 : memref<!tpu.dma_semaphore, #tpu.memory_space<semaphore_mem>>)
    %c7_i32 = arith.constant 7 : i32
    %14 = tpu.memref_slice %arg21[%c7_i32] : memref<8x!tpu.dma_semaphore, #tpu.memory_space<semaphore_mem>> -> memref<1x!tpu.dma_semaphore, #tpu.memory_space<semaphore_mem>>
    %15 = tpu.memref_squeeze %14 : memref<1x!tpu.dma_semaphore, #tpu.memory_space<semaphore_mem>> -> memref<!tpu.dma_semaphore, #tpu.memory_space<semaphore_mem>>
    tpu.enqueue_dma source(%arg10 : memref<512x128xbf16, #tpu.memory_space<any>>) target(%arg20 : memref<512x128xbf16, #tpu.memory_space<vmem>>) target_semaphore(%15 : memref<!tpu.dma_semaphore, #tpu.memory_space<semaphore_mem>>)
    %c0 = arith.constant 0 : index
    %c0_0 = arith.constant 0 : index
    %16 = vector.load %arg1[%c0, %c0_0] : memref<8x64xf32, #tpu.memory_space<vmem>>, vector<8x64xf32>
    %17 = arith.truncf %16 : vector<8x64xf32> to vector<8x64xbf16>
    %c0_i32_1 = arith.constant 0 : i32
    %18 = tpu.memref_slice %arg21[%c0_i32_1] : memref<8x!tpu.dma_semaphore, #tpu.memory_space<semaphore_mem>> -> memref<1x!tpu.dma_semaphore, #tpu.memory_space<semaphore_mem>>
    %19 = tpu.memref_squeeze %18 : memref<1x!tpu.dma_semaphore, #tpu.memory_space<semaphore_mem>> -> memref<!tpu.dma_semaphore, #tpu.memory_space<semaphore_mem>>
    tpu.wait_dma2 semaphore(%19 : memref<!tpu.dma_semaphore, #tpu.memory_space<semaphore_mem>>) src(%arg3 : memref<64x512xbf16, #tpu.memory_space<any>>) dst(%arg13 : memref<64x512xbf16, #tpu.memory_space<vmem>>)
    %c0_2 = arith.constant 0 : index
    %c0_3 = arith.constant 0 : index
    %20 = vector.load %arg13[%c0_2, %c0_3] : memref<64x512xbf16, #tpu.memory_space<vmem>>, vector<64x512xbf16>
    %cst = arith.constant dense<0.000000e+00> : vector<8x512xf32>
    %21 = tpu.matmul %17, %20, %cst {dimension_numbers = #tpu.dot_dimension_numbers<[1], [0], [0], [1], [0, 0, 1, 1], [], []>} : vector<8x64xbf16>, vector<64x512xbf16>, vector<8x512xf32> -> vector<8x512xf32>
    %c0_4 = arith.constant 0 : index
    %c0_5 = arith.constant 0 : index
    %22 = vector.load %arg2[%c0_4, %c0_5] : memref<8x2048xf32, #tpu.memory_space<vmem>>, vector<1x512xf32>
    %23 = vector.broadcast %22 : vector<1x512xf32> to vector<8x512xf32>
    %24 = arith.addf %21, %23 : vector<8x512xf32>
    %cst_6 = arith.constant 0.000000e+00 : f32
    %25 = vector.broadcast %cst_6 : f32 to vector<8x512xf32>
    %26 = arith.maximumf %24, %25 : vector<8x512xf32>
    %27 = arith.truncf %26 : vector<8x512xf32> to vector<8x512xbf16>
    %c1_i32_7 = arith.constant 1 : i32
    %28 = tpu.memref_slice %arg21[%c1_i32_7] : memref<8x!tpu.dma_semaphore, #tpu.memory_space<semaphore_mem>> -> memref<1x!tpu.dma_semaphore, #tpu.memory_space<semaphore_mem>>
    %29 = tpu.memref_squeeze %28 : memref<1x!tpu.dma_semaphore, #tpu.memory_space<semaphore_mem>> -> memref<!tpu.dma_semaphore, #tpu.memory_space<semaphore_mem>>
    tpu.wait_dma2 semaphore(%29 : memref<!tpu.dma_semaphore, #tpu.memory_space<semaphore_mem>>) src(%arg4 : memref<512x512xbf16, #tpu.memory_space<any>>) dst(%arg14 : memref<512x512xbf16, #tpu.memory_space<vmem>>)
    %c0_8 = arith.constant 0 : index
    %c0_9 = arith.constant 0 : index
    %30 = vector.load %arg14[%c0_8, %c0_9] : memref<512x512xbf16, #tpu.memory_space<vmem>>, vector<512x512xbf16>
    %cst_10 = arith.constant dense<0.000000e+00> : vector<8x512xf32>
    %31 = tpu.matmul %27, %30, %cst_10 {dimension_numbers = #tpu.dot_dimension_numbers<[1], [0], [0], [1], [0, 0, 1, 1], [], []>} : vector<8x512xbf16>, vector<512x512xbf16>, vector<8x512xf32> -> vector<8x512xf32>
    %c1 = arith.constant 1 : index
    %c0_11 = arith.constant 0 : index
    %32 = vector.load %arg2[%c1, %c0_11] : memref<8x2048xf32, #tpu.memory_space<vmem>>, vector<1x512xf32>
    %33 = vector.broadcast %32 : vector<1x512xf32> to vector<8x512xf32>
    %34 = arith.addf %31, %33 : vector<8x512xf32>
    %cst_12 = arith.constant 0.000000e+00 : f32
    %35 = vector.broadcast %cst_12 : f32 to vector<8x512xf32>
    %36 = arith.maximumf %34, %35 : vector<8x512xf32>
    %37 = arith.truncf %36 : vector<8x512xf32> to vector<8x512xbf16>
    %c2_i32_13 = arith.constant 2 : i32
    %38 = tpu.memref_slice %arg21[%c2_i32_13] : memref<8x!tpu.dma_semaphore, #tpu.memory_space<semaphore_mem>> -> memref<1x!tpu.dma_semaphore, #tpu.memory_space<semaphore_mem>>
    %39 = tpu.memref_squeeze %38 : memref<1x!tpu.dma_semaphore, #tpu.memory_space<semaphore_mem>> -> memref<!tpu.dma_semaphore, #tpu.memory_space<semaphore_mem>>
    tpu.wait_dma2 semaphore(%39 : memref<!tpu.dma_semaphore, #tpu.memory_space<semaphore_mem>>) src(%arg5 : memref<512x2048xbf16, #tpu.memory_space<any>>) dst(%arg15 : memref<512x2048xbf16, #tpu.memory_space<vmem>>)
    %c0_14 = arith.constant 0 : index
    %c0_15 = arith.constant 0 : index
    %40 = vector.load %arg15[%c0_14, %c0_15] : memref<512x2048xbf16, #tpu.memory_space<vmem>>, vector<512x2048xbf16>
    %cst_16 = arith.constant dense<0.000000e+00> : vector<8x2048xf32>
    %41 = tpu.matmul %37, %40, %cst_16 {dimension_numbers = #tpu.dot_dimension_numbers<[1], [0], [0], [1], [0, 0, 1, 1], [], []>} : vector<8x512xbf16>, vector<512x2048xbf16>, vector<8x2048xf32> -> vector<8x2048xf32>
    %c2 = arith.constant 2 : index
    %c0_17 = arith.constant 0 : index
    %42 = vector.load %arg2[%c2, %c0_17] : memref<8x2048xf32, #tpu.memory_space<vmem>>, vector<1x2048xf32>
    %43 = vector.broadcast %42 : vector<1x2048xf32> to vector<8x2048xf32>
    %44 = arith.addf %41, %43 : vector<8x2048xf32>
    %cst_18 = arith.constant 0.000000e+00 : f32
    %45 = vector.broadcast %cst_18 : f32 to vector<8x2048xf32>
    %46 = arith.maximumf %44, %45 : vector<8x2048xf32>
    %47 = arith.truncf %46 : vector<8x2048xf32> to vector<8x2048xbf16>
    %c3_i32_19 = arith.constant 3 : i32
    %48 = tpu.memref_slice %arg21[%c3_i32_19] : memref<8x!tpu.dma_semaphore, #tpu.memory_space<semaphore_mem>> -> memref<1x!tpu.dma_semaphore, #tpu.memory_space<semaphore_mem>>
    %49 = tpu.memref_squeeze %48 : memref<1x!tpu.dma_semaphore, #tpu.memory_space<semaphore_mem>> -> memref<!tpu.dma_semaphore, #tpu.memory_space<semaphore_mem>>
    tpu.wait_dma2 semaphore(%49 : memref<!tpu.dma_semaphore, #tpu.memory_space<semaphore_mem>>) src(%arg6 : memref<2048x32xbf16, #tpu.memory_space<any>>) dst(%arg16 : memref<2048x32xbf16, #tpu.memory_space<vmem>>)
    %c0_20 = arith.constant 0 : index
    %c0_21 = arith.constant 0 : index
    %50 = vector.load %arg16[%c0_20, %c0_21] : memref<2048x32xbf16, #tpu.memory_space<vmem>>, vector<2048x32xbf16>
    %cst_22 = arith.constant dense<0.000000e+00> : vector<8x32xf32>
    %51 = tpu.matmul %47, %50, %cst_22 {dimension_numbers = #tpu.dot_dimension_numbers<[1], [0], [0], [1], [0, 0, 1, 1], [], []>} : vector<8x2048xbf16>, vector<2048x32xbf16>, vector<8x32xf32> -> vector<8x32xf32>
    %c3 = arith.constant 3 : index
    %c0_23 = arith.constant 0 : index
    %52 = vector.load %arg2[%c3, %c0_23] : memref<8x2048xf32, #tpu.memory_space<vmem>>, vector<1x32xf32>
    %53 = vector.broadcast %52 : vector<1x32xf32> to vector<8x32xf32>
    %54 = arith.addf %51, %53 : vector<8x32xf32>
    %c0_24 = arith.constant 0 : index
    %c0_25 = arith.constant 0 : index
    %55 = vector.load %arg11[%c0_24, %c0_25] : memref<8x32xf32, #tpu.memory_space<vmem>>, vector<8x32xf32>
    tpu.vector_store %arg11[%c0_24, %c0_25], %54 {strides = array<i32>} : memref<8x32xf32, #tpu.memory_space<vmem>>, vector<8x32xf32>,
    %56 = arith.truncf %54 : vector<8x32xf32> to vector<8x32xbf16>
    %c4_i32_26 = arith.constant 4 : i32
    %57 = tpu.memref_slice %arg21[%c4_i32_26] : memref<8x!tpu.dma_semaphore, #tpu.memory_space<semaphore_mem>> -> memref<1x!tpu.dma_semaphore, #tpu.memory_space<semaphore_mem>>
    %58 = tpu.memref_squeeze %57 : memref<1x!tpu.dma_semaphore, #tpu.memory_space<semaphore_mem>> -> memref<!tpu.dma_semaphore, #tpu.memory_space<semaphore_mem>>
    tpu.wait_dma2 semaphore(%58 : memref<!tpu.dma_semaphore, #tpu.memory_space<semaphore_mem>>) src(%arg7 : memref<32x2048xbf16, #tpu.memory_space<any>>) dst(%arg17 : memref<32x2048xbf16, #tpu.memory_space<vmem>>)
    %c0_27 = arith.constant 0 : index
    %c0_28 = arith.constant 0 : index
    %59 = vector.load %arg17[%c0_27, %c0_28] : memref<32x2048xbf16, #tpu.memory_space<vmem>>, vector<32x2048xbf16>
    %cst_29 = arith.constant dense<0.000000e+00> : vector<8x2048xf32>
    %60 = tpu.matmul %56, %59, %cst_29 {dimension_numbers = #tpu.dot_dimension_numbers<[1], [0], [0], [1], [0, 0, 1, 1], [], []>} : vector<8x32xbf16>, vector<32x2048xbf16>, vector<8x2048xf32> -> vector<8x2048xf32>
    %c4 = arith.constant 4 : index
    %c0_30 = arith.constant 0 : index
    %61 = vector.load %arg2[%c4, %c0_30] : memref<8x2048xf32, #tpu.memory_space<vmem>>, vector<1x2048xf32>
    %62 = vector.broadcast %61 : vector<1x2048xf32> to vector<8x2048xf32>
    %63 = arith.addf %60, %62 : vector<8x2048xf32>
    %cst_31 = arith.constant 0.000000e+00 : f32
    %64 = vector.broadcast %cst_31 : f32 to vector<8x2048xf32>
    %65 = arith.maximumf %63, %64 : vector<8x2048xf32>
    %66 = arith.truncf %65 : vector<8x2048xf32> to vector<8x2048xbf16>
    %c5_i32_32 = arith.constant 5 : i32
    %67 = tpu.memref_slice %arg21[%c5_i32_32] : memref<8x!tpu.dma_semaphore, #tpu.memory_space<semaphore_mem>> -> memref<1x!tpu.dma_semaphore, #tpu.memory_space<semaphore_mem>>
    %68 = tpu.memref_squeeze %67 : memref<1x!tpu.dma_semaphore, #tpu.memory_space<semaphore_mem>> -> memref<!tpu.dma_semaphore, #tpu.memory_space<semaphore_mem>>
    tpu.wait_dma2 semaphore(%68 : memref<!tpu.dma_semaphore, #tpu.memory_space<semaphore_mem>>) src(%arg8 : memref<2048x512xbf16, #tpu.memory_space<any>>) dst(%arg18 : memref<2048x512xbf16, #tpu.memory_space<vmem>>)
    %c0_33 = arith.constant 0 : index
    %c0_34 = arith.constant 0 : index
    %69 = vector.load %arg18[%c0_33, %c0_34] : memref<2048x512xbf16, #tpu.memory_space<vmem>>, vector<2048x512xbf16>
    %cst_35 = arith.constant dense<0.000000e+00> : vector<8x512xf32>
    %70 = tpu.matmul %66, %69, %cst_35 {dimension_numbers = #tpu.dot_dimension_numbers<[1], [0], [0], [1], [0, 0, 1, 1], [], []>} : vector<8x2048xbf16>, vector<2048x512xbf16>, vector<8x512xf32> -> vector<8x512xf32>
    %c5 = arith.constant 5 : index
    %c0_36 = arith.constant 0 : index
    %71 = vector.load %arg2[%c5, %c0_36] : memref<8x2048xf32, #tpu.memory_space<vmem>>, vector<1x512xf32>
    %72 = vector.broadcast %71 : vector<1x512xf32> to vector<8x512xf32>
    %73 = arith.addf %70, %72 : vector<8x512xf32>
    %cst_37 = arith.constant 0.000000e+00 : f32
    %74 = vector.broadcast %cst_37 : f32 to vector<8x512xf32>
    %75 = arith.maximumf %73, %74 : vector<8x512xf32>
    %76 = arith.truncf %75 : vector<8x512xf32> to vector<8x512xbf16>
    %c6_i32_38 = arith.constant 6 : i32
    %77 = tpu.memref_slice %arg21[%c6_i32_38] : memref<8x!tpu.dma_semaphore, #tpu.memory_space<semaphore_mem>> -> memref<1x!tpu.dma_semaphore, #tpu.memory_space<semaphore_mem>>
    %78 = tpu.memref_squeeze %77 : memref<1x!tpu.dma_semaphore, #tpu.memory_space<semaphore_mem>> -> memref<!tpu.dma_semaphore, #tpu.memory_space<semaphore_mem>>
    tpu.wait_dma2 semaphore(%78 : memref<!tpu.dma_semaphore, #tpu.memory_space<semaphore_mem>>) src(%arg9 : memref<512x512xbf16, #tpu.memory_space<any>>) dst(%arg19 : memref<512x512xbf16, #tpu.memory_space<vmem>>)
    %c0_39 = arith.constant 0 : index
    %c0_40 = arith.constant 0 : index
    %79 = vector.load %arg19[%c0_39, %c0_40] : memref<512x512xbf16, #tpu.memory_space<vmem>>, vector<512x512xbf16>
    %cst_41 = arith.constant dense<0.000000e+00> : vector<8x512xf32>
    %80 = tpu.matmul %76, %79, %cst_41 {dimension_numbers = #tpu.dot_dimension_numbers<[1], [0], [0], [1], [0, 0, 1, 1], [], []>} : vector<8x512xbf16>, vector<512x512xbf16>, vector<8x512xf32> -> vector<8x512xf32>
    %c6 = arith.constant 6 : index
    %c0_42 = arith.constant 0 : index
    %81 = vector.load %arg2[%c6, %c0_42] : memref<8x2048xf32, #tpu.memory_space<vmem>>, vector<1x512xf32>
    %82 = vector.broadcast %81 : vector<1x512xf32> to vector<8x512xf32>
    %83 = arith.addf %80, %82 : vector<8x512xf32>
    %cst_43 = arith.constant 0.000000e+00 : f32
    %84 = vector.broadcast %cst_43 : f32 to vector<8x512xf32>
    %85 = arith.maximumf %83, %84 : vector<8x512xf32>
    %86 = arith.truncf %85 : vector<8x512xf32> to vector<8x512xbf16>
    %c7_i32_44 = arith.constant 7 : i32
    %87 = tpu.memref_slice %arg21[%c7_i32_44] : memref<8x!tpu.dma_semaphore, #tpu.memory_space<semaphore_mem>> -> memref<1x!tpu.dma_semaphore, #tpu.memory_space<semaphore_mem>>
    %88 = tpu.memref_squeeze %87 : memref<1x!tpu.dma_semaphore, #tpu.memory_space<semaphore_mem>> -> memref<!tpu.dma_semaphore, #tpu.memory_space<semaphore_mem>>
    tpu.wait_dma2 semaphore(%88 : memref<!tpu.dma_semaphore, #tpu.memory_space<semaphore_mem>>) src(%arg10 : memref<512x128xbf16, #tpu.memory_space<any>>) dst(%arg20 : memref<512x128xbf16, #tpu.memory_space<vmem>>)
    %c0_45 = arith.constant 0 : index
    %c0_46 = arith.constant 0 : index
    %89 = vector.load %arg20[%c0_45, %c0_46] : memref<512x128xbf16, #tpu.memory_space<vmem>>, vector<512x128xbf16>
    %cst_47 = arith.constant dense<0.000000e+00> : vector<8x128xf32>
    %90 = tpu.matmul %86, %89, %cst_47 {dimension_numbers = #tpu.dot_dimension_numbers<[1], [0], [0], [1], [0, 0, 1, 1], [], []>} : vector<8x512xbf16>, vector<512x128xbf16>, vector<8x128xf32> -> vector<8x128xf32>
    %c7 = arith.constant 7 : index
    %c0_48 = arith.constant 0 : index
    %91 = vector.load %arg2[%c7, %c0_48] : memref<8x2048xf32, #tpu.memory_space<vmem>>, vector<1x128xf32>
    %92 = vector.broadcast %91 : vector<1x128xf32> to vector<8x128xf32>
    %93 = arith.addf %90, %92 : vector<8x128xf32>
    %c0_49 = arith.constant 0 : index
    %c0_50 = arith.constant 0 : index
    %94 = vector.load %arg12[%c0_49, %c0_50] : memref<8x128xf32, #tpu.memory_space<vmem>>, vector<8x128xf32>
    tpu.vector_store %arg12[%c0_49, %c0_50], %93 {strides = array<i32>} : memref<8x128xf32, #tpu.memory_space<vmem>>, vector<8x128xf32>,
    return
  }
  func.func @transform_0(%arg0: i32) -> (i32, i32) {
    %c0_i32 = arith.constant 0 : i32
    %c0_i32_0 = arith.constant 0 : i32
    return %arg0, %c0_i32 : i32, i32
  }
  func.func @transform_1(%arg0: i32) -> (i32, i32) {
    %c0_i32 = arith.constant 0 : i32
    %c0_i32_0 = arith.constant 0 : i32
    %c0_i32_1 = arith.constant 0 : i32
    return %c0_i32, %c0_i32_0 : i32, i32
  }
  func.func @transform_10(%arg0: i32) -> (i32, i32) {
    %c0_i32 = arith.constant 0 : i32
    %c0_i32_0 = arith.constant 0 : i32
    return %arg0, %c0_i32 : i32, i32
  }
  func.func @transform_11(%arg0: i32) -> (i32, i32) {
    %c0_i32 = arith.constant 0 : i32
    %c0_i32_0 = arith.constant 0 : i32
    return %arg0, %c0_i32 : i32, i32
  }
}

</mosaic_0001>

<llo_original>
// kernel: aae_forward.1
$region0: #{aae_forward.1}
  #allocation0 [shape = 'u32[]', space=smem, size = 0x4, offset = 0x4, fixed_abs, tag = 'smem constant byte address 0x4 - core index']
  #allocation1 [shape = 'u32[144,128]{1,0:T(1,128)}', space=vmem, size = 0x12000, scoped, tag = 'internal scratch']
  #allocation2 [shape = 'bf16[64,512]{1,0:T(16,128)(2,1)}', space=vmem, size = 0x10000, scoped, tag = 'scratch operand']
  #allocation3 [shape = 'bf16[512,512]{1,0:T(16,128)(2,1)}', space=vmem, size = 0x80000, scoped, tag = 'scratch operand']
  #allocation4 [shape = 'bf16[512,2048]{1,0:T(16,128)(2,1)}', space=vmem, size = 0x200000, scoped, tag = 'scratch operand']
  #allocation5 [shape = 'bf16[2048,32]{1,0:T(16,128)(2,1)}', space=vmem, size = 0x80000, scoped, tag = 'scratch operand']
  #allocation6 [shape = 'bf16[32,2048]{1,0:T(16,128)(2,1)}', space=vmem, size = 0x20000, scoped, tag = 'scratch operand']
  #allocation7 [shape = 'bf16[2048,512]{1,0:T(16,128)(2,1)}', space=vmem, size = 0x200000, scoped, tag = 'scratch operand']
  #allocation8 [shape = 'bf16[512,512]{1,0:T(16,128)(2,1)}', space=vmem, size = 0x80000, scoped, tag = 'scratch operand']
  #allocation9 [shape = 'bf16[512,128]{1,0:T(16,128)(2,1)}', space=vmem, size = 0x20000, scoped, tag = 'scratch operand']
  #allocation10 [shape = 's32[8]{0}', space=sflag, size = 0x20, scoped, tag = 'scratch operand']
  #allocation17 [shape = 's32[]', space=sflag, size = 0x4, offset = 0, fixed_abs, tag = 'sflag constant byte address 0x0 - dummy sync flag']
  #allocation19 [shape = 's32[]', space=sflag, size = 0x4, offset = 0, fixed_abs, tag = 'sflag constant byte address 0x0 - dummy sync flag']
  #allocation21 [shape = 's32[]', space=sflag, size = 0x4, offset = 0, fixed_abs, tag = 'sflag constant byte address 0x0 - dummy sync flag']
  #allocation23 [shape = 's32[]', space=sflag, size = 0x4, offset = 0, fixed_abs, tag = 'sflag constant byte address 0x0 - dummy sync flag']
  #allocation24 [shape = 's32[]', space=sflag, size = 0x4, offset = 0, fixed_abs, tag = 'sflag constant byte address 0x0 - dummy sync flag']
  #allocation26 [shape = 's32[]', space=sflag, size = 0x4, offset = 0, fixed_abs, tag = 'sflag constant byte address 0x0 - dummy sync flag']
  #allocation28 [shape = 's32[]', space=sflag, size = 0x4, offset = 0, fixed_abs, tag = 'sflag constant byte address 0x0 - dummy sync flag']
  #allocation30 [shape = 's32[]', space=sflag, size = 0x4, offset = 0, fixed_abs, tag = 'sflag constant byte address 0x0 - dummy sync flag']
  #allocation31 [shape = 's32[]', space=sflag, size = 0x4, offset = 0, fixed_abs, tag = 'sflag constant byte address 0x0 - dummy sync flag']
  #allocation32 [shape = 'u32[]', space=smem, size = 0x4, offset = 0x44, fixed_abs, tag = 'smem constant byte address 0x44 - assertion arg 0']
  #allocation33 [shape = 'u32[]', space=smem, size = 0x4, offset = 0x48, fixed_abs, tag = 'smem constant byte address 0x48 - assertion arg 1']
  %s0 = inlined_call_operand.hbm [shape: f32[8,64], index: 0, kind: input, shape index: {}]
  %s1 = inlined_call_operand.hbm [shape: f32[8,2048], index: 1, kind: input, shape index: {}]
  %s2 = inlined_call_operand.hbm [shape: bf16[64,512], index: 2, kind: input, shape index: {}]
  %s3 = inlined_call_operand.hbm [shape: bf16[512,512], index: 3, kind: input, shape index: {}]
  %s4 = inlined_call_operand.hbm [shape: bf16[512,2048], index: 4, kind: input, shape index: {}]
  %s5 = inlined_call_operand.vmem [shape: bf16[2048,32], index: 5, kind: input, shape index: {}]
  %s6 = inlined_call_operand.hbm [shape: bf16[32,2048], index: 6, kind: input, shape index: {}]
  %s7 = inlined_call_operand.hbm [shape: bf16[2048,512], index: 7, kind: input, shape index: {}]
  %s8 = inlined_call_operand.hbm [shape: bf16[512,512], index: 8, kind: input, shape index: {}]
  %s9 = inlined_call_operand.hbm [shape: bf16[512,128], index: 9, kind: input, shape index: {}]
  %s10 = inlined_call_operand.vmem [shape: f32[8,32], index: 10, kind: output, shape index: {0}]
  %s11 = inlined_call_operand.hbm [shape: f32[8,128], index: 11, kind: output, shape index: {1}]
  %12 = xla_tuple %s10, %s11
  %s13 = sld [smem:[#allocation0]]
  $region72: #{aae_forward.1} parent=0
    _
  %s15 = ssub.s32 1, %s13
  %s16 = scalar_select 0, %s15, %s13
  $region1: #{aae_forward.1} parent=0
    #allocation11 [shape = 'u8[4096]{0}', space=vmem, size = 0x1000, scoped, tag = 'input window, operand 0, single buffered']
    #allocation12 [shape = 's32[1]{0}', space=sflag, size = 0x4, scoped, tag = 'scoped memory for aae_forward.1']
    #allocation13 [shape = 's32[1]{0}', space=sflag, size = 0x4, scoped, tag = 'scoped memory for aae_forward.1']
    #allocation14 [shape = 'u8[65536]{0}', space=vmem, size = 0x10000, scoped, tag = 'input window, operand 1, single buffered']
    #allocation15 [shape = 's32[1]{0}', space=sflag, size = 0x4, scoped, tag = 'scoped memory for aae_forward.1']
    #allocation16 [shape = 'u8[4096]{0}', space=vmem, size = 0x1000, scoped, tag = 'output window, operand 1, single buffered']
    #allocation18 [shape = 'u32[9]{0}', space=smem, size = 0x24, scoped, tag = 'DMA stride descriptor']
    #allocation20 [shape = 'u32[9]{0}', space=smem, size = 0x24, scoped, tag = 'DMA stride descriptor']
    #allocation22 [shape = 'u32[9]{0}', space=smem, size = 0x24, scoped, tag = 'DMA stride descriptor']
    #allocation25 [shape = 'u32[9]{0}', space=smem, size = 0x24, scoped, tag = 'DMA stride descriptor']
    #allocation27 [shape = 'u32[9]{0}', space=smem, size = 0x24, scoped, tag = 'DMA stride descriptor']
    #allocation29 [shape = 'u32[9]{0}', space=smem, size = 0x24, scoped, tag = 'DMA stride descriptor']
    %17 = vsyncpa [#allocation12], 0
    %18 = vsyncpa [#allocation15], 0
    %19 = vsyncpa [#allocation13], 0
    // Predicated region
    $region2: #{aae_forward.1} parent=1 // pred_check
      _
    $region3: #{aae_forward.1} parent=1 // pred_check_branch
      %21 = sbr.rel (0) target = $region5
    $region4: #{aae_forward.1} parent=1 // pred_region
      %s23 = ssub.s32 128, 128
      %24 = vsyncadd [#allocation12], %s23
      %s26 = sshll.u32 [#allocation11], 4
      %s27 = int_to_ptr.vmem [resolvable:$true] %s26
      %29 = dma.hbm_to_vmem [thread:$0]  %s0, 128, %s27, [#allocation12]
    $region5: #{aae_forward.1} parent=1 // pred_fallthru
      _
    // Predicated region
    $region6: #{aae_forward.1} parent=1 // pred_check
      _
    $region7: #{aae_forward.1} parent=1 // pred_check_branch
      %31 = sbr.rel (0) target = $region9
    $region8: #{aae_forward.1} parent=1 // pred_region
      %s33 = ssub.s32 2048, 2048
      %34 = vsyncadd [#allocation15], %s33
      %s36 = sshll.u32 [#allocation14], 4
      %s37 = int_to_ptr.vmem [resolvable:$true] %s36
      %39 = dma.hbm_to_vmem [thread:$0]  %s1, 2048, %s37, [#allocation15]
    $region9: #{aae_forward.1} parent=1 // pred_fallthru
      _
    // Predicated region
    $region10: #{aae_forward.1} parent=1 // pred_check
      _
    $region11: #{aae_forward.1} parent=1 // pred_check_branch
      %41 = sbr.rel (0) target = $region13
    $region12: #{aae_forward.1} parent=1 // pred_region
      %42 = dma.done [#allocation12], 128
    $region13: #{aae_forward.1} parent=1 // pred_fallthru
      _
    // Predicated region
    $region14: #{aae_forward.1} parent=1 // pred_check
      _
    $region15: #{aae_forward.1} parent=1 // pred_check_branch
      %44 = sbr.rel (0) target = $region17
    $region16: #{aae_forward.1} parent=1 // pred_region
      %45 = dma.done [#allocation15], 2048
    $region17: #{aae_forward.1} parent=1 // pred_fallthru
      _
    %s48 = sshll.u32 1, 14
    %s49 = sxor.u32 4294967295, %s48
    %s51 = sld [smem:[#allocation0]]
    %s52 = sadd.s32 2, %s51
    %s54 = sshll.u32 7, 26
    %s55 = sxor.u32 4294967295, %s54
    %s56 = sand.u32 0, %s55
    %s57 = sshll.u32 %s52, 26
    %s58 = sor.u32 %s56, %s57
    %s59 = sshll.u32 [#allocation2], 4
    %s60 = int_to_ptr.vmem [resolvable:$true] %s59
    %63 = sst [smem:[#allocation18]] 512
    %s64 = scalar_lea.smem [#allocation18], 1
    %65 = sst [smem:[%s64]] 512
    %s66 = scalar_lea.smem [#allocation18], 2
    %67 = sst [smem:[%s66]] 4
    %s68 = scalar_lea.smem [#allocation18], 3
    %69 = sst [smem:[%s68]] 64
    %s70 = scalar_lea.smem [#allocation18], 4
    %71 = sst [smem:[%s70]] 128
    %s72 = scalar_lea.smem [#allocation18], 5
    %73 = sst [smem:[%s72]] 2
    %s74 = scalar_lea.smem [#allocation18], 6
    %75 = sst [smem:[%s74]] 256
    %s76 = scalar_lea.smem [#allocation18], 7
    %77 = sst [smem:[%s76]] 64
    %s78 = scalar_lea.smem [#allocation18], 8
    %79 = sst [smem:[%s78]] 4
    %81 = dma.general %s2, 2048, %s60, [#allocation10], [#allocation17], [#allocation18], %s58, 0
    %s82 = scalar_lea.sflag [#allocation10], 1
    %s84 = sshll.u32 1, 14
    %s85 = sxor.u32 4294967295, %s84
    %s87 = sadd.s32 2, %s51
    %s89 = sshll.u32 7, 26
    %s90 = sxor.u32 4294967295, %s89
    %s91 = sand.u32 0, %s90
    %s92 = sshll.u32 %s87, 26
    %s93 = sor.u32 %s91, %s92
    %s94 = sshll.u32 [#allocation3], 4
    %s95 = int_to_ptr.vmem [resolvable:$true] %s94
    %98 = sst [smem:[#allocation20]] 512
    %s99 = scalar_lea.smem [#allocation20], 1
    %100 = sst [smem:[%s99]] 512
    %s101 = scalar_lea.smem [#allocation20], 2
    %102 = sst [smem:[%s101]] 4
    %s103 = scalar_lea.smem [#allocation20], 3
    %104 = sst [smem:[%s103]] 64
    %s105 = scalar_lea.smem [#allocation20], 4
    %106 = sst [smem:[%s105]] 128
    %s107 = scalar_lea.smem [#allocation20], 5
    %108 = sst [smem:[%s107]] 2
    %s109 = scalar_lea.smem [#allocation20], 6
    %110 = sst [smem:[%s109]] 256
    %s111 = scalar_lea.smem [#allocation20], 7
    %112 = sst [smem:[%s111]] 64
    %s113 = scalar_lea.smem [#allocation20], 8
    %114 = sst [smem:[%s113]] 4
    %116 = dma.general %s3, 16384, %s95, %s82, [#allocation19], [#allocation20], %s93, 0
    %s117 = scalar_lea.sflag [#allocation10], 2
    %s119 = sshll.u32 1, 14
    %s120 = sxor.u32 4294967295, %s119
    %s122 = sadd.s32 2, %s51
    %s124 = sshll.u32 7, 26
    %s125 = sxor.u32 4294967295, %s124
    %s126 = sand.u32 0, %s125
    %s127 = sshll.u32 %s122, 26
    %s128 = sor.u32 %s126, %s127
    %s129 = sshll.u32 [#allocation4], 4
    %s130 = int_to_ptr.vmem [resolvable:$true] %s129
    %133 = sst [smem:[#allocation22]] 2048
    %s134 = scalar_lea.smem [#allocation22], 1
    %135 = sst [smem:[%s134]] 2048
    %s136 = scalar_lea.smem [#allocation22], 2
    %137 = sst [smem:[%s136]] 16
    %s138 = scalar_lea.smem [#allocation22], 3
    %139 = sst [smem:[%s138]] 64
    %s140 = scalar_lea.smem [#allocation22], 4
    %141 = sst [smem:[%s140]] 128
    %s142 = scalar_lea.smem [#allocation22], 5
    %143 = sst [smem:[%s142]] 2
    %s144 = scalar_lea.smem [#allocation22], 6
    %145 = sst [smem:[%s144]] 1024
    %s146 = scalar_lea.smem [#allocation22], 7
    %147 = sst [smem:[%s146]] 64
    %s148 = scalar_lea.smem [#allocation22], 8
    %149 = sst [smem:[%s148]] 4
    %151 = dma.general %s4, 65536, %s130, %s117, [#allocation21], [#allocation22], %s128, 0
    %s152 = scalar_lea.sflag [#allocation10], 3
    %p154 = scmp.lt.u32.totalorder 1024, 8
    %p155 = pneg %p154
    // Predicated region
    $region18: #{aae_forward.1} parent=1 // pred_check
      _
    $region19: #{aae_forward.1} parent=1 // pred_check_branch
      %157 = sbr.rel (%p154) target = $region21
    $region20: #{aae_forward.1} parent=1 // pred_region
      %s172 = sand.u32 1024, 7
      %p173 = scmp.eq.s32.totalorder %s172, 0
      // Predicated region
      $region33: #{aae_forward.1} parent=20 // pred_check
        %p174 = pneg %p173
      $region34: #{aae_forward.1} parent=20 // pred_check_branch
        %176 = sbr.rel (%p174) target = $region36
      $region35: #{aae_forward.1} parent=20 // pred_region
        loop: start=0, step=1, limit=1
        $region37: #{aae_forward.1} parent=35 // loop_pre_header
          _
        $region38: #{aae_forward.1} parent=35 // loop_header
          %s178 = sphi 0, %s182
          %p179 = scmp.ge.s32.totalorder %s178, 1
          %s183 = sphi %s5, %s5
          %s184 = sphi [#allocation5], [#allocation5]
        $region39: #{aae_forward.1} parent=35 // loop_header_branch
          %181 = sbr.rel (%p179) target = $region43
        $region40: #{aae_forward.1} parent=35 // loop_body
          %v185 = vld [vmem:[%s183] sm:$0xff]
          %186 = vst [vmem:[%s184] sm:$0xff] %v185
          %v187 = vld [vmem:[%s183 + $0x8] sm:$0xff]
          %188 = vst [vmem:[%s184 + $0x8] sm:$0xff] %v187
          %v189 = vld [vmem:[%s183 + $0x10] sm:$0xff]
          %190 = vst [vmem:[%s184 + $0x10] sm:$0xff] %v189
          %v191 = vld [vmem:[%s183 + $0x18] sm:$0xff]
          %192 = vst [vmem:[%s184 + $0x18] sm:$0xff] %v191
          %v193 = vld [vmem:[%s183 + $0x20] sm:$0xff]
          %194 = vst [vmem:[%s184 + $0x20] sm:$0xff] %v193
          %v195 = vld [vmem:[%s183 + $0x28] sm:$0xff]
          %196 = vst [vmem:[%s184 + $0x28] sm:$0xff] %v195
          %v197 = vld [vmem:[%s183 + $0x30] sm:$0xff]
          %198 = vst [vmem:[%s184 + $0x30] sm:$0xff] %v197
          %v199 = vld [vmem:[%s183 + $0x38] sm:$0xff]
          %200 = vst [vmem:[%s184 + $0x38] sm:$0xff] %v199
          %v201 = vld [vmem:[%s183 + $0x40] sm:$0xff]
          %202 = vst [vmem:[%s184 + $0x40] sm:$0xff] %v201
          %v203 = vld [vmem:[%s183 + $0x48] sm:$0xff]
          %204 = vst [vmem:[%s184 + $0x48] sm:$0xff] %v203
          %v205 = vld [vmem:[%s183 + $0x50] sm:$0xff]
          %206 = vst [vmem:[%s184 + $0x50] sm:$0xff] %v205
          %v207 = vld [vmem:[%s183 + $0x58] sm:$0xff]
          %208 = vst [vmem:[%s184 + $0x58] sm:$0xff] %v207
          %v209 = vld [vmem:[%s183 + $0x60] sm:$0xff]
          %210 = vst [vmem:[%s184 + $0x60] sm:$0xff] %v209
          %v211 = vld [vmem:[%s183 + $0x68] sm:$0xff]
          %212 = vst [vmem:[%s184 + $0x68] sm:$0xff] %v211
          %v213 = vld [vmem:[%s183 + $0x70] sm:$0xff]
          %214 = vst [vmem:[%s184 + $0x70] sm:$0xff] %v213
          %v215 = vld [vmem:[%s183 + $0x78] sm:$0xff]
          %216 = vst [vmem:[%s184 + $0x78] sm:$0xff] %v215
          %v217 = vld [vmem:[%s183 + $0x80] sm:$0xff]
          %218 = vst [vmem:[%s184 + $0x80] sm:$0xff] %v217
          %v219 = vld [vmem:[%s183 + $0x88] sm:$0xff]
          %220 = vst [vmem:[%s184 + $0x88] sm:$0xff] %v219
          %v221 = vld [vmem:[%s183 + $0x90] sm:$0xff]
          %222 = vst [vmem:[%s184 + $0x90] sm:$0xff] %v221
          %v223 = vld [vmem:[%s183 + $0x98] sm:$0xff]
          %224 = vst [vmem:[%s184 + $0x98] sm:$0xff] %v223
          %v225 = vld [vmem:[%s183 + $0xa0] sm:$0xff]
          %226 = vst [vmem:[%s184 + $0xa0] sm:$0xff] %v225
          %v227 = vld [vmem:[%s183 + $0xa8] sm:$0xff]
          %228 = vst [vmem:[%s184 + $0xa8] sm:$0xff] %v227
          %v229 = vld [vmem:[%s183 + $0xb0] sm:$0xff]
          %230 = vst [vmem:[%s184 + $0xb0] sm:$0xff] %v229
          %v231 = vld [vmem:[%s183 + $0xb8] sm:$0xff]
          %232 = vst [vmem:[%s184 + $0xb8] sm:$0xff] %v231
          %v233 = vld [vmem:[%s183 + $0xc0] sm:$0xff]
          %234 = vst [vmem:[%s184 + $0xc0] sm:$0xff] %v233
          %v235 = vld [vmem:[%s183 + $0xc8] sm:$0xff]
          %236 = vst [vmem:[%s184 + $0xc8] sm:$0xff] %v235
          %v237 = vld [vmem:[%s183 + $0xd0] sm:$0xff]
          %238 = vst [vmem:[%s184 + $0xd0] sm:$0xff] %v237
          %v239 = vld [vmem:[%s183 + $0xd8] sm:$0xff]
          %240 = vst [vmem:[%s184 + $0xd8] sm:$0xff] %v239
          %v241 = vld [vmem:[%s183 + $0xe0] sm:$0xff]
          %242 = vst [vmem:[%s184 + $0xe0] sm:$0xff] %v241
          %v243 = vld [vmem:[%s183 + $0xe8] sm:$0xff]
          %244 = vst [vmem:[%s184 + $0xe8] sm:$0xff] %v243
          %v245 = vld [vmem:[%s183 + $0xf0] sm:$0xff]
          %246 = vst [vmem:[%s184 + $0xf0] sm:$0xff] %v245
          %v247 = vld [vmem:[%s183 + $0xf8] sm:$0xff]
          %248 = vst [vmem:[%s184 + $0xf8] sm:$0xff] %v247
          %v249 = vld [vmem:[%s183 + $0x100] sm:$0xff]
          %250 = vst [vmem:[%s184 + $0x100] sm:$0xff] %v249
          %v251 = vld [vmem:[%s183 + $0x108] sm:$0xff]
          %252 = vst [vmem:[%s184 + $0x108] sm:$0xff] %v251
          %v253 = vld [vmem:[%s183 + $0x110] sm:$0xff]
          %254 = vst [vmem:[%s184 + $0x110] sm:$0xff] %v253
          %v255 = vld [vmem:[%s183 + $0x118] sm:$0xff]
          %256 = vst [vmem:[%s184 + $0x118] sm:$0xff] %v255
          %v257 = vld [vmem:[%s183 + $0x120] sm:$0xff]
          %258 = vst [vmem:[%s184 + $0x120] sm:$0xff] %v257
          %v259 = vld [vmem:[%s183 + $0x128] sm:$0xff]
          %260 = vst [vmem:[%s184 + $0x128] sm:$0xff] %v259
          %v261 = vld [vmem:[%s183 + $0x130] sm:$0xff]
          %262 = vst [vmem:[%s184 + $0x130] sm:$0xff] %v261
          %v263 = vld [vmem:[%s183 + $0x138] sm:$0xff]
          %264 = vst [vmem:[%s184 + $0x138] sm:$0xff] %v263
          %v265 = vld [vmem:[%s183 + $0x140] sm:$0xff]
          %266 = vst [vmem:[%s184 + $0x140] sm:$0xff] %v265
          %v267 = vld [vmem:[%s183 + $0x148] sm:$0xff]
          %268 = vst [vmem:[%s184 + $0x148] sm:$0xff] %v267
          %v269 = vld [vmem:[%s183 + $0x150] sm:$0xff]
          %270 = vst [vmem:[%s184 + $0x150] sm:$0xff] %v269
          %v271 = vld [vmem:[%s183 + $0x158] sm:$0xff]
          %272 = vst [vmem:[%s184 + $0x158] sm:$0xff] %v271
          %v273 = vld [vmem:[%s183 + $0x160] sm:$0xff]
          %274 = vst [vmem:[%s184 + $0x160] sm:$0xff] %v273
          %v275 = vld [vmem:[%s183 + $0x168] sm:$0xff]
          %276 = vst [vmem:[%s184 + $0x168] sm:$0xff] %v275
          %v277 = vld [vmem:[%s183 + $0x170] sm:$0xff]
          %278 = vst [vmem:[%s184 + $0x170] sm:$0xff] %v277
          %v279 = vld [vmem:[%s183 + $0x178] sm:$0xff]
          %280 = vst [vmem:[%s184 + $0x178] sm:$0xff] %v279
          %v281 = vld [vmem:[%s183 + $0x180] sm:$0xff]
          %282 = vst [vmem:[%s184 + $0x180] sm:$0xff] %v281
          %v283 = vld [vmem:[%s183 + $0x188] sm:$0xff]
          %284 = vst [vmem:[%s184 + $0x188] sm:$0xff] %v283
          %v285 = vld [vmem:[%s183 + $0x190] sm:$0xff]
          %286 = vst [vmem:[%s184 + $0x190] sm:$0xff] %v285
          %v287 = vld [vmem:[%s183 + $0x198] sm:$0xff]
          %288 = vst [vmem:[%s184 + $0x198] sm:$0xff] %v287
          %v289 = vld [vmem:[%s183 + $0x1a0] sm:$0xff]
          %290 = vst [vmem:[%s184 + $0x1a0] sm:$0xff] %v289
          %v291 = vld [vmem:[%s183 + $0x1a8] sm:$0xff]
          %292 = vst [vmem:[%s184 + $0x1a8] sm:$0xff] %v291
          %v293 = vld [vmem:[%s183 + $0x1b0] sm:$0xff]
          %294 = vst [vmem:[%s184 + $0x1b0] sm:$0xff] %v293
          %v295 = vld [vmem:[%s183 + $0x1b8] sm:$0xff]
          %296 = vst [vmem:[%s184 + $0x1b8] sm:$0xff] %v295
          %v297 = vld [vmem:[%s183 + $0x1c0] sm:$0xff]
          %298 = vst [vmem:[%s184 + $0x1c0] sm:$0xff] %v297
          %v299 = vld [vmem:[%s183 + $0x1c8] sm:$0xff]
          %300 = vst [vmem:[%s184 + $0x1c8] sm:$0xff] %v299
          %v301 = vld [vmem:[%s183 + $0x1d0] sm:$0xff]
          %302 = vst [vmem:[%s184 + $0x1d0] sm:$0xff] %v301
          %v303 = vld [vmem:[%s183 + $0x1d8] sm:$0xff]
          %304 = vst [vmem:[%s184 + $0x1d8] sm:$0xff] %v303
          %v305 = vld [vmem:[%s183 + $0x1e0] sm:$0xff]
          %306 = vst [vmem:[%s184 + $0x1e0] sm:$0xff] %v305
          %v307 = vld [vmem:[%s183 + $0x1e8] sm:$0xff]
          %308 = vst [vmem:[%s184 + $0x1e8] sm:$0xff] %v307
          %v309 = vld [vmem:[%s183 + $0x1f0] sm:$0xff]
          %310 = vst [vmem:[%s184 + $0x1f0] sm:$0xff] %v309
          %v311 = vld [vmem:[%s183 + $0x1f8] sm:$0xff]
          %312 = vst [vmem:[%s184 + $0x1f8] sm:$0xff] %v311
          %v313 = vld [vmem:[%s183 + $0x200] sm:$0xff]
          %314 = vst [vmem:[%s184 + $0x200] sm:$0xff] %v313
          %v315 = vld [vmem:[%s183 + $0x208] sm:$0xff]
          %316 = vst [vmem:[%s184 + $0x208] sm:$0xff] %v315
          %v317 = vld [vmem:[%s183 + $0x210] sm:$0xff]
          %318 = vst [vmem:[%s184 + $0x210] sm:$0xff] %v317
          %v319 = vld [vmem:[%s183 + $0x218] sm:$0xff]
          %320 = vst [vmem:[%s184 + $0x218] sm:$0xff] %v319
          %v321 = vld [vmem:[%s183 + $0x220] sm:$0xff]
          %322 = vst [vmem:[%s184 + $0x220] sm:$0xff] %v321
          %v323 = vld [vmem:[%s183 + $0x228] sm:$0xff]
          %324 = vst [vmem:[%s184 + $0x228] sm:$0xff] %v323
          %v325 = vld [vmem:[%s183 + $0x230] sm:$0xff]
          %326 = vst [vmem:[%s184 + $0x230] sm:$0xff] %v325
          %v327 = vld [vmem:[%s183 + $0x238] sm:$0xff]
          %328 = vst [vmem:[%s184 + $0x238] sm:$0xff] %v327
          %v329 = vld [vmem:[%s183 + $0x240] sm:$0xff]
          %330 = vst [vmem:[%s184 + $0x240] sm:$0xff] %v329
          %v331 = vld [vmem:[%s183 + $0x248] sm:$0xff]
          %332 = vst [vmem:[%s184 + $0x248] sm:$0xff] %v331
          %v333 = vld [vmem:[%s183 + $0x250] sm:$0xff]
          %334 = vst [vmem:[%s184 + $0x250] sm:$0xff] %v333
          %v335 = vld [vmem:[%s183 + $0x258] sm:$0xff]
          %336 = vst [vmem:[%s184 + $0x258] sm:$0xff] %v335
          %v337 = vld [vmem:[%s183 + $0x260] sm:$0xff]
          %338 = vst [vmem:[%s184 + $0x260] sm:$0xff] %v337
          %v339 = vld [vmem:[%s183 + $0x268] sm:$0xff]
          %340 = vst [vmem:[%s184 + $0x268] sm:$0xff] %v339
          %v341 = vld [vmem:[%s183 + $0x270] sm:$0xff]
          %342 = vst [vmem:[%s184 + $0x270] sm:$0xff] %v341
          %v343 = vld [vmem:[%s183 + $0x278] sm:$0xff]
          %344 = vst [vmem:[%s184 + $0x278] sm:$0xff] %v343
          %v345 = vld [vmem:[%s183 + $0x280] sm:$0xff]
          %346 = vst [vmem:[%s184 + $0x280] sm:$0xff] %v345
          %v347 = vld [vmem:[%s183 + $0x288] sm:$0xff]
          %348 = vst [vmem:[%s184 + $0x288] sm:$0xff] %v347
          %v349 = vld [vmem:[%s183 + $0x290] sm:$0xff]
          %350 = vst [vmem:[%s184 + $0x290] sm:$0xff] %v349
          %v351 = vld [vmem:[%s183 + $0x298] sm:$0xff]
          %352 = vst [vmem:[%s184 + $0x298] sm:$0xff] %v351
          %v353 = vld [vmem:[%s183 + $0x2a0] sm:$0xff]
          %354 = vst [vmem:[%s184 + $0x2a0] sm:$0xff] %v353
          %v355 = vld [vmem:[%s183 + $0x2a8] sm:$0xff]
          %356 = vst [vmem:[%s184 + $0x2a8] sm:$0xff] %v355
          %v357 = vld [vmem:[%s183 + $0x2b0] sm:$0xff]
          %358 = vst [vmem:[%s184 + $0x2b0] sm:$0xff] %v357
          %v359 = vld [vmem:[%s183 + $0x2b8] sm:$0xff]
          %360 = vst [vmem:[%s184 + $0x2b8] sm:$0xff] %v359
          %v361 = vld [vmem:[%s183 + $0x2c0] sm:$0xff]
          %362 = vst [vmem:[%s184 + $0x2c0] sm:$0xff] %v361
          %v363 = vld [vmem:[%s183 + $0x2c8] sm:$0xff]
          %364 = vst [vmem:[%s184 + $0x2c8] sm:$0xff] %v363
          %v365 = vld [vmem:[%s183 + $0x2d0] sm:$0xff]
          %366 = vst [vmem:[%s184 + $0x2d0] sm:$0xff] %v365
          %v367 = vld [vmem:[%s183 + $0x2d8] sm:$0xff]
          %368 = vst [vmem:[%s184 + $0x2d8] sm:$0xff] %v367
          %v369 = vld [vmem:[%s183 + $0x2e0] sm:$0xff]
          %370 = vst [vmem:[%s184 + $0x2e0] sm:$0xff] %v369
          %v371 = vld [vmem:[%s183 + $0x2e8] sm:$0xff]
          %372 = vst [vmem:[%s184 + $0x2e8] sm:$0xff] %v371
          %v373 = vld [vmem:[%s183 + $0x2f0] sm:$0xff]
          %374 = vst [vmem:[%s184 + $0x2f0] sm:$0xff] %v373
          %v375 = vld [vmem:[%s183 + $0x2f8] sm:$0xff]
          %376 = vst [vmem:[%s184 + $0x2f8] sm:$0xff] %v375
          %v377 = vld [vmem:[%s183 + $0x300] sm:$0xff]
          %378 = vst [vmem:[%s184 + $0x300] sm:$0xff] %v377
          %v379 = vld [vmem:[%s183 + $0x308] sm:$0xff]
          %380 = vst [vmem:[%s184 + $0x308] sm:$0xff] %v379
          %v381 = vld [vmem:[%s183 + $0x310] sm:$0xff]
          %382 = vst [vmem:[%s184 + $0x310] sm:$0xff] %v381
          %v383 = vld [vmem:[%s183 + $0x318] sm:$0xff]
          %384 = vst [vmem:[%s184 + $0x318] sm:$0xff] %v383
          %v385 = vld [vmem:[%s183 + $0x320] sm:$0xff]
          %386 = vst [vmem:[%s184 + $0x320] sm:$0xff] %v385
          %v387 = vld [vmem:[%s183 + $0x328] sm:$0xff]
          %388 = vst [vmem:[%s184 + $0x328] sm:$0xff] %v387
          %v389 = vld [vmem:[%s183 + $0x330] sm:$0xff]
          %390 = vst [vmem:[%s184 + $0x330] sm:$0xff] %v389
          %v391 = vld [vmem:[%s183 + $0x338] sm:$0xff]
          %392 = vst [vmem:[%s184 + $0x338] sm:$0xff] %v391
          %v393 = vld [vmem:[%s183 + $0x340] sm:$0xff]
          %394 = vst [vmem:[%s184 + $0x340] sm:$0xff] %v393
          %v395 = vld [vmem:[%s183 + $0x348] sm:$0xff]
          %396 = vst [vmem:[%s184 + $0x348] sm:$0xff] %v395
          %v397 = vld [vmem:[%s183 + $0x350] sm:$0xff]
          %398 = vst [vmem:[%s184 + $0x350] sm:$0xff] %v397
          %v399 = vld [vmem:[%s183 + $0x358] sm:$0xff]
          %400 = vst [vmem:[%s184 + $0x358] sm:$0xff] %v399
          %v401 = vld [vmem:[%s183 + $0x360] sm:$0xff]
          %402 = vst [vmem:[%s184 + $0x360] sm:$0xff] %v401
          %v403 = vld [vmem:[%s183 + $0x368] sm:$0xff]
          %404 = vst [vmem:[%s184 + $0x368] sm:$0xff] %v403
          %v405 = vld [vmem:[%s183 + $0x370] sm:$0xff]
          %406 = vst [vmem:[%s184 + $0x370] sm:$0xff] %v405
          %v407 = vld [vmem:[%s183 + $0x378] sm:$0xff]
          %408 = vst [vmem:[%s184 + $0x378] sm:$0xff] %v407
          %v409 = vld [vmem:[%s183 + $0x380] sm:$0xff]
          %410 = vst [vmem:[%s184 + $0x380] sm:$0xff] %v409
          %v411 = vld [vmem:[%s183 + $0x388] sm:$0xff]
          %412 = vst [vmem:[%s184 + $0x388] sm:$0xff] %v411
          %v413 = vld [vmem:[%s183 + $0x390] sm:$0xff]
          %414 = vst [vmem:[%s184 + $0x390] sm:$0xff] %v413
          %v415 = vld [vmem:[%s183 + $0x398] sm:$0xff]
          %416 = vst [vmem:[%s184 + $0x398] sm:$0xff] %v415
          %v417 = vld [vmem:[%s183 + $0x3a0] sm:$0xff]
          %418 = vst [vmem:[%s184 + $0x3a0] sm:$0xff] %v417
          %v419 = vld [vmem:[%s183 + $0x3a8] sm:$0xff]
          %420 = vst [vmem:[%s184 + $0x3a8] sm:$0xff] %v419
          %v421 = vld [vmem:[%s183 + $0x3b0] sm:$0xff]
          %422 = vst [vmem:[%s184 + $0x3b0] sm:$0xff] %v421
          %v423 = vld [vmem:[%s183 + $0x3b8] sm:$0xff]
          %424 = vst [vmem:[%s184 + $0x3b8] sm:$0xff] %v423
          %v425 = vld [vmem:[%s183 + $0x3c0] sm:$0xff]
          %426 = vst [vmem:[%s184 + $0x3c0] sm:$0xff] %v425
          %v427 = vld [vmem:[%s183 + $0x3c8] sm:$0xff]
          %428 = vst [vmem:[%s184 + $0x3c8] sm:$0xff] %v427
          %v429 = vld [vmem:[%s183 + $0x3d0] sm:$0xff]
          %430 = vst [vmem:[%s184 + $0x3d0] sm:$0xff] %v429
          %v431 = vld [vmem:[%s183 + $0x3d8] sm:$0xff]
          %432 = vst [vmem:[%s184 + $0x3d8] sm:$0xff] %v431
          %v433 = vld [vmem:[%s183 + $0x3e0] sm:$0xff]
          %434 = vst [vmem:[%s184 + $0x3e0] sm:$0xff] %v433
          %v435 = vld [vmem:[%s183 + $0x3e8] sm:$0xff]
          %436 = vst [vmem:[%s184 + $0x3e8] sm:$0xff] %v435
          %v437 = vld [vmem:[%s183 + $0x3f0] sm:$0xff]
          %438 = vst [vmem:[%s184 + $0x3f0] sm:$0xff] %v437
          %v439 = vld [vmem:[%s183 + $0x3f8] sm:$0xff]
          %440 = vst [vmem:[%s184 + $0x3f8] sm:$0xff] %v439
        $region41: #{aae_forward.1} parent=35 // loop_footer
          %s182 = sadd.s32 1, %s178
        $region42: #{aae_forward.1} parent=35 // loop_footer_branch
          %177 = sbr.rel target = $region38
        $region43: #{aae_forward.1} parent=35 // loop_exit
          _
      $region36: #{aae_forward.1} parent=20 // pred_fallthru
        _
      %p441 = pneg %p173
      // Predicated region
      $region44: #{aae_forward.1} parent=20 // pred_check
        _
      $region45: #{aae_forward.1} parent=20 // pred_check_branch
        %443 = sbr.rel (%p173) target = $region47
      $region46: #{aae_forward.1} parent=20 // pred_region
        %s444 = sand.u32 1024, 7
      $region47: #{aae_forward.1} parent=20 // pred_fallthru
        _
    $region21: #{aae_forward.1} parent=1 // pred_fallthru
      _
    // Predicated region
    $region22: #{aae_forward.1} parent=1 // pred_check
      %p158 = pneg %p154
    $region23: #{aae_forward.1} parent=1 // pred_check_branch
      %160 = sbr.rel (%p158) target = $region25
    $region24: #{aae_forward.1} parent=1 // pred_region
      %s161 = sshllo.u32 0, 1024
      loop: start=0, step=1, limit=1
      $region26: #{aae_forward.1} parent=24 // loop_pre_header
        _
      $region27: #{aae_forward.1} parent=24 // loop_header
        %s163 = sphi 0, %s167
        %p164 = scmp.ge.s32.totalorder %s163, 1
        %s168 = sphi %s5, %s5
        %s169 = sphi [#allocation5], [#allocation5]
      $region28: #{aae_forward.1} parent=24 // loop_header_branch
        %166 = sbr.rel (%p164) target = $region32
      $region29: #{aae_forward.1} parent=24 // loop_body
        %v170 = vld [vmem:[%s168] sm:%s161]
        %171 = vst [vmem:[%s169] sm:%s161] %v170
      $region30: #{aae_forward.1} parent=24 // loop_footer
        %s167 = sadd.s32 1, %s163
      $region31: #{aae_forward.1} parent=24 // loop_footer_branch
        %162 = sbr.rel target = $region27
      $region32: #{aae_forward.1} parent=24 // loop_exit
        _
    $region25: #{aae_forward.1} parent=1 // pred_fallthru
      _
    // Predicated region
    $region48: #{aae_forward.1} parent=1 // pred_check
      _
    $region49: #{aae_forward.1} parent=1 // pred_check_branch
      %447 = sbr.rel (0) target = $region51
    $region50: #{aae_forward.1} parent=1 // pred_region
      %448 = vsyncadd %s152, 16384
    $region51: #{aae_forward.1} parent=1 // pred_fallthru
      _
    %s449 = scalar_lea.sflag [#allocation10], 4
    %s451 = sshll.u32 1, 14
    %s452 = sxor.u32 4294967295, %s451
    %s454 = sadd.s32 2, %s51
    %s456 = sshll.u32 7, 26
    %s457 = sxor.u32 4294967295, %s456
    %s458 = sand.u32 0, %s457
    %s459 = sshll.u32 %s454, 26
    %s460 = sor.u32 %s458, %s459
    %s461 = sshll.u32 [#allocation6], 4
    %s462 = int_to_ptr.vmem [resolvable:$true] %s461
    %465 = sst [smem:[#allocation25]] 2048
    %s466 = scalar_lea.smem [#allocation25], 1
    %467 = sst [smem:[%s466]] 2048
    %s468 = scalar_lea.smem [#allocation25], 2
    %469 = sst [smem:[%s468]] 16
    %s470 = scalar_lea.smem [#allocation25], 3
    %471 = sst [smem:[%s470]] 64
    %s472 = scalar_lea.smem [#allocation25], 4
    %473 = sst [smem:[%s472]] 128
    %s474 = scalar_lea.smem [#allocation25], 5
    %475 = sst [smem:[%s474]] 2
    %s476 = scalar_lea.smem [#allocation25], 6
    %477 = sst [smem:[%s476]] 1024
    %s478 = scalar_lea.smem [#allocation25], 7
    %479 = sst [smem:[%s478]] 64
    %s480 = scalar_lea.smem [#allocation25], 8
    %481 = sst [smem:[%s480]] 4
    %483 = dma.general %s6, 4096, %s462, %s449, [#allocation24], [#allocation25], %s460, 0
    %s484 = scalar_lea.sflag [#allocation10], 5
    %s486 = sshll.u32 1, 14
    %s487 = sxor.u32 4294967295, %s486
    %s489 = sadd.s32 2, %s51
    %s491 = sshll.u32 7, 26
    %s492 = sxor.u32 4294967295, %s491
    %s493 = sand.u32 0, %s492
    %s494 = sshll.u32 %s489, 26
    %s495 = sor.u32 %s493, %s494
    %s496 = sshll.u32 [#allocation7], 4
    %s497 = int_to_ptr.vmem [resolvable:$true] %s496
    %500 = sst [smem:[#allocation27]] 512
    %s501 = scalar_lea.smem [#allocation27], 1
    %502 = sst [smem:[%s501]] 512
    %s503 = scalar_lea.smem [#allocation27], 2
    %504 = sst [smem:[%s503]] 4
    %s505 = scalar_lea.smem [#allocation27], 3
    %506 = sst [smem:[%s505]] 64
    %s507 = scalar_lea.smem [#allocation27], 4
    %508 = sst [smem:[%s507]] 128
    %s509 = scalar_lea.smem [#allocation27], 5
    %510 = sst [smem:[%s509]] 2
    %s511 = scalar_lea.smem [#allocation27], 6
    %512 = sst [smem:[%s511]] 256
    %s513 = scalar_lea.smem [#allocation27], 7
    %514 = sst [smem:[%s513]] 64
    %s515 = scalar_lea.smem [#allocation27], 8
    %516 = sst [smem:[%s515]] 4
    %518 = dma.general %s7, 65536, %s497, %s484, [#allocation26], [#allocation27], %s495, 0
    %s519 = scalar_lea.sflag [#allocation10], 6
    %s521 = sshll.u32 1, 14
    %s522 = sxor.u32 4294967295, %s521
    %s524 = sadd.s32 2, %s51
    %s526 = sshll.u32 7, 26
    %s527 = sxor.u32 4294967295, %s526
    %s528 = sand.u32 0, %s527
    %s529 = sshll.u32 %s524, 26
    %s530 = sor.u32 %s528, %s529
    %s531 = sshll.u32 [#allocation8], 4
    %s532 = int_to_ptr.vmem [resolvable:$true] %s531
    %535 = sst [smem:[#allocation29]] 512
    %s536 = scalar_lea.smem [#allocation29], 1
    %537 = sst [smem:[%s536]] 512
    %s538 = scalar_lea.smem [#allocation29], 2
    %539 = sst [smem:[%s538]] 4
    %s540 = scalar_lea.smem [#allocation29], 3
    %541 = sst [smem:[%s540]] 64
    %s542 = scalar_lea.smem [#allocation29], 4
    %543 = sst [smem:[%s542]] 128
    %s544 = scalar_lea.smem [#allocation29], 5
    %545 = sst [smem:[%s544]] 2
    %s546 = scalar_lea.smem [#allocation29], 6
    %547 = sst [smem:[%s546]] 256
    %s548 = scalar_lea.smem [#allocation29], 7
    %549 = sst [smem:[%s548]] 64
    %s550 = scalar_lea.smem [#allocation29], 8
    %551 = sst [smem:[%s550]] 4
    %553 = dma.general %s8, 16384, %s532, %s519, [#allocation28], [#allocation29], %s530, 0
    %s554 = scalar_lea.sflag [#allocation10], 7
    // Predicated region
    $region52: #{aae_forward.1} parent=1 // pred_check
      _
    $region53: #{aae_forward.1} parent=1 // pred_check_branch
      %556 = sbr.rel target = $region55
    $region54: #{aae_forward.1} parent=1 // pred_region
      %557 = sst [smem:[#allocation32]] [#allocation31]
      %558 = sst [smem:[#allocation33]] [#allocation30]
    $region55: #{aae_forward.1} parent=1 // pred_fallthru
      _
    %560 = shalt.err (0)
    %s562 = sshll.u32 [#allocation9], 4
    %s563 = int_to_ptr.vmem [resolvable:$true] %s562
    %565 = dma.hbm_to_vmem [thread:$0]  %s9, 4096, %s563, %s554
    %v566 = vld [vmem:[#allocation11] sm:$0xff]
    %v567 = vpack.c.bf16 %v566, %v566
    %s568 = smul.u32 4, 8
    %s569 = smul.u32 %s568, 4
    %s570 = sshll.u32 %s569, 4
    %571 = dma.done [#allocation10], %s570
    %v572 = vld [vmem:[#allocation2] sm:$0xff]
    %v573 = vld [vmem:[#allocation2 + $0x8] sm:$0xff]
    %v574 = vld [vmem:[#allocation2 + $0x10] sm:$0xff]
    %v575 = vld [vmem:[#allocation2 + $0x18] sm:$0xff]
    %v576 = vld [vmem:[#allocation2 + $0x20] sm:$0xff]
    %v577 = vld [vmem:[#allocation2 + $0x28] sm:$0xff]
    %v578 = vld [vmem:[#allocation2 + $0x30] sm:$0xff]
    %v579 = vld [vmem:[#allocation2 + $0x38] sm:$0xff]
    %v580 = vld [vmem:[#allocation2 + $0x40] sm:$0xff]
    %v581 = vld [vmem:[#allocation2 + $0x48] sm:$0xff]
    %v582 = vld [vmem:[#allocation2 + $0x50] sm:$0xff]
    %v583 = vld [vmem:[#allocation2 + $0x58] sm:$0xff]
    %v584 = vld [vmem:[#allocation2 + $0x60] sm:$0xff]
    %v585 = vld [vmem:[#allocation2 + $0x68] sm:$0xff]
    %v586 = vld [vmem:[#allocation2 + $0x70] sm:$0xff]
    %v587 = vld [vmem:[#allocation2 + $0x78] sm:$0xff]
    %v588 = vld [vmem:[#allocation14] ss:$8 sm:$0xf]
    %v590 = vlaneseq
    %v591 = vshrl.u32 %v590, 7
    %v592 = vsub.s32 0, %v591
    %v593 = vrot.slane %v588, %v592
    %v594 = vlaneseq
    %v595 = vshrl.u32 %v594, 7
    %v596 = vsub.s32 1, %v595
    %v597 = vrot.slane %v588, %v596
    %v598 = vlaneseq
    %v599 = vshrl.u32 %v598, 7
    %v600 = vsub.s32 2, %v599
    %v601 = vrot.slane %v588, %v600
    %v602 = vlaneseq
    %v603 = vshrl.u32 %v602, 7
    %v604 = vsub.s32 3, %v603
    %v605 = vrot.slane %v588, %v604
    %vm610 = vcmask 523264
    %v612 = vsel %vm610, %v567, 0
    %614 = vmatprep.subr.bf16.mxu0 %v573
    %615 = vmatpush1.bf16.msra.mxu0 %v572
    %616 = vmatprep.subr.bf16.mxu0 %v577
    %617 = vmatpush1.bf16.msra.mxu0 %v576
    %618 = vmatprep.subr.bf16.mxu0 %v581
    %619 = vmatpush1.bf16.msra.mxu0 %v580
    %620 = vmatprep.subr.bf16.mxu0 %v585
    %621 = vmatpush1.bf16.msra.mxu0 %v584
    %622 = vmatprep.subr.bf16.mxu0 0
    %623 = vmatpush1.bf16.msra.mxu0 0
    %624 = vmatprep.subr.bf16.mxu0 0
    %625 = vmatpush1.bf16.msra.mxu0 0
    %626 = vmatprep.subr.bf16.mxu0 0
    %627 = vmatpush1.bf16.msra.mxu0 0
    %628 = vmatprep.subr.bf16.mxu0 0
    %629 = vmatpush1.bf16.msra.mxu0 0
    %630 = vmatprep.subr.bf16.mxu0 0
    %631 = vmatpush1.bf16.msra.mxu0 0
    %632 = vmatprep.subr.bf16.mxu0 0
    %633 = vmatpush1.bf16.msra.mxu0 0
    %634 = vmatprep.subr.bf16.mxu0 0
    %635 = vmatpush1.bf16.msra.mxu0 0
    %636 = vmatprep.subr.bf16.mxu0 0
    %637 = vmatpush1.bf16.msra.mxu0 0
    %638 = vmatprep.subr.bf16.mxu0 0
    %639 = vmatpush1.bf16.msra.mxu0 0
    %640 = vmatprep.subr.bf16.mxu0 0
    %641 = vmatpush1.bf16.msra.mxu0 0
    %642 = vmatprep.subr.bf16.mxu0 0
    %643 = vmatpush1.bf16.msra.mxu0 0
    %644 = vmatprep.subr.bf16.mxu0 0
    %645 = vmatpush1.bf16.msra.mxu0 0
    %646 = vmatprep.mubr.bf16.mxu0 0
    %647 = vmatmul.mubr.bf16.gmra.mrb[0].mxu0 %v612
    %v648 = vpop.f32.mrb[0].mxu0
    %v649 = vadd.f32 %v593, %v648
    %v650 = vpop.f32.mrb[0].mxu0
    %v651 = vadd.f32 %v597, %v650
    %v652 = vpop.f32.mrb[0].mxu0
    %v653 = vpop.f32.mrb[0].mxu0
    %654 = vdwg.mxu0
    %655 = vmatprep.subr.bf16.mxu0 %v575
    %656 = vmatpush1.bf16.msra.mxu0 %v574
    %657 = vmatprep.subr.bf16.mxu0 %v579
    %658 = vmatpush1.bf16.msra.mxu0 %v578
    %659 = vmatprep.subr.bf16.mxu0 %v583
    %660 = vmatpush1.bf16.msra.mxu0 %v582
    %661 = vmatprep.subr.bf16.mxu0 %v587
    %662 = vmatpush1.bf16.msra.mxu0 %v586
    %663 = vmatprep.subr.bf16.mxu0 0
    %664 = vmatpush1.bf16.msra.mxu0 0
    %665 = vmatprep.subr.bf16.mxu0 0
    %666 = vmatpush1.bf16.msra.mxu0 0
    %667 = vmatprep.subr.bf16.mxu0 0
    %668 = vmatpush1.bf16.msra.mxu0 0
    %669 = vmatprep.subr.bf16.mxu0 0
    %670 = vmatpush1.bf16.msra.mxu0 0
    %671 = vmatprep.subr.bf16.mxu0 0
    %672 = vmatpush1.bf16.msra.mxu0 0
    %673 = vmatprep.subr.bf16.mxu0 0
    %674 = vmatpush1.bf16.msra.mxu0 0
    %675 = vmatprep.subr.bf16.mxu0 0
    %676 = vmatpush1.bf16.msra.mxu0 0
    %677 = vmatprep.subr.bf16.mxu0 0
    %678 = vmatpush1.bf16.msra.mxu0 0
    %679 = vmatprep.subr.bf16.mxu0 0
    %680 = vmatpush1.bf16.msra.mxu0 0
    %681 = vmatprep.subr.bf16.mxu0 0
    %682 = vmatpush1.bf16.msra.mxu0 0
    %683 = vmatprep.subr.bf16.mxu0 0
    %684 = vmatpush1.bf16.msra.mxu0 0
    %685 = vmatprep.subr.bf16.mxu0 0
    %686 = vmatpush1.bf16.msra.mxu0 0
    %687 = vmatprep.mubr.bf16.mxu0 0
    %688 = vmatmul.mubr.bf16.gmra.mrb[0].mxu0 %v612
    %v689 = vpop.f32.mrb[0].mxu0
    %v690 = vadd.f32 %v601, %v689
    %v691 = vpop.f32.mrb[0].mxu0
    %v692 = vadd.f32 %v605, %v691
    %v693 = vpop.f32.mrb[0].mxu0
    %v694 = vpop.f32.mrb[0].mxu0
    %695 = vdwg.mxu0
    %v696 = vmax.f32 %v649, 0.0
    %v697 = vmax.f32 %v651, 0.0
    %v698 = vmax.f32 %v690, 0.0
    %v699 = vmax.f32 %v692, 0.0
    %v700 = vpack.c.bf16 %v696, %v696
    %v701 = vpack.c.bf16 %v697, %v697
    %v702 = vpack.c.bf16 %v698, %v698
    %v703 = vpack.c.bf16 %v699, %v699
    %s704 = smul.u32 4, 64
    %s705 = smul.u32 %s704, 4
    %s706 = sshll.u32 %s705, 4
    %707 = dma.done %s82, %s706
    %v708 = vld [vmem:[#allocation3] sm:$0xff]
    %v709 = vld [vmem:[#allocation3 + $0x8] sm:$0xff]
    %v710 = vld [vmem:[#allocation3 + $0x10] sm:$0xff]
    %v711 = vld [vmem:[#allocation3 + $0x18] sm:$0xff]
    %v712 = vld [vmem:[#allocation3 + $0x20] sm:$0xff]
    %v713 = vld [vmem:[#allocation3 + $0x28] sm:$0xff]
    %v714 = vld [vmem:[#allocation3 + $0x30] sm:$0xff]
    %v715 = vld [vmem:[#allocation3 + $0x38] sm:$0xff]
    %v716 = vld [vmem:[#allocation3 + $0x40] sm:$0xff]
    %v717 = vld [vmem:[#allocation3 + $0x48] sm:$0xff]
    %v718 = vld [vmem:[#allocation3 + $0x50] sm:$0xff]
    %v719 = vld [vmem:[#allocation3 + $0x58] sm:$0xff]
    %v720 = vld [vmem:[#allocation3 + $0x60] sm:$0xff]
    %v721 = vld [vmem:[#allocation3 + $0x68] sm:$0xff]
    %v722 = vld [vmem:[#allocation3 + $0x70] sm:$0xff]
    %v723 = vld [vmem:[#allocation3 + $0x78] sm:$0xff]
    %v724 = vld [vmem:[#allocation3 + $0x80] sm:$0xff]
    %v725 = vld [vmem:[#allocation3 + $0x88] sm:$0xff]
    %v726 = vld [vmem:[#allocation3 + $0x90] sm:$0xff]
    %v727 = vld [vmem:[#allocation3 + $0x98] sm:$0xff]
    %v728 = vld [vmem:[#allocation3 + $0xa0] sm:$0xff]
    %v729 = vld [vmem:[#allocation3 + $0xa8] sm:$0xff]
    %v730 = vld [vmem:[#allocation3 + $0xb0] sm:$0xff]
    %v731 = vld [vmem:[#allocation3 + $0xb8] sm:$0xff]
    %v732 = vld [vmem:[#allocation3 + $0xc0] sm:$0xff]
    %v733 = vld [vmem:[#allocation3 + $0xc8] sm:$0xff]
    %v734 = vld [vmem:[#allocation3 + $0xd0] sm:$0xff]
    %v735 = vld [vmem:[#allocation3 + $0xd8] sm:$0xff]
    %v736 = vld [vmem:[#allocation3 + $0xe0] sm:$0xff]
    %v737 = vld [vmem:[#allocation3 + $0xe8] sm:$0xff]
    %v738 = vld [vmem:[#allocation3 + $0xf0] sm:$0xff]
    %v739 = vld [vmem:[#allocation3 + $0xf8] sm:$0xff]
    %v740 = vld [vmem:[#allocation3 + $0x100] sm:$0xff]
    %v741 = vld [vmem:[#allocation3 + $0x108] sm:$0xff]
    %v742 = vld [vmem:[#allocation3 + $0x110] sm:$0xff]
    %v743 = vld [vmem:[#allocation3 + $0x118] sm:$0xff]
    %v744 = vld [vmem:[#allocation3 + $0x120] sm:$0xff]
    %v745 = vld [vmem:[#allocation3 + $0x128] sm:$0xff]
    %v746 = vld [vmem:[#allocation3 + $0x130] sm:$0xff]
    %v747 = vld [vmem:[#allocation3 + $0x138] sm:$0xff]
    %v748 = vld [vmem:[#allocation3 + $0x140] sm:$0xff]
    %v749 = vld [vmem:[#allocation3 + $0x148] sm:$0xff]
    %v750 = vld [vmem:[#allocation3 + $0x150] sm:$0xff]
    %v751 = vld [vmem:[#allocation3 + $0x158] sm:$0xff]
    %v752 = vld [vmem:[#allocation3 + $0x160] sm:$0xff]
    %v753 = vld [vmem:[#allocation3 + $0x168] sm:$0xff]
    %v754 = vld [vmem:[#allocation3 + $0x170] sm:$0xff]
    %v755 = vld [vmem:[#allocation3 + $0x178] sm:$0xff]
    %v756 = vld [vmem:[#allocation3 + $0x180] sm:$0xff]
    %v757 = vld [vmem:[#allocation3 + $0x188] sm:$0xff]
    %v758 = vld [vmem:[#allocation3 + $0x190] sm:$0xff]
    %v759 = vld [vmem:[#allocation3 + $0x198] sm:$0xff]
    %v760 = vld [vmem:[#allocation3 + $0x1a0] sm:$0xff]
    %v761 = vld [vmem:[#allocation3 + $0x1a8] sm:$0xff]
    %v762 = vld [vmem:[#allocation3 + $0x1b0] sm:$0xff]
    %v763 = vld [vmem:[#allocation3 + $0x1b8] sm:$0xff]
    %v764 = vld [vmem:[#allocation3 + $0x1c0] sm:$0xff]
    %v765 = vld [vmem:[#allocation3 + $0x1c8] sm:$0xff]
    %v766 = vld [vmem:[#allocation3 + $0x1d0] sm:$0xff]
    %v767 = vld [vmem:[#allocation3 + $0x1d8] sm:$0xff]
    %v768 = vld [vmem:[#allocation3 + $0x1e0] sm:$0xff]
    %v769 = vld [vmem:[#allocation3 + $0x1e8] sm:$0xff]
    %v770 = vld [vmem:[#allocation3 + $0x1f0] sm:$0xff]
    %v771 = vld [vmem:[#allocation3 + $0x1f8] sm:$0xff]
    %v772 = vld [vmem:[#allocation3 + $0x200] sm:$0xff]
    %v773 = vld [vmem:[#allocation3 + $0x208] sm:$0xff]
    %v774 = vld [vmem:[#allocation3 + $0x210] sm:$0xff]
    %v775 = vld [vmem:[#allocation3 + $0x218] sm:$0xff]
    %v776 = vld [vmem:[#allocation3 + $0x220] sm:$0xff]
    %v777 = vld [vmem:[#allocation3 + $0x228] sm:$0xff]
    %v778 = vld [vmem:[#allocation3 + $0x230] sm:$0xff]
    %v779 = vld [vmem:[#allocation3 + $0x238] sm:$0xff]
    %v780 = vld [vmem:[#allocation3 + $0x240] sm:$0xff]
    %v781 = vld [vmem:[#allocation3 + $0x248] sm:$0xff]
    %v782 = vld [vmem:[#allocation3 + $0x250] sm:$0xff]
    %v783 = vld [vmem:[#allocation3 + $0x258] sm:$0xff]
    %v784 = vld [vmem:[#allocation3 + $0x260] sm:$0xff]
    %v785 = vld [vmem:[#allocation3 + $0x268] sm:$0xff]
    %v786 = vld [vmem:[#allocation3 + $0x270] sm:$0xff]
    %v787 = vld [vmem:[#allocation3 + $0x278] sm:$0xff]
    %v788 = vld [vmem:[#allocation3 + $0x280] sm:$0xff]
    %v789 = vld [vmem:[#allocation3 + $0x288] sm:$0xff]
    %v790 = vld [vmem:[#allocation3 + $0x290] sm:$0xff]
    %v791 = vld [vmem:[#allocation3 + $0x298] sm:$0xff]
    %v792 = vld [vmem:[#allocation3 + $0x2a0] sm:$0xff]
    %v793 = vld [vmem:[#allocation3 + $0x2a8] sm:$0xff]
    %v794 = vld [vmem:[#allocation3 + $0x2b0] sm:$0xff]
    %v795 = vld [vmem:[#allocation3 + $0x2b8] sm:$0xff]
    %v796 = vld [vmem:[#allocation3 + $0x2c0] sm:$0xff]
    %v797 = vld [vmem:[#allocation3 + $0x2c8] sm:$0xff]
    %v798 = vld [vmem:[#allocation3 + $0x2d0] sm:$0xff]
    %v799 = vld [vmem:[#allocation3 + $0x2d8] sm:$0xff]
    %v800 = vld [vmem:[#allocation3 + $0x2e0] sm:$0xff]
    %v801 = vld [vmem:[#allocation3 + $0x2e8] sm:$0xff]
    %v802 = vld [vmem:[#allocation3 + $0x2f0] sm:$0xff]
    %v803 = vld [vmem:[#allocation3 + $0x2f8] sm:$0xff]
    %v804 = vld [vmem:[#allocation3 + $0x300] sm:$0xff]
    %v805 = vld [vmem:[#allocation3 + $0x308] sm:$0xff]
    %v806 = vld [vmem:[#allocation3 + $0x310] sm:$0xff]
    %v807 = vld [vmem:[#allocation3 + $0x318] sm:$0xff]
    %v808 = vld [vmem:[#allocation3 + $0x320] sm:$0xff]
    %v809 = vld [vmem:[#allocation3 + $0x328] sm:$0xff]
    %v810 = vld [vmem:[#allocation3 + $0x330] sm:$0xff]
    %v811 = vld [vmem:[#allocation3 + $0x338] sm:$0xff]
    %v812 = vld [vmem:[#allocation3 + $0x340] sm:$0xff]
    %v813 = vld [vmem:[#allocation3 + $0x348] sm:$0xff]
    %v814 = vld [vmem:[#allocation3 + $0x350] sm:$0xff]
    %v815 = vld [vmem:[#allocation3 + $0x358] sm:$0xff]
    %v816 = vld [vmem:[#allocation3 + $0x360] sm:$0xff]
    %v817 = vld [vmem:[#allocation3 + $0x368] sm:$0xff]
    %v818 = vld [vmem:[#allocation3 + $0x370] sm:$0xff]
    %v819 = vld [vmem:[#allocation3 + $0x378] sm:$0xff]
    %v820 = vld [vmem:[#allocation3 + $0x380] sm:$0xff]
    %v821 = vld [vmem:[#allocation3 + $0x388] sm:$0xff]
    %v822 = vld [vmem:[#allocation3 + $0x390] sm:$0xff]
    %v823 = vld [vmem:[#allocation3 + $0x398] sm:$0xff]
    %v824 = vld [vmem:[#allocation3 + $0x3a0] sm:$0xff]
    %v825 = vld [vmem:[#allocation3 + $0x3a8] sm:$0xff]
    %v826 = vld [vmem:[#allocation3 + $0x3b0] sm:$0xff]
    %v827 = vld [vmem:[#allocation3 + $0x3b8] sm:$0xff]
    %v828 = vld [vmem:[#allocation3 + $0x3c0] sm:$0xff]
    %v829 = vld [vmem:[#allocation3 + $0x3c8] sm:$0xff]
    %v830 = vld [vmem:[#allocation3 + $0x3d0] sm:$0xff]
    %v831 = vld [vmem:[#allocation3 + $0x3d8] sm:$0xff]
    %v832 = vld [vmem:[#allocation3 + $0x3e0] sm:$0xff]
    %v833 = vld [vmem:[#allocation3 + $0x3e8] sm:$0xff]
    %v834 = vld [vmem:[#allocation3 + $0x3f0] sm:$0xff]
    %v835 = vld [vmem:[#allocation3 + $0x3f8] sm:$0xff]
    %s836 = scalar_lea.vmem [#allocation14], 1
    %v837 = vld [vmem:[%s836] ss:$8 sm:$0xf]
    %v839 = vlaneseq
    %v840 = vshrl.u32 %v839, 7
    %v841 = vsub.s32 0, %v840
    %v842 = vrot.slane %v837, %v841
    %v843 = vlaneseq
    %v844 = vshrl.u32 %v843, 7
    %v845 = vsub.s32 1, %v844
    %v846 = vrot.slane %v837, %v845
    %v847 = vlaneseq
    %v848 = vshrl.u32 %v847, 7
    %v849 = vsub.s32 2, %v848
    %v850 = vrot.slane %v837, %v849
    %v851 = vlaneseq
    %v852 = vshrl.u32 %v851, 7
    %v853 = vsub.s32 3, %v852
    %v854 = vrot.slane %v837, %v853
    %859 = vmatprep.subr.bf16.mxu0 %v709
    %860 = vmatpush1.bf16.msra.mxu0 %v708
    %861 = vmatprep.subr.bf16.mxu0 %v713
    %862 = vmatpush1.bf16.msra.mxu0 %v712
    %863 = vmatprep.subr.bf16.mxu0 %v717
    %864 = vmatpush1.bf16.msra.mxu0 %v716
    %865 = vmatprep.subr.bf16.mxu0 %v721
    %866 = vmatpush1.bf16.msra.mxu0 %v720
    %867 = vmatprep.subr.bf16.mxu0 %v725
    %868 = vmatpush1.bf16.msra.mxu0 %v724
    %869 = vmatprep.subr.bf16.mxu0 %v729
    %870 = vmatpush1.bf16.msra.mxu0 %v728
    %871 = vmatprep.subr.bf16.mxu0 %v733
    %872 = vmatpush1.bf16.msra.mxu0 %v732
    %873 = vmatprep.subr.bf16.mxu0 %v737
    %874 = vmatpush1.bf16.msra.mxu0 %v736
    %875 = vmatprep.subr.bf16.mxu0 %v741
    %876 = vmatpush1.bf16.msra.mxu0 %v740
    %877 = vmatprep.subr.bf16.mxu0 %v745
    %878 = vmatpush1.bf16.msra.mxu0 %v744
    %879 = vmatprep.subr.bf16.mxu0 %v749
    %880 = vmatpush1.bf16.msra.mxu0 %v748
    %881 = vmatprep.subr.bf16.mxu0 %v753
    %882 = vmatpush1.bf16.msra.mxu0 %v752
    %883 = vmatprep.subr.bf16.mxu0 %v757
    %884 = vmatpush1.bf16.msra.mxu0 %v756
    %885 = vmatprep.subr.bf16.mxu0 %v761
    %886 = vmatpush1.bf16.msra.mxu0 %v760
    %887 = vmatprep.subr.bf16.mxu0 %v765
    %888 = vmatpush1.bf16.msra.mxu0 %v764
    %889 = vmatprep.subr.bf16.mxu0 %v769
    %890 = vmatpush1.bf16.msra.mxu0 %v768
    %891 = vmatprep.mubr.bf16.mxu0 %v701
    %892 = vmatmul.mubr.bf16.gmra.mrb[0].mxu0 %v700
    %v893 = vpop.f32.mrb[0].mxu0
    %v894 = vadd.f32 %v842, %v893
    %v895 = vpop.f32.mrb[0].mxu0
    %v896 = vadd.f32 %v846, %v895
    %v897 = vpop.f32.mrb[0].mxu0
    %v898 = vpop.f32.mrb[0].mxu0
    %899 = vdwg.mxu0
    %900 = vmatprep.subr.bf16.mxu0 %v773
    %901 = vmatpush1.bf16.msra.mxu0 %v772
    %902 = vmatprep.subr.bf16.mxu0 %v777
    %903 = vmatpush1.bf16.msra.mxu0 %v776
    %904 = vmatprep.subr.bf16.mxu0 %v781
    %905 = vmatpush1.bf16.msra.mxu0 %v780
    %906 = vmatprep.subr.bf16.mxu0 %v785
    %907 = vmatpush1.bf16.msra.mxu0 %v784
    %908 = vmatprep.subr.bf16.mxu0 %v789
    %909 = vmatpush1.bf16.msra.mxu0 %v788
    %910 = vmatprep.subr.bf16.mxu0 %v793
    %911 = vmatpush1.bf16.msra.mxu0 %v792
    %912 = vmatprep.subr.bf16.mxu0 %v797
    %913 = vmatpush1.bf16.msra.mxu0 %v796
    %914 = vmatprep.subr.bf16.mxu0 %v801
    %915 = vmatpush1.bf16.msra.mxu0 %v800
    %916 = vmatprep.subr.bf16.mxu0 %v805
    %917 = vmatpush1.bf16.msra.mxu0 %v804
    %918 = vmatprep.subr.bf16.mxu0 %v809
    %919 = vmatpush1.bf16.msra.mxu0 %v808
    %920 = vmatprep.subr.bf16.mxu0 %v813
    %921 = vmatpush1.bf16.msra.mxu0 %v812
    %922 = vmatprep.subr.bf16.mxu0 %v817
    %923 = vmatpush1.bf16.msra.mxu0 %v816
    %924 = vmatprep.subr.bf16.mxu0 %v821
    %925 = vmatpush1.bf16.msra.mxu0 %v820
    %926 = vmatprep.subr.bf16.mxu0 %v825
    %927 = vmatpush1.bf16.msra.mxu0 %v824
    %928 = vmatprep.subr.bf16.mxu0 %v829
    %929 = vmatpush1.bf16.msra.mxu0 %v828
    %930 = vmatprep.subr.bf16.mxu0 %v833
    %931 = vmatpush1.bf16.msra.mxu0 %v832
    %932 = vmatprep.mubr.bf16.mxu0 %v703
    %933 = vmatmul.mubr.bf16.gmra.mrb[0].mxu0 %v702
    %v934 = vpop.f32.mrb[0].mxu0
    %v935 = vadd.f32 %v894, %v934
    %v936 = vpop.f32.mrb[0].mxu0
    %v937 = vadd.f32 %v896, %v936
    %v938 = vpop.f32.mrb[0].mxu0
    %v939 = vpop.f32.mrb[0].mxu0
    %940 = vdwg.mxu0
    %941 = vmatprep.subr.bf16.mxu0 %v711
    %942 = vmatpush1.bf16.msra.mxu0 %v710
    %943 = vmatprep.subr.bf16.mxu0 %v715
    %944 = vmatpush1.bf16.msra.mxu0 %v714
    %945 = vmatprep.subr.bf16.mxu0 %v719
    %946 = vmatpush1.bf16.msra.mxu0 %v718
    %947 = vmatprep.subr.bf16.mxu0 %v723
    %948 = vmatpush1.bf16.msra.mxu0 %v722
    %949 = vmatprep.subr.bf16.mxu0 %v727
    %950 = vmatpush1.bf16.msra.mxu0 %v726
    %951 = vmatprep.subr.bf16.mxu0 %v731
    %952 = vmatpush1.bf16.msra.mxu0 %v730
    %953 = vmatprep.subr.bf16.mxu0 %v735
    %954 = vmatpush1.bf16.msra.mxu0 %v734
    %955 = vmatprep.subr.bf16.mxu0 %v739
    %956 = vmatpush1.bf16.msra.mxu0 %v738
    %957 = vmatprep.subr.bf16.mxu0 %v743
    %958 = vmatpush1.bf16.msra.mxu0 %v742
    %959 = vmatprep.subr.bf16.mxu0 %v747
    %960 = vmatpush1.bf16.msra.mxu0 %v746
    %961 = vmatprep.subr.bf16.mxu0 %v751
    %962 = vmatpush1.bf16.msra.mxu0 %v750
    %963 = vmatprep.subr.bf16.mxu0 %v755
    %964 = vmatpush1.bf16.msra.mxu0 %v754
    %965 = vmatprep.subr.bf16.mxu0 %v759
    %966 = vmatpush1.bf16.msra.mxu0 %v758
    %967 = vmatprep.subr.bf16.mxu0 %v763
    %968 = vmatpush1.bf16.msra.mxu0 %v762
    %969 = vmatprep.subr.bf16.mxu0 %v767
    %970 = vmatpush1.bf16.msra.mxu0 %v766
    %971 = vmatprep.subr.bf16.mxu0 %v771
    %972 = vmatpush1.bf16.msra.mxu0 %v770
    %973 = vmatprep.mubr.bf16.mxu0 %v701
    %974 = vmatmul.mubr.bf16.gmra.mrb[0].mxu0 %v700
    %v975 = vpop.f32.mrb[0].mxu0
    %v976 = vadd.f32 %v850, %v975
    %v977 = vpop.f32.mrb[0].mxu0
    %v978 = vadd.f32 %v854, %v977
    %v979 = vpop.f32.mrb[0].mxu0
    %v980 = vpop.f32.mrb[0].mxu0
    %981 = vdwg.mxu0
    %982 = vmatprep.subr.bf16.mxu0 %v775
    %983 = vmatpush1.bf16.msra.mxu0 %v774
    %984 = vmatprep.subr.bf16.mxu0 %v779
    %985 = vmatpush1.bf16.msra.mxu0 %v778
    %986 = vmatprep.subr.bf16.mxu0 %v783
    %987 = vmatpush1.bf16.msra.mxu0 %v782
    %988 = vmatprep.subr.bf16.mxu0 %v787
    %989 = vmatpush1.bf16.msra.mxu0 %v786
    %990 = vmatprep.subr.bf16.mxu0 %v791
    %991 = vmatpush1.bf16.msra.mxu0 %v790
    %992 = vmatprep.subr.bf16.mxu0 %v795
    %993 = vmatpush1.bf16.msra.mxu0 %v794
    %994 = vmatprep.subr.bf16.mxu0 %v799
    %995 = vmatpush1.bf16.msra.mxu0 %v798
    %996 = vmatprep.subr.bf16.mxu0 %v803
    %997 = vmatpush1.bf16.msra.mxu0 %v802
    %998 = vmatprep.subr.bf16.mxu0 %v807
    %999 = vmatpush1.bf16.msra.mxu0 %v806
    %1000 = vmatprep.subr.bf16.mxu0 %v811
    %1001 = vmatpush1.bf16.msra.mxu0 %v810
    %1002 = vmatprep.subr.bf16.mxu0 %v815
    %1003 = vmatpush1.bf16.msra.mxu0 %v814
    %1004 = vmatprep.subr.bf16.mxu0 %v819
    %1005 = vmatpush1.bf16.msra.mxu0 %v818
    %1006 = vmatprep.subr.bf16.mxu0 %v823
    %1007 = vmatpush1.bf16.msra.mxu0 %v822
    %1008 = vmatprep.subr.bf16.mxu0 %v827
    %1009 = vmatpush1.bf16.msra.mxu0 %v826
    %1010 = vmatprep.subr.bf16.mxu0 %v831
    %1011 = vmatpush1.bf16.msra.mxu0 %v830
    %1012 = vmatprep.subr.bf16.mxu0 %v835
    %1013 = vmatpush1.bf16.msra.mxu0 %v834
    %1014 = vmatprep.mubr.bf16.mxu0 %v703
    %1015 = vmatmul.mubr.bf16.gmra.mrb[0].mxu0 %v702
    %v1016 = vpop.f32.mrb[0].mxu0
    %v1017 = vadd.f32 %v976, %v1016
    %v1018 = vpop.f32.mrb[0].mxu0
    %v1019 = vadd.f32 %v978, %v1018
    %v1020 = vpop.f32.mrb[0].mxu0
    %v1021 = vpop.f32.mrb[0].mxu0
    %1022 = vdwg.mxu0
    %v1023 = vmax.f32 %v935, 0.0
    %v1024 = vmax.f32 %v937, 0.0
    %v1025 = vmax.f32 %v1017, 0.0
    %v1026 = vmax.f32 %v1019, 0.0
    %v1027 = vpack.c.bf16 %v1023, %v1023
    %v1028 = vpack.c.bf16 %v1024, %v1024
    %v1029 = vpack.c.bf16 %v1025, %v1025
    %v1030 = vpack.c.bf16 %v1026, %v1026
    %s1031 = smul.u32 %s704, 16
    %s1032 = sshll.u32 %s1031, 4
    %1033 = dma.done %s117, %s1032
    %v1034 = vld [vmem:[#allocation4] sm:$0xff]
    %v1035 = vld [vmem:[#allocation4 + $0x8] sm:$0xff]
    %v1036 = vld [vmem:[#allocation4 + $0x10] sm:$0xff]
    %v1037 = vld [vmem:[#allocation4 + $0x18] sm:$0xff]
    %v1038 = vld [vmem:[#allocation4 + $0x20] sm:$0xff]
    %v1039 = vld [vmem:[#allocation4 + $0x28] sm:$0xff]
    %v1040 = vld [vmem:[#allocation4 + $0x30] sm:$0xff]
    %v1041 = vld [vmem:[#allocation4 + $0x38] sm:$0xff]
    %v1042 = vld [vmem:[#allocation4 + $0x40] sm:$0xff]
    %v1043 = vld [vmem:[#allocation4 + $0x48] sm:$0xff]
    %v1044 = vld [vmem:[#allocation4 + $0x50] sm:$0xff]
    %v1045 = vld [vmem:[#allocation4 + $0x58] sm:$0xff]
    %v1046 = vld [vmem:[#allocation4 + $0x60] sm:$0xff]
    %v1047 = vld [vmem:[#allocation4 + $0x68] sm:$0xff]
    %v1048 = vld [vmem:[#allocation4 + $0x70] sm:$0xff]
    %v1049 = vld [vmem:[#allocation4 + $0x78] sm:$0xff]
    %v1050 = vld [vmem:[#allocation4 + $0x80] sm:$0xff]
    %v1051 = vld [vmem:[#allocation4 + $0x88] sm:$0xff]
    %v1052 = vld [vmem:[#allocation4 + $0x90] sm:$0xff]
    %v1053 = vld [vmem:[#allocation4 + $0x98] sm:$0xff]
    %v1054 = vld [vmem:[#allocation4 + $0xa0] sm:$0xff]
    %v1055 = vld [vmem:[#allocation4 + $0xa8] sm:$0xff]
    %v1056 = vld [vmem:[#allocation4 + $0xb0] sm:$0xff]
    %v1057 = vld [vmem:[#allocation4 + $0xb8] sm:$0xff]
    %v1058 = vld [vmem:[#allocation4 + $0xc0] sm:$0xff]
    %v1059 = vld [vmem:[#allocation4 + $0xc8] sm:$0xff]
    %v1060 = vld [vmem:[#allocation4 + $0xd0] sm:$0xff]
    %v1061 = vld [vmem:[#allocation4 + $0xd8] sm:$0xff]
    %v1062 = vld [vmem:[#allocation4 + $0xe0] sm:$0xff]
    %v1063 = vld [vmem:[#allocation4 + $0xe8] sm:$0xff]
    %v1064 = vld [vmem:[#allocation4 + $0xf0] sm:$0xff]
    %v1065 = vld [vmem:[#allocation4 + $0xf8] sm:$0xff]
    %v1066 = vld [vmem:[#allocation4 + $0x100] sm:$0xff]
    %v1067 = vld [vmem:[#allocation4 + $0x108] sm:$0xff]
    %v1068 = vld [vmem:[#allocation4 + $0x110] sm:$0xff]
    %v1069 = vld [vmem:[#allocation4 + $0x118] sm:$0xff]
    %v1070 = vld [vmem:[#allocation4 + $0x120] sm:$0xff]
    %v1071 = vld [vmem:[#allocation4 + $0x128] sm:$0xff]
    %v1072 = vld [vmem:[#allocation4 + $0x130] sm:$0xff]
    %v1073 = vld [vmem:[#allocation4 + $0x138] sm:$0xff]
    %v1074 = vld [vmem:[#allocation4 + $0x140] sm:$0xff]
    %v1075 = vld [vmem:[#allocation4 + $0x148] sm:$0xff]
    %v1076 = vld [vmem:[#allocation4 + $0x150] sm:$0xff]
    %v1077 = vld [vmem:[#allocation4 + $0x158] sm:$0xff]
    %v1078 = vld [vmem:[#allocation4 + $0x160] sm:$0xff]
    %v1079 = vld [vmem:[#allocation4 + $0x168] sm:$0xff]
    %v1080 = vld [vmem:[#allocation4 + $0x170] sm:$0xff]
    %v1081 = vld [vmem:[#allocation4 + $0x178] sm:$0xff]
    %v1082 = vld [vmem:[#allocation4 + $0x180] sm:$0xff]
    %v1083 = vld [vmem:[#allocation4 + $0x188] sm:$0xff]
    %v1084 = vld [vmem:[#allocation4 + $0x190] sm:$0xff]
    %v1085 = vld [vmem:[#allocation4 + $0x198] sm:$0xff]
    %v1086 = vld [vmem:[#allocation4 + $0x1a0] sm:$0xff]
    %v1087 = vld [vmem:[#allocation4 + $0x1a8] sm:$0xff]
    %v1088 = vld [vmem:[#allocation4 + $0x1b0] sm:$0xff]
    %v1089 = vld [vmem:[#allocation4 + $0x1b8] sm:$0xff]
    %v1090 = vld [vmem:[#allocation4 + $0x1c0] sm:$0xff]
    %v1091 = vld [vmem:[#allocation4 + $0x1c8] sm:$0xff]
    %v1092 = vld [vmem:[#allocation4 + $0x1d0] sm:$0xff]
    %v1093 = vld [vmem:[#allocation4 + $0x1d8] sm:$0xff]
    %v1094 = vld [vmem:[#allocation4 + $0x1e0] sm:$0xff]
    %v1095 = vld [vmem:[#allocation4 + $0x1e8] sm:$0xff]
    %v1096 = vld [vmem:[#allocation4 + $0x1f0] sm:$0xff]
    %v1097 = vld [vmem:[#allocation4 + $0x1f8] sm:$0xff]
    %v1098 = vld [vmem:[#allocation4 + $0x200] sm:$0xff]
    %v1099 = vld [vmem:[#allocation4 + $0x208] sm:$0xff]
    %v1100 = vld [vmem:[#allocation4 + $0x210] sm:$0xff]
    %v1101 = vld [vmem:[#allocation4 + $0x218] sm:$0xff]
    %v1102 = vld [vmem:[#allocation4 + $0x220] sm:$0xff]
    %v1103 = vld [vmem:[#allocation4 + $0x228] sm:$0xff]
    %v1104 = vld [vmem:[#allocation4 + $0x230] sm:$0xff]
    %v1105 = vld [vmem:[#allocation4 + $0x238] sm:$0xff]
    %v1106 = vld [vmem:[#allocation4 + $0x240] sm:$0xff]
    %v1107 = vld [vmem:[#allocation4 + $0x248] sm:$0xff]
    %v1108 = vld [vmem:[#allocation4 + $0x250] sm:$0xff]
    %v1109 = vld [vmem:[#allocation4 + $0x258] sm:$0xff]
    %v1110 = vld [vmem:[#allocation4 + $0x260] sm:$0xff]
    %v1111 = vld [vmem:[#allocation4 + $0x268] sm:$0xff]
    %v1112 = vld [vmem:[#allocation4 + $0x270] sm:$0xff]
    %v1113 = vld [vmem:[#allocation4 + $0x278] sm:$0xff]
    %v1114 = vld [vmem:[#allocation4 + $0x280] sm:$0xff]
    %v1115 = vld [vmem:[#allocation4 + $0x288] sm:$0xff]
    %v1116 = vld [vmem:[#allocation4 + $0x290] sm:$0xff]
    %v1117 = vld [vmem:[#allocation4 + $0x298] sm:$0xff]
    %v1118 = vld [vmem:[#allocation4 + $0x2a0] sm:$0xff]
    %v1119 = vld [vmem:[#allocation4 + $0x2a8] sm:$0xff]
    %v1120 = vld [vmem:[#allocation4 + $0x2b0] sm:$0xff]
    %v1121 = vld [vmem:[#allocation4 + $0x2b8] sm:$0xff]
    %v1122 = vld [vmem:[#allocation4 + $0x2c0] sm:$0xff]
    %v1123 = vld [vmem:[#allocation4 + $0x2c8] sm:$0xff]
    %v1124 = vld [vmem:[#allocation4 + $0x2d0] sm:$0xff]
    %v1125 = vld [vmem:[#allocation4 + $0x2d8] sm:$0xff]
    %v1126 = vld [vmem:[#allocation4 + $0x2e0] sm:$0xff]
    %v1127 = vld [vmem:[#allocation4 + $0x2e8] sm:$0xff]
    %v1128 = vld [vmem:[#allocation4 + $0x2f0] sm:$0xff]
    %v1129 = vld [vmem:[#allocation4 + $0x2f8] sm:$0xff]
    %v1130 = vld [vmem:[#allocation4 + $0x300] sm:$0xff]
    %v1131 = vld [vmem:[#allocation4 + $0x308] sm:$0xff]
    %v1132 = vld [vmem:[#allocation4 + $0x310] sm:$0xff]
    %v1133 = vld [vmem:[#allocation4 + $0x318] sm:$0xff]
    %v1134 = vld [vmem:[#allocation4 + $0x320] sm:$0xff]
    %v1135 = vld [vmem:[#allocation4 + $0x328] sm:$0xff]
    %v1136 = vld [vmem:[#allocation4 + $0x330] sm:$0xff]
    %v1137 = vld [vmem:[#allocation4 + $0x338] sm:$0xff]
    %v1138 = vld [vmem:[#allocation4 + $0x340] sm:$0xff]
    %v1139 = vld [vmem:[#allocation4 + $0x348] sm:$0xff]
    %v1140 = vld [vmem:[#allocation4 + $0x350] sm:$0xff]
    %v1141 = vld [vmem:[#allocation4 + $0x358] sm:$0xff]
    %v1142 = vld [vmem:[#allocation4 + $0x360] sm:$0xff]
    %v1143 = vld [vmem:[#allocation4 + $0x368] sm:$0xff]
    %v1144 = vld [vmem:[#allocation4 + $0x370] sm:$0xff]
    %v1145 = vld [vmem:[#allocation4 + $0x378] sm:$0xff]
    %v1146 = vld [vmem:[#allocation4 + $0x380] sm:$0xff]
    %v1147 = vld [vmem:[#allocation4 + $0x388] sm:$0xff]
    %v1148 = vld [vmem:[#allocation4 + $0x390] sm:$0xff]
    %v1149 = vld [vmem:[#allocation4 + $0x398] sm:$0xff]
    %v1150 = vld [vmem:[#allocation4 + $0x3a0] sm:$0xff]
    %v1151 = vld [vmem:[#allocation4 + $0x3a8] sm:$0xff]
    %v1152 = vld [vmem:[#allocation4 + $0x3b0] sm:$0xff]
    %v1153 = vld [vmem:[#allocation4 + $0x3b8] sm:$0xff]
    %v1154 = vld [vmem:[#allocation4 + $0x3c0] sm:$0xff]
    %v1155 = vld [vmem:[#allocation4 + $0x3c8] sm:$0xff]
    %v1156 = vld [vmem:[#allocation4 + $0x3d0] sm:$0xff]
    %v1157 = vld [vmem:[#allocation4 + $0x3d8] sm:$0xff]
    %v1158 = vld [vmem:[#allocation4 + $0x3e0] sm:$0xff]
    %v1159 = vld [vmem:[#allocation4 + $0x3e8] sm:$0xff]
    %v1160 = vld [vmem:[#allocation4 + $0x3f0] sm:$0xff]
    %v1161 = vld [vmem:[#allocation4 + $0x3f8] sm:$0xff]
    %v1162 = vld [vmem:[#allocation4 + $0x400] sm:$0xff]
    %v1163 = vld [vmem:[#allocation4 + $0x408] sm:$0xff]
    %v1164 = vld [vmem:[#allocation4 + $0x410] sm:$0xff]
    %v1165 = vld [vmem:[#allocation4 + $0x418] sm:$0xff]
    %v1166 = vld [vmem:[#allocation4 + $0x420] sm:$0xff]
    %v1167 = vld [vmem:[#allocation4 + $0x428] sm:$0xff]
    %v1168 = vld [vmem:[#allocation4 + $0x430] sm:$0xff]
    %v1169 = vld [vmem:[#allocation4 + $0x438] sm:$0xff]
    %v1170 = vld [vmem:[#allocation4 + $0x440] sm:$0xff]
    %v1171 = vld [vmem:[#allocation4 + $0x448] sm:$0xff]
    %v1172 = vld [vmem:[#allocation4 + $0x450] sm:$0xff]
    %v1173 = vld [vmem:[#allocation4 + $0x458] sm:$0xff]
    %v1174 = vld [vmem:[#allocation4 + $0x460] sm:$0xff]
    %v1175 = vld [vmem:[#allocation4 + $0x468] sm:$0xff]
    %v1176 = vld [vmem:[#allocation4 + $0x470] sm:$0xff]
    %v1177 = vld [vmem:[#allocation4 + $0x478] sm:$0xff]
    %v1178 = vld [vmem:[#allocation4 + $0x480] sm:$0xff]
    %v1179 = vld [vmem:[#allocation4 + $0x488] sm:$0xff]
    %v1180 = vld [vmem:[#allocation4 + $0x490] sm:$0xff]
    %v1181 = vld [vmem:[#allocation4 + $0x498] sm:$0xff]
    %v1182 = vld [vmem:[#allocation4 + $0x4a0] sm:$0xff]
    %v1183 = vld [vmem:[#allocation4 + $0x4a8] sm:$0xff]
    %v1184 = vld [vmem:[#allocation4 + $0x4b0] sm:$0xff]
    %v1185 = vld [vmem:[#allocation4 + $0x4b8] sm:$0xff]
    %v1186 = vld [vmem:[#allocation4 + $0x4c0] sm:$0xff]
    %v1187 = vld [vmem:[#allocation4 + $0x4c8] sm:$0xff]
    %v1188 = vld [vmem:[#allocation4 + $0x4d0] sm:$0xff]
    %v1189 = vld [vmem:[#allocation4 + $0x4d8] sm:$0xff]
    %v1190 = vld [vmem:[#allocation4 + $0x4e0] sm:$0xff]
    %v1191 = vld [vmem:[#allocation4 + $0x4e8] sm:$0xff]
    %v1192 = vld [vmem:[#allocation4 + $0x4f0] sm:$0xff]
    %v1193 = vld [vmem:[#allocation4 + $0x4f8] sm:$0xff]
    %v1194 = vld [vmem:[#allocation4 + $0x500] sm:$0xff]
    %v1195 = vld [vmem:[#allocation4 + $0x508] sm:$0xff]
    %v1196 = vld [vmem:[#allocation4 + $0x510] sm:$0xff]
    %v1197 = vld [vmem:[#allocation4 + $0x518] sm:$0xff]
    %v1198 = vld [vmem:[#allocation4 + $0x520] sm:$0xff]
    %v1199 = vld [vmem:[#allocation4 + $0x528] sm:$0xff]
    %v1200 = vld [vmem:[#allocation4 + $0x530] sm:$0xff]
    %v1201 = vld [vmem:[#allocation4 + $0x538] sm:$0xff]
    %v1202 = vld [vmem:[#allocation4 + $0x540] sm:$0xff]
    %v1203 = vld [vmem:[#allocation4 + $0x548] sm:$0xff]
    %v1204 = vld [vmem:[#allocation4 + $0x550] sm:$0xff]
    %v1205 = vld [vmem:[#allocation4 + $0x558] sm:$0xff]
    %v1206 = vld [vmem:[#allocation4 + $0x560] sm:$0xff]
    %v1207 = vld [vmem:[#allocation4 + $0x568] sm:$0xff]
    %v1208 = vld [vmem:[#allocation4 + $0x570] sm:$0xff]
    %v1209 = vld [vmem:[#allocation4 + $0x578] sm:$0xff]
    %v1210 = vld [vmem:[#allocation4 + $0x580] sm:$0xff]
    %v1211 = vld [vmem:[#allocation4 + $0x588] sm:$0xff]
    %v1212 = vld [vmem:[#allocation4 + $0x590] sm:$0xff]
    %v1213 = vld [vmem:[#allocation4 + $0x598] sm:$0xff]
    %v1214 = vld [vmem:[#allocation4 + $0x5a0] sm:$0xff]
    %v1215 = vld [vmem:[#allocation4 + $0x5a8] sm:$0xff]
    %v1216 = vld [vmem:[#allocation4 + $0x5b0] sm:$0xff]
    %v1217 = vld [vmem:[#allocation4 + $0x5b8] sm:$0xff]
    %v1218 = vld [vmem:[#allocation4 + $0x5c0] sm:$0xff]
    %v1219 = vld [vmem:[#allocation4 + $0x5c8] sm:$0xff]
    %v1220 = vld [vmem:[#allocation4 + $0x5d0] sm:$0xff]
    %v1221 = vld [vmem:[#allocation4 + $0x5d8] sm:$0xff]
    %v1222 = vld [vmem:[#allocation4 + $0x5e0] sm:$0xff]
    %v1223 = vld [vmem:[#allocation4 + $0x5e8] sm:$0xff]
    %v1224 = vld [vmem:[#allocation4 + $0x5f0] sm:$0xff]
    %v1225 = vld [vmem:[#allocation4 + $0x5f8] sm:$0xff]
    %v1226 = vld [vmem:[#allocation4 + $0x600] sm:$0xff]
    %v1227 = vld [vmem:[#allocation4 + $0x608] sm:$0xff]
    %v1228 = vld [vmem:[#allocation4 + $0x610] sm:$0xff]
    %v1229 = vld [vmem:[#allocation4 + $0x618] sm:$0xff]
    %v1230 = vld [vmem:[#allocation4 + $0x620] sm:$0xff]
    %v1231 = vld [vmem:[#allocation4 + $0x628] sm:$0xff]
    %v1232 = vld [vmem:[#allocation4 + $0x630] sm:$0xff]
    %v1233 = vld [vmem:[#allocation4 + $0x638] sm:$0xff]
    %v1234 = vld [vmem:[#allocation4 + $0x640] sm:$0xff]
    %v1235 = vld [vmem:[#allocation4 + $0x648] sm:$0xff]
    %v1236 = vld [vmem:[#allocation4 + $0x650] sm:$0xff]
    %v1237 = vld [vmem:[#allocation4 + $0x658] sm:$0xff]
    %v1238 = vld [vmem:[#allocation4 + $0x660] sm:$0xff]
    %v1239 = vld [vmem:[#allocation4 + $0x668] sm:$0xff]
    %v1240 = vld [vmem:[#allocation4 + $0x670] sm:$0xff]
    %v1241 = vld [vmem:[#allocation4 + $0x678] sm:$0xff]
    %v1242 = vld [vmem:[#allocation4 + $0x680] sm:$0xff]
    %v1243 = vld [vmem:[#allocation4 + $0x688] sm:$0xff]
    %v1244 = vld [vmem:[#allocation4 + $0x690] sm:$0xff]
    %v1245 = vld [vmem:[#allocation4 + $0x698] sm:$0xff]
    %v1246 = vld [vmem:[#allocation4 + $0x6a0] sm:$0xff]
    %v1247 = vld [vmem:[#allocation4 + $0x6a8] sm:$0xff]
    %v1248 = vld [vmem:[#allocation4 + $0x6b0] sm:$0xff]
    %v1249 = vld [vmem:[#allocation4 + $0x6b8] sm:$0xff]
    %v1250 = vld [vmem:[#allocation4 + $0x6c0] sm:$0xff]
    %v1251 = vld [vmem:[#allocation4 + $0x6c8] sm:$0xff]
    %v1252 = vld [vmem:[#allocation4 + $0x6d0] sm:$0xff]
    %v1253 = vld [vmem:[#allocation4 + $0x6d8] sm:$0xff]
    %v1254 = vld [vmem:[#allocation4 + $0x6e0] sm:$0xff]
    %v1255 = vld [vmem:[#allocation4 + $0x6e8] sm:$0xff]
    %v1256 = vld [vmem:[#allocation4 + $0x6f0] sm:$0xff]
    %v1257 = vld [vmem:[#allocation4 + $0x6f8] sm:$0xff]
    %v1258 = vld [vmem:[#allocation4 + $0x700] sm:$0xff]
    %v1259 = vld [vmem:[#allocation4 + $0x708] sm:$0xff]
    %v1260 = vld [vmem:[#allocation4 + $0x710] sm:$0xff]
    %v1261 = vld [vmem:[#allocation4 + $0x718] sm:$0xff]
    %v1262 = vld [vmem:[#allocation4 + $0x720] sm:$0xff]
    %v1263 = vld [vmem:[#allocation4 + $0x728] sm:$0xff]
    %v1264 = vld [vmem:[#allocation4 + $0x730] sm:$0xff]
    %v1265 = vld [vmem:[#allocation4 + $0x738] sm:$0xff]
    %v1266 = vld [vmem:[#allocation4 + $0x740] sm:$0xff]
    %v1267 = vld [vmem:[#allocation4 + $0x748] sm:$0xff]
    %v1268 = vld [vmem:[#allocation4 + $0x750] sm:$0xff]
    %v1269 = vld [vmem:[#allocation4 + $0x758] sm:$0xff]
    %v1270 = vld [vmem:[#allocation4 + $0x760] sm:$0xff]
    %v1271 = vld [vmem:[#allocation4 + $0x768] sm:$0xff]
    %v1272 = vld [vmem:[#allocation4 + $0x770] sm:$0xff]
    %v1273 = vld [vmem:[#allocation4 + $0x778] sm:$0xff]
    %v1274 = vld [vmem:[#allocation4 + $0x780] sm:$0xff]
    %v1275 = vld [vmem:[#allocation4 + $0x788] sm:$0xff]
    %v1276 = vld [vmem:[#allocation4 + $0x790] sm:$0xff]
    %v1277 = vld [vmem:[#allocation4 + $0x798] sm:$0xff]
    %v1278 = vld [vmem:[#allocation4 + $0x7a0] sm:$0xff]
    %v1279 = vld [vmem:[#allocation4 + $0x7a8] sm:$0xff]
    %v1280 = vld [vmem:[#allocation4 + $0x7b0] sm:$0xff]
    %v1281 = vld [vmem:[#allocation4 + $0x7b8] sm:$0xff]
    %v1282 = vld [vmem:[#allocation4 + $0x7c0] sm:$0xff]
    %v1283 = vld [vmem:[#allocation4 + $0x7c8] sm:$0xff]
    %v1284 = vld [vmem:[#allocation4 + $0x7d0] sm:$0xff]
    %v1285 = vld [vmem:[#allocation4 + $0x7d8] sm:$0xff]
    %v1286 = vld [vmem:[#allocation4 + $0x7e0] sm:$0xff]
    %v1287 = vld [vmem:[#allocation4 + $0x7e8] sm:$0xff]
    %v1288 = vld [vmem:[#allocation4 + $0x7f0] sm:$0xff]
    %v1289 = vld [vmem:[#allocation4 + $0x7f8] sm:$0xff]
    %v1290 = vld [vmem:[#allocation4 + $0x800] sm:$0xff]
    %v1291 = vld [vmem:[#allocation4 + $0x808] sm:$0xff]
    %v1292 = vld [vmem:[#allocation4 + $0x810] sm:$0xff]
    %v1293 = vld [vmem:[#allocation4 + $0x818] sm:$0xff]
    %v1294 = vld [vmem:[#allocation4 + $0x820] sm:$0xff]
    %v1295 = vld [vmem:[#allocation4 + $0x828] sm:$0xff]
    %v1296 = vld [vmem:[#allocation4 + $0x830] sm:$0xff]
    %v1297 = vld [vmem:[#allocation4 + $0x838] sm:$0xff]
    %v1298 = vld [vmem:[#allocation4 + $0x840] sm:$0xff]
    %v1299 = vld [vmem:[#allocation4 + $0x848] sm:$0xff]
    %v1300 = vld [vmem:[#allocation4 + $0x850] sm:$0xff]
    %v1301 = vld [vmem:[#allocation4 + $0x858] sm:$0xff]
    %v1302 = vld [vmem:[#allocation4 + $0x860] sm:$0xff]
    %v1303 = vld [vmem:[#allocation4 + $0x868] sm:$0xff]
    %v1304 = vld [vmem:[#allocation4 + $0x870] sm:$0xff]
    %v1305 = vld [vmem:[#allocation4 + $0x878] sm:$0xff]
    %v1306 = vld [vmem:[#allocation4 + $0x880] sm:$0xff]
    %v1307 = vld [vmem:[#allocation4 + $0x888] sm:$0xff]
    %v1308 = vld [vmem:[#allocation4 + $0x890] sm:$0xff]
    %v1309 = vld [vmem:[#allocation4 + $0x898] sm:$0xff]
    %v1310 = vld [vmem:[#allocation4 + $0x8a0] sm:$0xff]
    %v1311 = vld [vmem:[#allocation4 + $0x8a8] sm:$0xff]
    %v1312 = vld [vmem:[#allocation4 + $0x8b0] sm:$0xff]
    %v1313 = vld [vmem:[#allocation4 + $0x8b8] sm:$0xff]
    %v1314 = vld [vmem:[#allocation4 + $0x8c0] sm:$0xff]
    %v1315 = vld [vmem:[#allocation4 + $0x8c8] sm:$0xff]
    %v1316 = vld [vmem:[#allocation4 + $0x8d0] sm:$0xff]
    %v1317 = vld [vmem:[#allocation4 + $0x8d8] sm:$0xff]
    %v1318 = vld [vmem:[#allocation4 + $0x8e0] sm:$0xff]
    %v1319 = vld [vmem:[#allocation4 + $0x8e8] sm:$0xff]
    %v1320 = vld [vmem:[#allocation4 + $0x8f0] sm:$0xff]
    %v1321 = vld [vmem:[#allocation4 + $0x8f8] sm:$0xff]
    %v1322 = vld [vmem:[#allocation4 + $0x900] sm:$0xff]
    %v1323 = vld [vmem:[#allocation4 + $0x908] sm:$0xff]
    %v1324 = vld [vmem:[#allocation4 + $0x910] sm:$0xff]
    %v1325 = vld [vmem:[#allocation4 + $0x918] sm:$0xff]
    %v1326 = vld [vmem:[#allocation4 + $0x920] sm:$0xff]
    %v1327 = vld [vmem:[#allocation4 + $0x928] sm:$0xff]
    %v1328 = vld [vmem:[#allocation4 + $0x930] sm:$0xff]
    %v1329 = vld [vmem:[#allocation4 + $0x938] sm:$0xff]
    %v1330 = vld [vmem:[#allocation4 + $0x940] sm:$0xff]
    %v1331 = vld [vmem:[#allocation4 + $0x948] sm:$0xff]
    %v1332 = vld [vmem:[#allocation4 + $0x950] sm:$0xff]
    %v1333 = vld [vmem:[#allocation4 + $0x958] sm:$0xff]
    %v1334 = vld [vmem:[#allocation4 + $0x960] sm:$0xff]
    %v1335 = vld [vmem:[#allocation4 + $0x968] sm:$0xff]
    %v1336 = vld [vmem:[#allocation4 + $0x970] sm:$0xff]
    %v1337 = vld [vmem:[#allocation4 + $0x978] sm:$0xff]
    %v1338 = vld [vmem:[#allocation4 + $0x980] sm:$0xff]
    %v1339 = vld [vmem:[#allocation4 + $0x988] sm:$0xff]
    %v1340 = vld [vmem:[#allocation4 + $0x990] sm:$0xff]
    %v1341 = vld [vmem:[#allocation4 + $0x998] sm:$0xff]
    %v1342 = vld [vmem:[#allocation4 + $0x9a0] sm:$0xff]
    %v1343 = vld [vmem:[#allocation4 + $0x9a8] sm:$0xff]
    %v1344 = vld [vmem:[#allocation4 + $0x9b0] sm:$0xff]
    %v1345 = vld [vmem:[#allocation4 + $0x9b8] sm:$0xff]
    %v1346 = vld [vmem:[#allocation4 + $0x9c0] sm:$0xff]
    %v1347 = vld [vmem:[#allocation4 + $0x9c8] sm:$0xff]
    %v1348 = vld [vmem:[#allocation4 + $0x9d0] sm:$0xff]
    %v1349 = vld [vmem:[#allocation4 + $0x9d8] sm:$0xff]
    %v1350 = vld [vmem:[#allocation4 + $0x9e0] sm:$0xff]
    %v1351 = vld [vmem:[#allocation4 + $0x9e8] sm:$0xff]
    %v1352 = vld [vmem:[#allocation4 + $0x9f0] sm:$0xff]
    %v1353 = vld [vmem:[#allocation4 + $0x9f8] sm:$0xff]
    %v1354 = vld [vmem:[#allocation4 + $0xa00] sm:$0xff]
    %v1355 = vld [vmem:[#allocation4 + $0xa08] sm:$0xff]
    %v1356 = vld [vmem:[#allocation4 + $0xa10] sm:$0xff]
    %v1357 = vld [vmem:[#allocation4 + $0xa18] sm:$0xff]
    %v1358 = vld [vmem:[#allocation4 + $0xa20] sm:$0xff]
    %v1359 = vld [vmem:[#allocation4 + $0xa28] sm:$0xff]
    %v1360 = vld [vmem:[#allocation4 + $0xa30] sm:$0xff]
    %v1361 = vld [vmem:[#allocation4 + $0xa38] sm:$0xff]
    %v1362 = vld [vmem:[#allocation4 + $0xa40] sm:$0xff]
    %v1363 = vld [vmem:[#allocation4 + $0xa48] sm:$0xff]
    %v1364 = vld [vmem:[#allocation4 + $0xa50] sm:$0xff]
    %v1365 = vld [vmem:[#allocation4 + $0xa58] sm:$0xff]
    %v1366 = vld [vmem:[#allocation4 + $0xa60] sm:$0xff]
    %v1367 = vld [vmem:[#allocation4 + $0xa68] sm:$0xff]
    %v1368 = vld [vmem:[#allocation4 + $0xa70] sm:$0xff]
    %v1369 = vld [vmem:[#allocation4 + $0xa78] sm:$0xff]
    %v1370 = vld [vmem:[#allocation4 + $0xa80] sm:$0xff]
    %v1371 = vld [vmem:[#allocation4 + $0xa88] sm:$0xff]
    %v1372 = vld [vmem:[#allocation4 + $0xa90] sm:$0xff]
    %v1373 = vld [vmem:[#allocation4 + $0xa98] sm:$0xff]
    %v1374 = vld [vmem:[#allocation4 + $0xaa0] sm:$0xff]
    %v1375 = vld [vmem:[#allocation4 + $0xaa8] sm:$0xff]
    %v1376 = vld [vmem:[#allocation4 + $0xab0] sm:$0xff]
    %v1377 = vld [vmem:[#allocation4 + $0xab8] sm:$0xff]
    %v1378 = vld [vmem:[#allocation4 + $0xac0] sm:$0xff]
    %v1379 = vld [vmem:[#allocation4 + $0xac8] sm:$0xff]
    %v1380 = vld [vmem:[#allocation4 + $0xad0] sm:$0xff]
    %v1381 = vld [vmem:[#allocation4 + $0xad8] sm:$0xff]
    %v1382 = vld [vmem:[#allocation4 + $0xae0] sm:$0xff]
    %v1383 = vld [vmem:[#allocation4 + $0xae8] sm:$0xff]
    %v1384 = vld [vmem:[#allocation4 + $0xaf0] sm:$0xff]
    %v1385 = vld [vmem:[#allocation4 + $0xaf8] sm:$0xff]
    %v1386 = vld [vmem:[#allocation4 + $0xb00] sm:$0xff]
    %v1387 = vld [vmem:[#allocation4 + $0xb08] sm:$0xff]
    %v1388 = vld [vmem:[#allocation4 + $0xb10] sm:$0xff]
    %v1389 = vld [vmem:[#allocation4 + $0xb18] sm:$0xff]
    %v1390 = vld [vmem:[#allocation4 + $0xb20] sm:$0xff]
    %v1391 = vld [vmem:[#allocation4 + $0xb28] sm:$0xff]
    %v1392 = vld [vmem:[#allocation4 + $0xb30] sm:$0xff]
    %v1393 = vld [vmem:[#allocation4 + $0xb38] sm:$0xff]
    %v1394 = vld [vmem:[#allocation4 + $0xb40] sm:$0xff]
    %v1395 = vld [vmem:[#allocation4 + $0xb48] sm:$0xff]
    %v1396 = vld [vmem:[#allocation4 + $0xb50] sm:$0xff]
    %v1397 = vld [vmem:[#allocation4 + $0xb58] sm:$0xff]
    %v1398 = vld [vmem:[#allocation4 + $0xb60] sm:$0xff]
    %v1399 = vld [vmem:[#allocation4 + $0xb68] sm:$0xff]
    %v1400 = vld [vmem:[#allocation4 + $0xb70] sm:$0xff]
    %v1401 = vld [vmem:[#allocation4 + $0xb78] sm:$0xff]
    %v1402 = vld [vmem:[#allocation4 + $0xb80] sm:$0xff]
    %v1403 = vld [vmem:[#allocation4 + $0xb88] sm:$0xff]
    %v1404 = vld [vmem:[#allocation4 + $0xb90] sm:$0xff]
    %v1405 = vld [vmem:[#allocation4 + $0xb98] sm:$0xff]
    %v1406 = vld [vmem:[#allocation4 + $0xba0] sm:$0xff]
    %v1407 = vld [vmem:[#allocation4 + $0xba8] sm:$0xff]
    %v1408 = vld [vmem:[#allocation4 + $0xbb0] sm:$0xff]
    %v1409 = vld [vmem:[#allocation4 + $0xbb8] sm:$0xff]
    %v1410 = vld [vmem:[#allocation4 + $0xbc0] sm:$0xff]
    %v1411 = vld [vmem:[#allocation4 + $0xbc8] sm:$0xff]
    %v1412 = vld [vmem:[#allocation4 + $0xbd0] sm:$0xff]
    %v1413 = vld [vmem:[#allocation4 + $0xbd8] sm:$0xff]
    %v1414 = vld [vmem:[#allocation4 + $0xbe0] sm:$0xff]
    %v1415 = vld [vmem:[#allocation4 + $0xbe8] sm:$0xff]
    %v1416 = vld [vmem:[#allocation4 + $0xbf0] sm:$0xff]
    %v1417 = vld [vmem:[#allocation4 + $0xbf8] sm:$0xff]
    %v1418 = vld [vmem:[#allocation4 + $0xc00] sm:$0xff]
    %v1419 = vld [vmem:[#allocation4 + $0xc08] sm:$0xff]
    %v1420 = vld [vmem:[#allocation4 + $0xc10] sm:$0xff]
    %v1421 = vld [vmem:[#allocation4 + $0xc18] sm:$0xff]
    %v1422 = vld [vmem:[#allocation4 + $0xc20] sm:$0xff]
    %v1423 = vld [vmem:[#allocation4 + $0xc28] sm:$0xff]
    %v1424 = vld [vmem:[#allocation4 + $0xc30] sm:$0xff]
    %v1425 = vld [vmem:[#allocation4 + $0xc38] sm:$0xff]
    %v1426 = vld [vmem:[#allocation4 + $0xc40] sm:$0xff]
    %v1427 = vld [vmem:[#allocation4 + $0xc48] sm:$0xff]
    %v1428 = vld [vmem:[#allocation4 + $0xc50] sm:$0xff]
    %v1429 = vld [vmem:[#allocation4 + $0xc58] sm:$0xff]
    %v1430 = vld [vmem:[#allocation4 + $0xc60] sm:$0xff]
    %v1431 = vld [vmem:[#allocation4 + $0xc68] sm:$0xff]
    %v1432 = vld [vmem:[#allocation4 + $0xc70] sm:$0xff]
    %v1433 = vld [vmem:[#allocation4 + $0xc78] sm:$0xff]
    %v1434 = vld [vmem:[#allocation4 + $0xc80] sm:$0xff]
    %v1435 = vld [vmem:[#allocation4 + $0xc88] sm:$0xff]
    %v1436 = vld [vmem:[#allocation4 + $0xc90] sm:$0xff]
    %v1437 = vld [vmem:[#allocation4 + $0xc98] sm:$0xff]
    %v1438 = vld [vmem:[#allocation4 + $0xca0] sm:$0xff]
    %v1439 = vld [vmem:[#allocation4 + $0xca8] sm:$0xff]
    %v1440 = vld [vmem:[#allocation4 + $0xcb0] sm:$0xff]
    %v1441 = vld [vmem:[#allocation4 + $0xcb8] sm:$0xff]
    %v1442 = vld [vmem:[#allocation4 + $0xcc0] sm:$0xff]
    %v1443 = vld [vmem:[#allocation4 + $0xcc8] sm:$0xff]
    %v1444 = vld [vmem:[#allocation4 + $0xcd0] sm:$0xff]
    %v1445 = vld [vmem:[#allocation4 + $0xcd8] sm:$0xff]
    %v1446 = vld [vmem:[#allocation4 + $0xce0] sm:$0xff]
    %v1447 = vld [vmem:[#allocation4 + $0xce8] sm:$0xff]
    %v1448 = vld [vmem:[#allocation4 + $0xcf0] sm:$0xff]
    %v1449 = vld [vmem:[#allocation4 + $0xcf8] sm:$0xff]
    %v1450 = vld [vmem:[#allocation4 + $0xd00] sm:$0xff]
    %v1451 = vld [vmem:[#allocation4 + $0xd08] sm:$0xff]
    %v1452 = vld [vmem:[#allocation4 + $0xd10] sm:$0xff]
    %v1453 = vld [vmem:[#allocation4 + $0xd18] sm:$0xff]
    %v1454 = vld [vmem:[#allocation4 + $0xd20] sm:$0xff]
    %v1455 = vld [vmem:[#allocation4 + $0xd28] sm:$0xff]
    %v1456 = vld [vmem:[#allocation4 + $0xd30] sm:$0xff]
    %v1457 = vld [vmem:[#allocation4 + $0xd38] sm:$0xff]
    %v1458 = vld [vmem:[#allocation4 + $0xd40] sm:$0xff]
    %v1459 = vld [vmem:[#allocation4 + $0xd48] sm:$0xff]
    %v1460 = vld [vmem:[#allocation4 + $0xd50] sm:$0xff]
    %v1461 = vld [vmem:[#allocation4 + $0xd58] sm:$0xff]
    %v1462 = vld [vmem:[#allocation4 + $0xd60] sm:$0xff]
    %v1463 = vld [vmem:[#allocation4 + $0xd68] sm:$0xff]
    %v1464 = vld [vmem:[#allocation4 + $0xd70] sm:$0xff]
    %v1465 = vld [vmem:[#allocation4 + $0xd78] sm:$0xff]
    %v1466 = vld [vmem:[#allocation4 + $0xd80] sm:$0xff]
    %v1467 = vld [vmem:[#allocation4 + $0xd88] sm:$0xff]
    %v1468 = vld [vmem:[#allocation4 + $0xd90] sm:$0xff]
    %v1469 = vld [vmem:[#allocation4 + $0xd98] sm:$0xff]
    %v1470 = vld [vmem:[#allocation4 + $0xda0] sm:$0xff]
    %v1471 = vld [vmem:[#allocation4 + $0xda8] sm:$0xff]
    %v1472 = vld [vmem:[#allocation4 + $0xdb0] sm:$0xff]
    %v1473 = vld [vmem:[#allocation4 + $0xdb8] sm:$0xff]
    %v1474 = vld [vmem:[#allocation4 + $0xdc0] sm:$0xff]
    %v1475 = vld [vmem:[#allocation4 + $0xdc8] sm:$0xff]
    %v1476 = vld [vmem:[#allocation4 + $0xdd0] sm:$0xff]
    %v1477 = vld [vmem:[#allocation4 + $0xdd8] sm:$0xff]
    %v1478 = vld [vmem:[#allocation4 + $0xde0] sm:$0xff]
    %v1479 = vld [vmem:[#allocation4 + $0xde8] sm:$0xff]
    %v1480 = vld [vmem:[#allocation4 + $0xdf0] sm:$0xff]
    %v1481 = vld [vmem:[#allocation4 + $0xdf8] sm:$0xff]
    %v1482 = vld [vmem:[#allocation4 + $0xe00] sm:$0xff]
    %v1483 = vld [vmem:[#allocation4 + $0xe08] sm:$0xff]
    %v1484 = vld [vmem:[#allocation4 + $0xe10] sm:$0xff]
    %v1485 = vld [vmem:[#allocation4 + $0xe18] sm:$0xff]
    %v1486 = vld [vmem:[#allocation4 + $0xe20] sm:$0xff]
    %v1487 = vld [vmem:[#allocation4 + $0xe28] sm:$0xff]
    %v1488 = vld [vmem:[#allocation4 + $0xe30] sm:$0xff]
    %v1489 = vld [vmem:[#allocation4 + $0xe38] sm:$0xff]
    %v1490 = vld [vmem:[#allocation4 + $0xe40] sm:$0xff]
    %v1491 = vld [vmem:[#allocation4 + $0xe48] sm:$0xff]
    %v1492 = vld [vmem:[#allocation4 + $0xe50] sm:$0xff]
    %v1493 = vld [vmem:[#allocation4 + $0xe58] sm:$0xff]
    %v1494 = vld [vmem:[#allocation4 + $0xe60] sm:$0xff]
    %v1495 = vld [vmem:[#allocation4 + $0xe68] sm:$0xff]
    %v1496 = vld [vmem:[#allocation4 + $0xe70] sm:$0xff]
    %v1497 = vld [vmem:[#allocation4 + $0xe78] sm:$0xff]
    %v1498 = vld [vmem:[#allocation4 + $0xe80] sm:$0xff]
    %v1499 = vld [vmem:[#allocation4 + $0xe88] sm:$0xff]
    %v1500 = vld [vmem:[#allocation4 + $0xe90] sm:$0xff]
    %v1501 = vld [vmem:[#allocation4 + $0xe98] sm:$0xff]
    %v1502 = vld [vmem:[#allocation4 + $0xea0] sm:$0xff]
    %v1503 = vld [vmem:[#allocation4 + $0xea8] sm:$0xff]
    %v1504 = vld [vmem:[#allocation4 + $0xeb0] sm:$0xff]
    %v1505 = vld [vmem:[#allocation4 + $0xeb8] sm:$0xff]
    %v1506 = vld [vmem:[#allocation4 + $0xec0] sm:$0xff]
    %v1507 = vld [vmem:[#allocation4 + $0xec8] sm:$0xff]
    %v1508 = vld [vmem:[#allocation4 + $0xed0] sm:$0xff]
    %v1509 = vld [vmem:[#allocation4 + $0xed8] sm:$0xff]
    %v1510 = vld [vmem:[#allocation4 + $0xee0] sm:$0xff]
    %v1511 = vld [vmem:[#allocation4 + $0xee8] sm:$0xff]
    %v1512 = vld [vmem:[#allocation4 + $0xef0] sm:$0xff]
    %v1513 = vld [vmem:[#allocation4 + $0xef8] sm:$0xff]
    %v1514 = vld [vmem:[#allocation4 + $0xf00] sm:$0xff]
    %v1515 = vld [vmem:[#allocation4 + $0xf08] sm:$0xff]
    %v1516 = vld [vmem:[#allocation4 + $0xf10] sm:$0xff]
    %v1517 = vld [vmem:[#allocation4 + $0xf18] sm:$0xff]
    %v1518 = vld [vmem:[#allocation4 + $0xf20] sm:$0xff]
    %v1519 = vld [vmem:[#allocation4 + $0xf28] sm:$0xff]
    %v1520 = vld [vmem:[#allocation4 + $0xf30] sm:$0xff]
    %v1521 = vld [vmem:[#allocation4 + $0xf38] sm:$0xff]
    %v1522 = vld [vmem:[#allocation4 + $0xf40] sm:$0xff]
    %v1523 = vld [vmem:[#allocation4 + $0xf48] sm:$0xff]
    %v1524 = vld [vmem:[#allocation4 + $0xf50] sm:$0xff]
    %v1525 = vld [vmem:[#allocation4 + $0xf58] sm:$0xff]
    %v1526 = vld [vmem:[#allocation4 + $0xf60] sm:$0xff]
    %v1527 = vld [vmem:[#allocation4 + $0xf68] sm:$0xff]
    %v1528 = vld [vmem:[#allocation4 + $0xf70] sm:$0xff]
    %v1529 = vld [vmem:[#allocation4 + $0xf78] sm:$0xff]
    %v1530 = vld [vmem:[#allocation4 + $0xf80] sm:$0xff]
    %v1531 = vld [vmem:[#allocation4 + $0xf88] sm:$0xff]
    %v1532 = vld [vmem:[#allocation4 + $0xf90] sm:$0xff]
    %v1533 = vld [vmem:[#allocation4 + $0xf98] sm:$0xff]
    %v1534 = vld [vmem:[#allocation4 + $0xfa0] sm:$0xff]
    %v1535 = vld [vmem:[#allocation4 + $0xfa8] sm:$0xff]
    %v1536 = vld [vmem:[#allocation4 + $0xfb0] sm:$0xff]
    %v1537 = vld [vmem:[#allocation4 + $0xfb8] sm:$0xff]
    %v1538 = vld [vmem:[#allocation4 + $0xfc0] sm:$0xff]
    %v1539 = vld [vmem:[#allocation4 + $0xfc8] sm:$0xff]
    %v1540 = vld [vmem:[#allocation4 + $0xfd0] sm:$0xff]
    %v1541 = vld [vmem:[#allocation4 + $0xfd8] sm:$0xff]
    %v1542 = vld [vmem:[#allocation4 + $0xfe0] sm:$0xff]
    %v1543 = vld [vmem:[#allocation4 + $0xfe8] sm:$0xff]
    %v1544 = vld [vmem:[#allocation4 + $0xff0] sm:$0xff]
    %v1545 = vld [vmem:[#allocation4 + $0xff8] sm:$0xff]
    %s1546 = scalar_lea.vmem [#allocation14], 2
    %v1547 = vld [vmem:[%s1546] ss:$8 sm:$0xf]
    %v1548 = vld [vmem:[%s1546] ss:$8 sm:$0xf0]
    %v1549 = vor.u32 %v1547, %v1548
    %s1550 = scalar_lea.vmem [#allocation14], 66
    %v1551 = vld [vmem:[%s1550] ss:$8 sm:$0xf]
    %v1552 = vld [vmem:[%s1550] ss:$8 sm:$0xf0]
    %v1553 = vor.u32 %v1551, %v1552
    %v1556 = vlaneseq
    %v1557 = vshrl.u32 %v1556, 7
    %v1558 = vsub.s32 0, %v1557
    %v1559 = vrot.slane %v1549, %v1558
    %v1560 = vlaneseq
    %v1561 = vshrl.u32 %v1560, 7
    %v1562 = vsub.s32 1, %v1561
    %v1563 = vrot.slane %v1549, %v1562
    %v1564 = vlaneseq
    %v1565 = vshrl.u32 %v1564, 7
    %v1566 = vsub.s32 2, %v1565
    %v1567 = vrot.slane %v1549, %v1566
    %v1568 = vlaneseq
    %v1569 = vshrl.u32 %v1568, 7
    %v1570 = vsub.s32 3, %v1569
    %v1571 = vrot.slane %v1549, %v1570
    %v1572 = vlaneseq
    %v1573 = vshrl.u32 %v1572, 7
    %v1574 = vsub.s32 4, %v1573
    %v1575 = vrot.slane %v1549, %v1574
    %v1576 = vlaneseq
    %v1577 = vshrl.u32 %v1576, 7
    %v1578 = vsub.s32 5, %v1577
    %v1579 = vrot.slane %v1549, %v1578
    %v1580 = vlaneseq
    %v1581 = vshrl.u32 %v1580, 7
    %v1582 = vsub.s32 6, %v1581
    %v1583 = vrot.slane %v1549, %v1582
    %v1584 = vlaneseq
    %v1585 = vshrl.u32 %v1584, 7
    %v1586 = vsub.s32 7, %v1585
    %v1587 = vrot.slane %v1549, %v1586
    %v1588 = vlaneseq
    %v1589 = vshrl.u32 %v1588, 7
    %v1590 = vsub.s32 0, %v1589
    %v1591 = vrot.slane %v1553, %v1590
    %v1592 = vlaneseq
    %v1593 = vshrl.u32 %v1592, 7
    %v1594 = vsub.s32 1, %v1593
    %v1595 = vrot.slane %v1553, %v1594
    %v1596 = vlaneseq
    %v1597 = vshrl.u32 %v1596, 7
    %v1598 = vsub.s32 2, %v1597
    %v1599 = vrot.slane %v1553, %v1598
    %v1600 = vlaneseq
    %v1601 = vshrl.u32 %v1600, 7
    %v1602 = vsub.s32 3, %v1601
    %v1603 = vrot.slane %v1553, %v1602
    %v1604 = vlaneseq
    %v1605 = vshrl.u32 %v1604, 7
    %v1606 = vsub.s32 4, %v1605
    %v1607 = vrot.slane %v1553, %v1606
    %v1608 = vlaneseq
    %v1609 = vshrl.u32 %v1608, 7
    %v1610 = vsub.s32 5, %v1609
    %v1611 = vrot.slane %v1553, %v1610
    %v1612 = vlaneseq
    %v1613 = vshrl.u32 %v1612, 7
    %v1614 = vsub.s32 6, %v1613
    %v1615 = vrot.slane %v1553, %v1614
    %v1616 = vlaneseq
    %v1617 = vshrl.u32 %v1616, 7
    %v1618 = vsub.s32 7, %v1617
    %v1619 = vrot.slane %v1553, %v1618
    %1636 = vmatprep.subr.bf16.mxu0 %v1035
    %1637 = vmatpush1.bf16.msra.mxu0 %v1034
    %1638 = vmatprep.subr.bf16.mxu0 %v1051
    %1639 = vmatpush1.bf16.msra.mxu0 %v1050
    %1640 = vmatprep.subr.bf16.mxu0 %v1067
    %1641 = vmatpush1.bf16.msra.mxu0 %v1066
    %1642 = vmatprep.subr.bf16.mxu0 %v1083
    %1643 = vmatpush1.bf16.msra.mxu0 %v1082
    %1644 = vmatprep.subr.bf16.mxu0 %v1099
    %1645 = vmatpush1.bf16.msra.mxu0 %v1098
    %1646 = vmatprep.subr.bf16.mxu0 %v1115
    %1647 = vmatpush1.bf16.msra.mxu0 %v1114
    %1648 = vmatprep.subr.bf16.mxu0 %v1131
    %1649 = vmatpush1.bf16.msra.mxu0 %v1130
    %1650 = vmatprep.subr.bf16.mxu0 %v1147
    %1651 = vmatpush1.bf16.msra.mxu0 %v1146
    %1652 = vmatprep.subr.bf16.mxu0 %v1163
    %1653 = vmatpush1.bf16.msra.mxu0 %v1162
    %1654 = vmatprep.subr.bf16.mxu0 %v1179
    %1655 = vmatpush1.bf16.msra.mxu0 %v1178
    %1656 = vmatprep.subr.bf16.mxu0 %v1195
    %1657 = vmatpush1.bf16.msra.mxu0 %v1194
    %1658 = vmatprep.subr.bf16.mxu0 %v1211
    %1659 = vmatpush1.bf16.msra.mxu0 %v1210
    %1660 = vmatprep.subr.bf16.mxu0 %v1227
    %1661 = vmatpush1.bf16.msra.mxu0 %v1226
    %1662 = vmatprep.subr.bf16.mxu0 %v1243
    %1663 = vmatpush1.bf16.msra.mxu0 %v1242
    %1664 = vmatprep.subr.bf16.mxu0 %v1259
    %1665 = vmatpush1.bf16.msra.mxu0 %v1258
    %1666 = vmatprep.subr.bf16.mxu0 %v1275
    %1667 = vmatpush1.bf16.msra.mxu0 %v1274
    %1668 = vmatprep.mubr.bf16.mxu0 %v1028
    %1669 = vmatmul.mubr.bf16.gmra.mrb[0].mxu0 %v1027
    %v1670 = vpop.f32.mrb[0].mxu0
    %v1671 = vadd.f32 %v1559, %v1670
    %v1672 = vpop.f32.mrb[0].mxu0
    %v1673 = vadd.f32 %v1563, %v1672
    %v1674 = vpop.f32.mrb[0].mxu0
    %v1675 = vpop.f32.mrb[0].mxu0
    %1676 = vdwg.mxu0
    %1677 = vmatprep.subr.bf16.mxu0 %v1291
    %1678 = vmatpush1.bf16.msra.mxu0 %v1290
    %1679 = vmatprep.subr.bf16.mxu0 %v1307
    %1680 = vmatpush1.bf16.msra.mxu0 %v1306
    %1681 = vmatprep.subr.bf16.mxu0 %v1323
    %1682 = vmatpush1.bf16.msra.mxu0 %v1322
    %1683 = vmatprep.subr.bf16.mxu0 %v1339
    %1684 = vmatpush1.bf16.msra.mxu0 %v1338
    %1685 = vmatprep.subr.bf16.mxu0 %v1355
    %1686 = vmatpush1.bf16.msra.mxu0 %v1354
    %1687 = vmatprep.subr.bf16.mxu0 %v1371
    %1688 = vmatpush1.bf16.msra.mxu0 %v1370
    %1689 = vmatprep.subr.bf16.mxu0 %v1387
    %1690 = vmatpush1.bf16.msra.mxu0 %v1386
    %1691 = vmatprep.subr.bf16.mxu0 %v1403
    %1692 = vmatpush1.bf16.msra.mxu0 %v1402
    %1693 = vmatprep.subr.bf16.mxu0 %v1419
    %1694 = vmatpush1.bf16.msra.mxu0 %v1418
    %1695 = vmatprep.subr.bf16.mxu0 %v1435
    %1696 = vmatpush1.bf16.msra.mxu0 %v1434
    %1697 = vmatprep.subr.bf16.mxu0 %v1451
    %1698 = vmatpush1.bf16.msra.mxu0 %v1450
    %1699 = vmatprep.subr.bf16.mxu0 %v1467
    %1700 = vmatpush1.bf16.msra.mxu0 %v1466
    %1701 = vmatprep.subr.bf16.mxu0 %v1483
    %1702 = vmatpush1.bf16.msra.mxu0 %v1482
    %1703 = vmatprep.subr.bf16.mxu0 %v1499
    %1704 = vmatpush1.bf16.msra.mxu0 %v1498
    %1705 = vmatprep.subr.bf16.mxu0 %v1515
    %1706 = vmatpush1.bf16.msra.mxu0 %v1514
    %1707 = vmatprep.subr.bf16.mxu0 %v1531
    %1708 = vmatpush1.bf16.msra.mxu0 %v1530
    %1709 = vmatprep.mubr.bf16.mxu0 %v1030
    %1710 = vmatmul.mubr.bf16.gmra.mrb[0].mxu0 %v1029
    %v1711 = vpop.f32.mrb[0].mxu0
    %v1712 = vadd.f32 %v1671, %v1711
    %v1713 = vpop.f32.mrb[0].mxu0
    %v1714 = vadd.f32 %v1673, %v1713
    %v1715 = vpop.f32.mrb[0].mxu0
    %v1716 = vpop.f32.mrb[0].mxu0
    %1717 = vdwg.mxu0
    %1718 = vmatprep.subr.bf16.mxu0 %v1037
    %1719 = vmatpush1.bf16.msra.mxu0 %v1036
    %1720 = vmatprep.subr.bf16.mxu0 %v1053
    %1721 = vmatpush1.bf16.msra.mxu0 %v1052
    %1722 = vmatprep.subr.bf16.mxu0 %v1069
    %1723 = vmatpush1.bf16.msra.mxu0 %v1068
    %1724 = vmatprep.subr.bf16.mxu0 %v1085
    %1725 = vmatpush1.bf16.msra.mxu0 %v1084
    %1726 = vmatprep.subr.bf16.mxu0 %v1101
    %1727 = vmatpush1.bf16.msra.mxu0 %v1100
    %1728 = vmatprep.subr.bf16.mxu0 %v1117
    %1729 = vmatpush1.bf16.msra.mxu0 %v1116
    %1730 = vmatprep.subr.bf16.mxu0 %v1133
    %1731 = vmatpush1.bf16.msra.mxu0 %v1132
    %1732 = vmatprep.subr.bf16.mxu0 %v1149
    %1733 = vmatpush1.bf16.msra.mxu0 %v1148
    %1734 = vmatprep.subr.bf16.mxu0 %v1165
    %1735 = vmatpush1.bf16.msra.mxu0 %v1164
    %1736 = vmatprep.subr.bf16.mxu0 %v1181
    %1737 = vmatpush1.bf16.msra.mxu0 %v1180
    %1738 = vmatprep.subr.bf16.mxu0 %v1197
    %1739 = vmatpush1.bf16.msra.mxu0 %v1196
    %1740 = vmatprep.subr.bf16.mxu0 %v1213
    %1741 = vmatpush1.bf16.msra.mxu0 %v1212
    %1742 = vmatprep.subr.bf16.mxu0 %v1229
    %1743 = vmatpush1.bf16.msra.mxu0 %v1228
    %1744 = vmatprep.subr.bf16.mxu0 %v1245
    %1745 = vmatpush1.bf16.msra.mxu0 %v1244
    %1746 = vmatprep.subr.bf16.mxu0 %v1261
    %1747 = vmatpush1.bf16.msra.mxu0 %v1260
    %1748 = vmatprep.subr.bf16.mxu0 %v1277
    %1749 = vmatpush1.bf16.msra.mxu0 %v1276
    %1750 = vmatprep.mubr.bf16.mxu0 %v1028
    %1751 = vmatmul.mubr.bf16.gmra.mrb[0].mxu0 %v1027
    %v1752 = vpop.f32.mrb[0].mxu0
    %v1753 = vadd.f32 %v1567, %v1752
    %v1754 = vpop.f32.mrb[0].mxu0
    %v1755 = vadd.f32 %v1571, %v1754
    %v1756 = vpop.f32.mrb[0].mxu0
    %v1757 = vpop.f32.mrb[0].mxu0
    %1758 = vdwg.mxu0
    %1759 = vmatprep.subr.bf16.mxu0 %v1293
    %1760 = vmatpush1.bf16.msra.mxu0 %v1292
    %1761 = vmatprep.subr.bf16.mxu0 %v1309
    %1762 = vmatpush1.bf16.msra.mxu0 %v1308
    %1763 = vmatprep.subr.bf16.mxu0 %v1325
    %1764 = vmatpush1.bf16.msra.mxu0 %v1324
    %1765 = vmatprep.subr.bf16.mxu0 %v1341
    %1766 = vmatpush1.bf16.msra.mxu0 %v1340
    %1767 = vmatprep.subr.bf16.mxu0 %v1357
    %1768 = vmatpush1.bf16.msra.mxu0 %v1356
    %1769 = vmatprep.subr.bf16.mxu0 %v1373
    %1770 = vmatpush1.bf16.msra.mxu0 %v1372
    %1771 = vmatprep.subr.bf16.mxu0 %v1389
    %1772 = vmatpush1.bf16.msra.mxu0 %v1388
    %1773 = vmatprep.subr.bf16.mxu0 %v1405
    %1774 = vmatpush1.bf16.msra.mxu0 %v1404
    %1775 = vmatprep.subr.bf16.mxu0 %v1421
    %1776 = vmatpush1.bf16.msra.mxu0 %v1420
    %1777 = vmatprep.subr.bf16.mxu0 %v1437
    %1778 = vmatpush1.bf16.msra.mxu0 %v1436
    %1779 = vmatprep.subr.bf16.mxu0 %v1453
    %1780 = vmatpush1.bf16.msra.mxu0 %v1452
    %1781 = vmatprep.subr.bf16.mxu0 %v1469
    %1782 = vmatpush1.bf16.msra.mxu0 %v1468
    %1783 = vmatprep.subr.bf16.mxu0 %v1485
    %1784 = vmatpush1.bf16.msra.mxu0 %v1484
    %1785 = vmatprep.subr.bf16.mxu0 %v1501
    %1786 = vmatpush1.bf16.msra.mxu0 %v1500
    %1787 = vmatprep.subr.bf16.mxu0 %v1517
    %1788 = vmatpush1.bf16.msra.mxu0 %v1516
    %1789 = vmatprep.subr.bf16.mxu0 %v1533
    %1790 = vmatpush1.bf16.msra.mxu0 %v1532
    %1791 = vmatprep.mubr.bf16.mxu0 %v1030
    %1792 = vmatmul.mubr.bf16.gmra.mrb[0].mxu0 %v1029
    %v1793 = vpop.f32.mrb[0].mxu0
    %v1794 = vadd.f32 %v1753, %v1793
    %v1795 = vpop.f32.mrb[0].mxu0
    %v1796 = vadd.f32 %v1755, %v1795
    %v1797 = vpop.f32.mrb[0].mxu0
    %v1798 = vpop.f32.mrb[0].mxu0
    %1799 = vdwg.mxu0
    %1800 = vmatprep.subr.bf16.mxu0 %v1039
    %1801 = vmatpush1.bf16.msra.mxu0 %v1038
    %1802 = vmatprep.subr.bf16.mxu0 %v1055
    %1803 = vmatpush1.bf16.msra.mxu0 %v1054
    %1804 = vmatprep.subr.bf16.mxu0 %v1071
    %1805 = vmatpush1.bf16.msra.mxu0 %v1070
    %1806 = vmatprep.subr.bf16.mxu0 %v1087
    %1807 = vmatpush1.bf16.msra.mxu0 %v1086
    %1808 = vmatprep.subr.bf16.mxu0 %v1103
    %1809 = vmatpush1.bf16.msra.mxu0 %v1102
    %1810 = vmatprep.subr.bf16.mxu0 %v1119
    %1811 = vmatpush1.bf16.msra.mxu0 %v1118
    %1812 = vmatprep.subr.bf16.mxu0 %v1135
    %1813 = vmatpush1.bf16.msra.mxu0 %v1134
    %1814 = vmatprep.subr.bf16.mxu0 %v1151
    %1815 = vmatpush1.bf16.msra.mxu0 %v1150
    %1816 = vmatprep.subr.bf16.mxu0 %v1167
    %1817 = vmatpush1.bf16.msra.mxu0 %v1166
    %1818 = vmatprep.subr.bf16.mxu0 %v1183
    %1819 = vmatpush1.bf16.msra.mxu0 %v1182
    %1820 = vmatprep.subr.bf16.mxu0 %v1199
    %1821 = vmatpush1.bf16.msra.mxu0 %v1198
    %1822 = vmatprep.subr.bf16.mxu0 %v1215
    %1823 = vmatpush1.bf16.msra.mxu0 %v1214
    %1824 = vmatprep.subr.bf16.mxu0 %v1231
    %1825 = vmatpush1.bf16.msra.mxu0 %v1230
    %1826 = vmatprep.subr.bf16.mxu0 %v1247
    %1827 = vmatpush1.bf16.msra.mxu0 %v1246
    %1828 = vmatprep.subr.bf16.mxu0 %v1263
    %1829 = vmatpush1.bf16.msra.mxu0 %v1262
    %1830 = vmatprep.subr.bf16.mxu0 %v1279
    %1831 = vmatpush1.bf16.msra.mxu0 %v1278
    %1832 = vmatprep.mubr.bf16.mxu0 %v1028
    %1833 = vmatmul.mubr.bf16.gmra.mrb[0].mxu0 %v1027
    %v1834 = vpop.f32.mrb[0].mxu0
    %v1835 = vadd.f32 %v1575, %v1834
    %v1836 = vpop.f32.mrb[0].mxu0
    %v1837 = vadd.f32 %v1579, %v1836
    %v1838 = vpop.f32.mrb[0].mxu0
    %v1839 = vpop.f32.mrb[0].mxu0
    %1840 = vdwg.mxu0
    %1841 = vmatprep.subr.bf16.mxu0 %v1295
    %1842 = vmatpush1.bf16.msra.mxu0 %v1294
    %1843 = vmatprep.subr.bf16.mxu0 %v1311
    %1844 = vmatpush1.bf16.msra.mxu0 %v1310
    %1845 = vmatprep.subr.bf16.mxu0 %v1327
    %1846 = vmatpush1.bf16.msra.mxu0 %v1326
    %1847 = vmatprep.subr.bf16.mxu0 %v1343
    %1848 = vmatpush1.bf16.msra.mxu0 %v1342
    %1849 = vmatprep.subr.bf16.mxu0 %v1359
    %1850 = vmatpush1.bf16.msra.mxu0 %v1358
    %1851 = vmatprep.subr.bf16.mxu0 %v1375
    %1852 = vmatpush1.bf16.msra.mxu0 %v1374
    %1853 = vmatprep.subr.bf16.mxu0 %v1391
    %1854 = vmatpush1.bf16.msra.mxu0 %v1390
    %1855 = vmatprep.subr.bf16.mxu0 %v1407
    %1856 = vmatpush1.bf16.msra.mxu0 %v1406
    %1857 = vmatprep.subr.bf16.mxu0 %v1423
    %1858 = vmatpush1.bf16.msra.mxu0 %v1422
    %1859 = vmatprep.subr.bf16.mxu0 %v1439
    %1860 = vmatpush1.bf16.msra.mxu0 %v1438
    %1861 = vmatprep.subr.bf16.mxu0 %v1455
    %1862 = vmatpush1.bf16.msra.mxu0 %v1454
    %1863 = vmatprep.subr.bf16.mxu0 %v1471
    %1864 = vmatpush1.bf16.msra.mxu0 %v1470
    %1865 = vmatprep.subr.bf16.mxu0 %v1487
    %1866 = vmatpush1.bf16.msra.mxu0 %v1486
    %1867 = vmatprep.subr.bf16.mxu0 %v1503
    %1868 = vmatpush1.bf16.msra.mxu0 %v1502
    %1869 = vmatprep.subr.bf16.mxu0 %v1519
    %1870 = vmatpush1.bf16.msra.mxu0 %v1518
    %1871 = vmatprep.subr.bf16.mxu0 %v1535
    %1872 = vmatpush1.bf16.msra.mxu0 %v1534
    %1873 = vmatprep.mubr.bf16.mxu0 %v1030
    %1874 = vmatmul.mubr.bf16.gmra.mrb[0].mxu0 %v1029
    %v1875 = vpop.f32.mrb[0].mxu0
    %v1876 = vadd.f32 %v1835, %v1875
    %v1877 = vpop.f32.mrb[0].mxu0
    %v1878 = vadd.f32 %v1837, %v1877
    %v1879 = vpop.f32.mrb[0].mxu0
    %v1880 = vpop.f32.mrb[0].mxu0
    %1881 = vdwg.mxu0
    %1882 = vmatprep.subr.bf16.mxu0 %v1041
    %1883 = vmatpush1.bf16.msra.mxu0 %v1040
    %1884 = vmatprep.subr.bf16.mxu0 %v1057
    %1885 = vmatpush1.bf16.msra.mxu0 %v1056
    %1886 = vmatprep.subr.bf16.mxu0 %v1073
    %1887 = vmatpush1.bf16.msra.mxu0 %v1072
    %1888 = vmatprep.subr.bf16.mxu0 %v1089
    %1889 = vmatpush1.bf16.msra.mxu0 %v1088
    %1890 = vmatprep.subr.bf16.mxu0 %v1105
    %1891 = vmatpush1.bf16.msra.mxu0 %v1104
    %1892 = vmatprep.subr.bf16.mxu0 %v1121
    %1893 = vmatpush1.bf16.msra.mxu0 %v1120
    %1894 = vmatprep.subr.bf16.mxu0 %v1137
    %1895 = vmatpush1.bf16.msra.mxu0 %v1136
    %1896 = vmatprep.subr.bf16.mxu0 %v1153
    %1897 = vmatpush1.bf16.msra.mxu0 %v1152
    %1898 = vmatprep.subr.bf16.mxu0 %v1169
    %1899 = vmatpush1.bf16.msra.mxu0 %v1168
    %1900 = vmatprep.subr.bf16.mxu0 %v1185
    %1901 = vmatpush1.bf16.msra.mxu0 %v1184
    %1902 = vmatprep.subr.bf16.mxu0 %v1201
    %1903 = vmatpush1.bf16.msra.mxu0 %v1200
    %1904 = vmatprep.subr.bf16.mxu0 %v1217
    %1905 = vmatpush1.bf16.msra.mxu0 %v1216
    %1906 = vmatprep.subr.bf16.mxu0 %v1233
    %1907 = vmatpush1.bf16.msra.mxu0 %v1232
    %1908 = vmatprep.subr.bf16.mxu0 %v1249
    %1909 = vmatpush1.bf16.msra.mxu0 %v1248
    %1910 = vmatprep.subr.bf16.mxu0 %v1265
    %1911 = vmatpush1.bf16.msra.mxu0 %v1264
    %1912 = vmatprep.subr.bf16.mxu0 %v1281
    %1913 = vmatpush1.bf16.msra.mxu0 %v1280
    %1914 = vmatprep.mubr.bf16.mxu0 %v1028
    %1915 = vmatmul.mubr.bf16.gmra.mrb[0].mxu0 %v1027
    %v1916 = vpop.f32.mrb[0].mxu0
    %v1917 = vadd.f32 %v1583, %v1916
    %v1918 = vpop.f32.mrb[0].mxu0
    %v1919 = vadd.f32 %v1587, %v1918
    %v1920 = vpop.f32.mrb[0].mxu0
    %v1921 = vpop.f32.mrb[0].mxu0
    %1922 = vdwg.mxu0
    %1923 = vmatprep.subr.bf16.mxu0 %v1297
    %1924 = vmatpush1.bf16.msra.mxu0 %v1296
    %1925 = vmatprep.subr.bf16.mxu0 %v1313
    %1926 = vmatpush1.bf16.msra.mxu0 %v1312
    %1927 = vmatprep.subr.bf16.mxu0 %v1329
    %1928 = vmatpush1.bf16.msra.mxu0 %v1328
    %1929 = vmatprep.subr.bf16.mxu0 %v1345
    %1930 = vmatpush1.bf16.msra.mxu0 %v1344
    %1931 = vmatprep.subr.bf16.mxu0 %v1361
    %1932 = vmatpush1.bf16.msra.mxu0 %v1360
    %1933 = vmatprep.subr.bf16.mxu0 %v1377
    %1934 = vmatpush1.bf16.msra.mxu0 %v1376
    %1935 = vmatprep.subr.bf16.mxu0 %v1393
    %1936 = vmatpush1.bf16.msra.mxu0 %v1392
    %1937 = vmatprep.subr.bf16.mxu0 %v1409
    %1938 = vmatpush1.bf16.msra.mxu0 %v1408
    %1939 = vmatprep.subr.bf16.mxu0 %v1425
    %1940 = vmatpush1.bf16.msra.mxu0 %v1424
    %1941 = vmatprep.subr.bf16.mxu0 %v1441
    %1942 = vmatpush1.bf16.msra.mxu0 %v1440
    %1943 = vmatprep.subr.bf16.mxu0 %v1457
    %1944 = vmatpush1.bf16.msra.mxu0 %v1456
    %1945 = vmatprep.subr.bf16.mxu0 %v1473
    %1946 = vmatpush1.bf16.msra.mxu0 %v1472
    %1947 = vmatprep.subr.bf16.mxu0 %v1489
    %1948 = vmatpush1.bf16.msra.mxu0 %v1488
    %1949 = vmatprep.subr.bf16.mxu0 %v1505
    %1950 = vmatpush1.bf16.msra.mxu0 %v1504
    %1951 = vmatprep.subr.bf16.mxu0 %v1521
    %1952 = vmatpush1.bf16.msra.mxu0 %v1520
    %1953 = vmatprep.subr.bf16.mxu0 %v1537
    %1954 = vmatpush1.bf16.msra.mxu0 %v1536
    %1955 = vmatprep.mubr.bf16.mxu0 %v1030
    %1956 = vmatmul.mubr.bf16.gmra.mrb[0].mxu0 %v1029
    %v1957 = vpop.f32.mrb[0].mxu0
    %v1958 = vadd.f32 %v1917, %v1957
    %v1959 = vpop.f32.mrb[0].mxu0
    %v1960 = vadd.f32 %v1919, %v1959
    %v1961 = vpop.f32.mrb[0].mxu0
    %v1962 = vpop.f32.mrb[0].mxu0
    %1963 = vdwg.mxu0
    %1964 = vmatprep.subr.bf16.mxu0 %v1043
    %1965 = vmatpush1.bf16.msra.mxu0 %v1042
    %1966 = vmatprep.subr.bf16.mxu0 %v1059
    %1967 = vmatpush1.bf16.msra.mxu0 %v1058
    %1968 = vmatprep.subr.bf16.mxu0 %v1075
    %1969 = vmatpush1.bf16.msra.mxu0 %v1074
    %1970 = vmatprep.subr.bf16.mxu0 %v1091
    %1971 = vmatpush1.bf16.msra.mxu0 %v1090
    %1972 = vmatprep.subr.bf16.mxu0 %v1107
    %1973 = vmatpush1.bf16.msra.mxu0 %v1106
    %1974 = vmatprep.subr.bf16.mxu0 %v1123
    %1975 = vmatpush1.bf16.msra.mxu0 %v1122
    %1976 = vmatprep.subr.bf16.mxu0 %v1139
    %1977 = vmatpush1.bf16.msra.mxu0 %v1138
    %1978 = vmatprep.subr.bf16.mxu0 %v1155
    %1979 = vmatpush1.bf16.msra.mxu0 %v1154
    %1980 = vmatprep.subr.bf16.mxu0 %v1171
    %1981 = vmatpush1.bf16.msra.mxu0 %v1170
    %1982 = vmatprep.subr.bf16.mxu0 %v1187
    %1983 = vmatpush1.bf16.msra.mxu0 %v1186
    %1984 = vmatprep.subr.bf16.mxu0 %v1203
    %1985 = vmatpush1.bf16.msra.mxu0 %v1202
    %1986 = vmatprep.subr.bf16.mxu0 %v1219
    %1987 = vmatpush1.bf16.msra.mxu0 %v1218
    %1988 = vmatprep.subr.bf16.mxu0 %v1235
    %1989 = vmatpush1.bf16.msra.mxu0 %v1234
    %1990 = vmatprep.subr.bf16.mxu0 %v1251
    %1991 = vmatpush1.bf16.msra.mxu0 %v1250
    %1992 = vmatprep.subr.bf16.mxu0 %v1267
    %1993 = vmatpush1.bf16.msra.mxu0 %v1266
    %1994 = vmatprep.subr.bf16.mxu0 %v1283
    %1995 = vmatpush1.bf16.msra.mxu0 %v1282
    %1996 = vmatprep.mubr.bf16.mxu0 %v1028
    %1997 = vmatmul.mubr.bf16.gmra.mrb[0].mxu0 %v1027
    %v1998 = vpop.f32.mrb[0].mxu0
    %v1999 = vadd.f32 %v1591, %v1998
    %v2000 = vpop.f32.mrb[0].mxu0
    %v2001 = vadd.f32 %v1595, %v2000
    %v2002 = vpop.f32.mrb[0].mxu0
    %v2003 = vpop.f32.mrb[0].mxu0
    %2004 = vdwg.mxu0
    %2005 = vmatprep.subr.bf16.mxu0 %v1299
    %2006 = vmatpush1.bf16.msra.mxu0 %v1298
    %2007 = vmatprep.subr.bf16.mxu0 %v1315
    %2008 = vmatpush1.bf16.msra.mxu0 %v1314
    %2009 = vmatprep.subr.bf16.mxu0 %v1331
    %2010 = vmatpush1.bf16.msra.mxu0 %v1330
    %2011 = vmatprep.subr.bf16.mxu0 %v1347
    %2012 = vmatpush1.bf16.msra.mxu0 %v1346
    %2013 = vmatprep.subr.bf16.mxu0 %v1363
    %2014 = vmatpush1.bf16.msra.mxu0 %v1362
    %2015 = vmatprep.subr.bf16.mxu0 %v1379
    %2016 = vmatpush1.bf16.msra.mxu0 %v1378
    %2017 = vmatprep.subr.bf16.mxu0 %v1395
    %2018 = vmatpush1.bf16.msra.mxu0 %v1394
    %2019 = vmatprep.subr.bf16.mxu0 %v1411
    %2020 = vmatpush1.bf16.msra.mxu0 %v1410
    %2021 = vmatprep.subr.bf16.mxu0 %v1427
    %2022 = vmatpush1.bf16.msra.mxu0 %v1426
    %2023 = vmatprep.subr.bf16.mxu0 %v1443
    %2024 = vmatpush1.bf16.msra.mxu0 %v1442
    %2025 = vmatprep.subr.bf16.mxu0 %v1459
    %2026 = vmatpush1.bf16.msra.mxu0 %v1458
    %2027 = vmatprep.subr.bf16.mxu0 %v1475
    %2028 = vmatpush1.bf16.msra.mxu0 %v1474
    %2029 = vmatprep.subr.bf16.mxu0 %v1491
    %2030 = vmatpush1.bf16.msra.mxu0 %v1490
    %2031 = vmatprep.subr.bf16.mxu0 %v1507
    %2032 = vmatpush1.bf16.msra.mxu0 %v1506
    %2033 = vmatprep.subr.bf16.mxu0 %v1523
    %2034 = vmatpush1.bf16.msra.mxu0 %v1522
    %2035 = vmatprep.subr.bf16.mxu0 %v1539
    %2036 = vmatpush1.bf16.msra.mxu0 %v1538
    %2037 = vmatprep.mubr.bf16.mxu0 %v1030
    %2038 = vmatmul.mubr.bf16.gmra.mrb[0].mxu0 %v1029
    %v2039 = vpop.f32.mrb[0].mxu0
    %v2040 = vadd.f32 %v1999, %v2039
    %v2041 = vpop.f32.mrb[0].mxu0
    %v2042 = vadd.f32 %v2001, %v2041
    %v2043 = vpop.f32.mrb[0].mxu0
    %v2044 = vpop.f32.mrb[0].mxu0
    %2045 = vdwg.mxu0
    %2046 = vmatprep.subr.bf16.mxu0 %v1045
    %2047 = vmatpush1.bf16.msra.mxu0 %v1044
    %2048 = vmatprep.subr.bf16.mxu0 %v1061
    %2049 = vmatpush1.bf16.msra.mxu0 %v1060
    %2050 = vmatprep.subr.bf16.mxu0 %v1077
    %2051 = vmatpush1.bf16.msra.mxu0 %v1076
    %2052 = vmatprep.subr.bf16.mxu0 %v1093
    %2053 = vmatpush1.bf16.msra.mxu0 %v1092
    %2054 = vmatprep.subr.bf16.mxu0 %v1109
    %2055 = vmatpush1.bf16.msra.mxu0 %v1108
    %2056 = vmatprep.subr.bf16.mxu0 %v1125
    %2057 = vmatpush1.bf16.msra.mxu0 %v1124
    %2058 = vmatprep.subr.bf16.mxu0 %v1141
    %2059 = vmatpush1.bf16.msra.mxu0 %v1140
    %2060 = vmatprep.subr.bf16.mxu0 %v1157
    %2061 = vmatpush1.bf16.msra.mxu0 %v1156
    %2062 = vmatprep.subr.bf16.mxu0 %v1173
    %2063 = vmatpush1.bf16.msra.mxu0 %v1172
    %2064 = vmatprep.subr.bf16.mxu0 %v1189
    %2065 = vmatpush1.bf16.msra.mxu0 %v1188
    %2066 = vmatprep.subr.bf16.mxu0 %v1205
    %2067 = vmatpush1.bf16.msra.mxu0 %v1204
    %2068 = vmatprep.subr.bf16.mxu0 %v1221
    %2069 = vmatpush1.bf16.msra.mxu0 %v1220
    %2070 = vmatprep.subr.bf16.mxu0 %v1237
    %2071 = vmatpush1.bf16.msra.mxu0 %v1236
    %2072 = vmatprep.subr.bf16.mxu0 %v1253
    %2073 = vmatpush1.bf16.msra.mxu0 %v1252
    %2074 = vmatprep.subr.bf16.mxu0 %v1269
    %2075 = vmatpush1.bf16.msra.mxu0 %v1268
    %2076 = vmatprep.subr.bf16.mxu0 %v1285
    %2077 = vmatpush1.bf16.msra.mxu0 %v1284
    %2078 = vmatprep.mubr.bf16.mxu0 %v1028
    %2079 = vmatmul.mubr.bf16.gmra.mrb[0].mxu0 %v1027
    %v2080 = vpop.f32.mrb[0].mxu0
    %v2081 = vadd.f32 %v1599, %v2080
    %v2082 = vpop.f32.mrb[0].mxu0
    %v2083 = vadd.f32 %v1603, %v2082
    %v2084 = vpop.f32.mrb[0].mxu0
    %v2085 = vpop.f32.mrb[0].mxu0
    %2086 = vdwg.mxu0
    %2087 = vmatprep.subr.bf16.mxu0 %v1301
    %2088 = vmatpush1.bf16.msra.mxu0 %v1300
    %2089 = vmatprep.subr.bf16.mxu0 %v1317
    %2090 = vmatpush1.bf16.msra.mxu0 %v1316
    %2091 = vmatprep.subr.bf16.mxu0 %v1333
    %2092 = vmatpush1.bf16.msra.mxu0 %v1332
    %2093 = vmatprep.subr.bf16.mxu0 %v1349
    %2094 = vmatpush1.bf16.msra.mxu0 %v1348
    %2095 = vmatprep.subr.bf16.mxu0 %v1365
    %2096 = vmatpush1.bf16.msra.mxu0 %v1364
    %2097 = vmatprep.subr.bf16.mxu0 %v1381
    %2098 = vmatpush1.bf16.msra.mxu0 %v1380
    %2099 = vmatprep.subr.bf16.mxu0 %v1397
    %2100 = vmatpush1.bf16.msra.mxu0 %v1396
    %2101 = vmatprep.subr.bf16.mxu0 %v1413
    %2102 = vmatpush1.bf16.msra.mxu0 %v1412
    %2103 = vmatprep.subr.bf16.mxu0 %v1429
    %2104 = vmatpush1.bf16.msra.mxu0 %v1428
    %2105 = vmatprep.subr.bf16.mxu0 %v1445
    %2106 = vmatpush1.bf16.msra.mxu0 %v1444
    %2107 = vmatprep.subr.bf16.mxu0 %v1461
    %2108 = vmatpush1.bf16.msra.mxu0 %v1460
    %2109 = vmatprep.subr.bf16.mxu0 %v1477
    %2110 = vmatpush1.bf16.msra.mxu0 %v1476
    %2111 = vmatprep.subr.bf16.mxu0 %v1493
    %2112 = vmatpush1.bf16.msra.mxu0 %v1492
    %2113 = vmatprep.subr.bf16.mxu0 %v1509
    %2114 = vmatpush1.bf16.msra.mxu0 %v1508
    %2115 = vmatprep.subr.bf16.mxu0 %v1525
    %2116 = vmatpush1.bf16.msra.mxu0 %v1524
    %2117 = vmatprep.subr.bf16.mxu0 %v1541
    %2118 = vmatpush1.bf16.msra.mxu0 %v1540
    %2119 = vmatprep.mubr.bf16.mxu0 %v1030
    %2120 = vmatmul.mubr.bf16.gmra.mrb[0].mxu0 %v1029
    %v2121 = vpop.f32.mrb[0].mxu0
    %v2122 = vadd.f32 %v2081, %v2121
    %v2123 = vpop.f32.mrb[0].mxu0
    %v2124 = vadd.f32 %v2083, %v2123
    %v2125 = vpop.f32.mrb[0].mxu0
    %v2126 = vpop.f32.mrb[0].mxu0
    %2127 = vdwg.mxu0
    %2128 = vmatprep.subr.bf16.mxu0 %v1047
    %2129 = vmatpush1.bf16.msra.mxu0 %v1046
    %2130 = vmatprep.subr.bf16.mxu0 %v1063
    %2131 = vmatpush1.bf16.msra.mxu0 %v1062
    %2132 = vmatprep.subr.bf16.mxu0 %v1079
    %2133 = vmatpush1.bf16.msra.mxu0 %v1078
    %2134 = vmatprep.subr.bf16.mxu0 %v1095
    %2135 = vmatpush1.bf16.msra.mxu0 %v1094
    %2136 = vmatprep.subr.bf16.mxu0 %v1111
    %2137 = vmatpush1.bf16.msra.mxu0 %v1110
    %2138 = vmatprep.subr.bf16.mxu0 %v1127
    %2139 = vmatpush1.bf16.msra.mxu0 %v1126
    %2140 = vmatprep.subr.bf16.mxu0 %v1143
    %2141 = vmatpush1.bf16.msra.mxu0 %v1142
    %2142 = vmatprep.subr.bf16.mxu0 %v1159
    %2143 = vmatpush1.bf16.msra.mxu0 %v1158
    %2144 = vmatprep.subr.bf16.mxu0 %v1175
    %2145 = vmatpush1.bf16.msra.mxu0 %v1174
    %2146 = vmatprep.subr.bf16.mxu0 %v1191
    %2147 = vmatpush1.bf16.msra.mxu0 %v1190
    %2148 = vmatprep.subr.bf16.mxu0 %v1207
    %2149 = vmatpush1.bf16.msra.mxu0 %v1206
    %2150 = vmatprep.subr.bf16.mxu0 %v1223
    %2151 = vmatpush1.bf16.msra.mxu0 %v1222
    %2152 = vmatprep.subr.bf16.mxu0 %v1239
    %2153 = vmatpush1.bf16.msra.mxu0 %v1238
    %2154 = vmatprep.subr.bf16.mxu0 %v1255
    %2155 = vmatpush1.bf16.msra.mxu0 %v1254
    %2156 = vmatprep.subr.bf16.mxu0 %v1271
    %2157 = vmatpush1.bf16.msra.mxu0 %v1270
    %2158 = vmatprep.subr.bf16.mxu0 %v1287
    %2159 = vmatpush1.bf16.msra.mxu0 %v1286
    %2160 = vmatprep.mubr.bf16.mxu0 %v1028
    %2161 = vmatmul.mubr.bf16.gmra.mrb[0].mxu0 %v1027
    %v2162 = vpop.f32.mrb[0].mxu0
    %v2163 = vadd.f32 %v1607, %v2162
    %v2164 = vpop.f32.mrb[0].mxu0
    %v2165 = vadd.f32 %v1611, %v2164
    %v2166 = vpop.f32.mrb[0].mxu0
    %v2167 = vpop.f32.mrb[0].mxu0
    %2168 = vdwg.mxu0
    %2169 = vmatprep.subr.bf16.mxu0 %v1303
    %2170 = vmatpush1.bf16.msra.mxu0 %v1302
    %2171 = vmatprep.subr.bf16.mxu0 %v1319
    %2172 = vmatpush1.bf16.msra.mxu0 %v1318
    %2173 = vmatprep.subr.bf16.mxu0 %v1335
    %2174 = vmatpush1.bf16.msra.mxu0 %v1334
    %2175 = vmatprep.subr.bf16.mxu0 %v1351
    %2176 = vmatpush1.bf16.msra.mxu0 %v1350
    %2177 = vmatprep.subr.bf16.mxu0 %v1367
    %2178 = vmatpush1.bf16.msra.mxu0 %v1366
    %2179 = vmatprep.subr.bf16.mxu0 %v1383
    %2180 = vmatpush1.bf16.msra.mxu0 %v1382
    %2181 = vmatprep.subr.bf16.mxu0 %v1399
    %2182 = vmatpush1.bf16.msra.mxu0 %v1398
    %2183 = vmatprep.subr.bf16.mxu0 %v1415
    %2184 = vmatpush1.bf16.msra.mxu0 %v1414
    %2185 = vmatprep.subr.bf16.mxu0 %v1431
    %2186 = vmatpush1.bf16.msra.mxu0 %v1430
    %2187 = vmatprep.subr.bf16.mxu0 %v1447
    %2188 = vmatpush1.bf16.msra.mxu0 %v1446
    %2189 = vmatprep.subr.bf16.mxu0 %v1463
    %2190 = vmatpush1.bf16.msra.mxu0 %v1462
    %2191 = vmatprep.subr.bf16.mxu0 %v1479
    %2192 = vmatpush1.bf16.msra.mxu0 %v1478
    %2193 = vmatprep.subr.bf16.mxu0 %v1495
    %2194 = vmatpush1.bf16.msra.mxu0 %v1494
    %2195 = vmatprep.subr.bf16.mxu0 %v1511
    %2196 = vmatpush1.bf16.msra.mxu0 %v1510
    %2197 = vmatprep.subr.bf16.mxu0 %v1527
    %2198 = vmatpush1.bf16.msra.mxu0 %v1526
    %2199 = vmatprep.subr.bf16.mxu0 %v1543
    %2200 = vmatpush1.bf16.msra.mxu0 %v1542
    %2201 = vmatprep.mubr.bf16.mxu0 %v1030
    %2202 = vmatmul.mubr.bf16.gmra.mrb[0].mxu0 %v1029
    %v2203 = vpop.f32.mrb[0].mxu0
    %v2204 = vadd.f32 %v2163, %v2203
    %v2205 = vpop.f32.mrb[0].mxu0
    %v2206 = vadd.f32 %v2165, %v2205
    %v2207 = vpop.f32.mrb[0].mxu0
    %v2208 = vpop.f32.mrb[0].mxu0
    %2209 = vdwg.mxu0
    %2210 = vmatprep.subr.bf16.mxu0 %v1049
    %2211 = vmatpush1.bf16.msra.mxu0 %v1048
    %2212 = vmatprep.subr.bf16.mxu0 %v1065
    %2213 = vmatpush1.bf16.msra.mxu0 %v1064
    %2214 = vmatprep.subr.bf16.mxu0 %v1081
    %2215 = vmatpush1.bf16.msra.mxu0 %v1080
    %2216 = vmatprep.subr.bf16.mxu0 %v1097
    %2217 = vmatpush1.bf16.msra.mxu0 %v1096
    %2218 = vmatprep.subr.bf16.mxu0 %v1113
    %2219 = vmatpush1.bf16.msra.mxu0 %v1112
    %2220 = vmatprep.subr.bf16.mxu0 %v1129
    %2221 = vmatpush1.bf16.msra.mxu0 %v1128
    %2222 = vmatprep.subr.bf16.mxu0 %v1145
    %2223 = vmatpush1.bf16.msra.mxu0 %v1144
    %2224 = vmatprep.subr.bf16.mxu0 %v1161
    %2225 = vmatpush1.bf16.msra.mxu0 %v1160
    %2226 = vmatprep.subr.bf16.mxu0 %v1177
    %2227 = vmatpush1.bf16.msra.mxu0 %v1176
    %2228 = vmatprep.subr.bf16.mxu0 %v1193
    %2229 = vmatpush1.bf16.msra.mxu0 %v1192
    %2230 = vmatprep.subr.bf16.mxu0 %v1209
    %2231 = vmatpush1.bf16.msra.mxu0 %v1208
    %2232 = vmatprep.subr.bf16.mxu0 %v1225
    %2233 = vmatpush1.bf16.msra.mxu0 %v1224
    %2234 = vmatprep.subr.bf16.mxu0 %v1241
    %2235 = vmatpush1.bf16.msra.mxu0 %v1240
    %2236 = vmatprep.subr.bf16.mxu0 %v1257
    %2237 = vmatpush1.bf16.msra.mxu0 %v1256
    %2238 = vmatprep.subr.bf16.mxu0 %v1273
    %2239 = vmatpush1.bf16.msra.mxu0 %v1272
    %2240 = vmatprep.subr.bf16.mxu0 %v1289
    %2241 = vmatpush1.bf16.msra.mxu0 %v1288
    %2242 = vmatprep.mubr.bf16.mxu0 %v1028
    %2243 = vmatmul.mubr.bf16.gmra.mrb[0].mxu0 %v1027
    %v2244 = vpop.f32.mrb[0].mxu0
    %v2245 = vadd.f32 %v1615, %v2244
    %v2246 = vpop.f32.mrb[0].mxu0
    %v2247 = vadd.f32 %v1619, %v2246
    %v2248 = vpop.f32.mrb[0].mxu0
    %v2249 = vpop.f32.mrb[0].mxu0
    %2250 = vdwg.mxu0
    %2251 = vmatprep.subr.bf16.mxu0 %v1305
    %2252 = vmatpush1.bf16.msra.mxu0 %v1304
    %2253 = vmatprep.subr.bf16.mxu0 %v1321
    %2254 = vmatpush1.bf16.msra.mxu0 %v1320
    %2255 = vmatprep.subr.bf16.mxu0 %v1337
    %2256 = vmatpush1.bf16.msra.mxu0 %v1336
    %2257 = vmatprep.subr.bf16.mxu0 %v1353
    %2258 = vmatpush1.bf16.msra.mxu0 %v1352
    %2259 = vmatprep.subr.bf16.mxu0 %v1369
    %2260 = vmatpush1.bf16.msra.mxu0 %v1368
    %2261 = vmatprep.subr.bf16.mxu0 %v1385
    %2262 = vmatpush1.bf16.msra.mxu0 %v1384
    %2263 = vmatprep.subr.bf16.mxu0 %v1401
    %2264 = vmatpush1.bf16.msra.mxu0 %v1400
    %2265 = vmatprep.subr.bf16.mxu0 %v1417
    %2266 = vmatpush1.bf16.msra.mxu0 %v1416
    %2267 = vmatprep.subr.bf16.mxu0 %v1433
    %2268 = vmatpush1.bf16.msra.mxu0 %v1432
    %2269 = vmatprep.subr.bf16.mxu0 %v1449
    %2270 = vmatpush1.bf16.msra.mxu0 %v1448
    %2271 = vmatprep.subr.bf16.mxu0 %v1465
    %2272 = vmatpush1.bf16.msra.mxu0 %v1464
    %2273 = vmatprep.subr.bf16.mxu0 %v1481
    %2274 = vmatpush1.bf16.msra.mxu0 %v1480
    %2275 = vmatprep.subr.bf16.mxu0 %v1497
    %2276 = vmatpush1.bf16.msra.mxu0 %v1496
    %2277 = vmatprep.subr.bf16.mxu0 %v1513
    %2278 = vmatpush1.bf16.msra.mxu0 %v1512
    %2279 = vmatprep.subr.bf16.mxu0 %v1529
    %2280 = vmatpush1.bf16.msra.mxu0 %v1528
    %2281 = vmatprep.subr.bf16.mxu0 %v1545
    %2282 = vmatpush1.bf16.msra.mxu0 %v1544
    %2283 = vmatprep.mubr.bf16.mxu0 %v1030
    %2284 = vmatmul.mubr.bf16.gmra.mrb[0].mxu0 %v1029
    %v2285 = vpop.f32.mrb[0].mxu0
    %v2286 = vadd.f32 %v2245, %v2285
    %v2287 = vpop.f32.mrb[0].mxu0
    %v2288 = vadd.f32 %v2247, %v2287
    %v2289 = vpop.f32.mrb[0].mxu0
    %v2290 = vpop.f32.mrb[0].mxu0
    %2291 = vdwg.mxu0
    %v2292 = vmax.f32 %v1712, 0.0
    %v2293 = vmax.f32 %v1714, 0.0
    %v2294 = vmax.f32 %v1794, 0.0
    %v2295 = vmax.f32 %v1796, 0.0
    %v2296 = vmax.f32 %v1876, 0.0
    %v2297 = vmax.f32 %v1878, 0.0
    %v2298 = vmax.f32 %v1958, 0.0
    %v2299 = vmax.f32 %v1960, 0.0
    %v2300 = vmax.f32 %v2040, 0.0
    %v2301 = vmax.f32 %v2042, 0.0
    %v2302 = vmax.f32 %v2122, 0.0
    %v2303 = vmax.f32 %v2124, 0.0
    %v2304 = vmax.f32 %v2204, 0.0
    %v2305 = vmax.f32 %v2206, 0.0
    %v2306 = vmax.f32 %v2286, 0.0
    %v2307 = vmax.f32 %v2288, 0.0
    %v2308 = vpack.c.bf16 %v2292, %v2292
    %v2309 = vpack.c.bf16 %v2293, %v2293
    %v2310 = vpack.c.bf16 %v2294, %v2294
    %v2311 = vpack.c.bf16 %v2295, %v2295
    %v2312 = vpack.c.bf16 %v2296, %v2296
    %v2313 = vpack.c.bf16 %v2297, %v2297
    %v2314 = vpack.c.bf16 %v2298, %v2298
    %v2315 = vpack.c.bf16 %v2299, %v2299
    %v2316 = vpack.c.bf16 %v2300, %v2300
    %v2317 = vpack.c.bf16 %v2301, %v2301
    %v2318 = vpack.c.bf16 %v2302, %v2302
    %v2319 = vpack.c.bf16 %v2303, %v2303
    %v2320 = vpack.c.bf16 %v2304, %v2304
    %v2321 = vpack.c.bf16 %v2305, %v2305
    %v2322 = vpack.c.bf16 %v2306, %v2306
    %v2323 = vpack.c.bf16 %v2307, %v2307
    %s2324 = smul.u32 4, 256
    %s2325 = smul.u32 %s2324, 1
    %s2326 = sshll.u32 %s2325, 4
    %2327 = dma.done %s152, %s2326
    %v2328 = vld [vmem:[#allocation5] sm:$0xff]
    %v2329 = vld [vmem:[#allocation5 + $0x8] sm:$0xff]
    %v2330 = vld [vmem:[#allocation5 + $0x10] sm:$0xff]
    %v2331 = vld [vmem:[#allocation5 + $0x18] sm:$0xff]
    %v2332 = vld [vmem:[#allocation5 + $0x20] sm:$0xff]
    %v2333 = vld [vmem:[#allocation5 + $0x28] sm:$0xff]
    %v2334 = vld [vmem:[#allocation5 + $0x30] sm:$0xff]
    %v2335 = vld [vmem:[#allocation5 + $0x38] sm:$0xff]
    %v2336 = vld [vmem:[#allocation5 + $0x40] sm:$0xff]
    %v2337 = vld [vmem:[#allocation5 + $0x48] sm:$0xff]
    %v2338 = vld [vmem:[#allocation5 + $0x50] sm:$0xff]
    %v2339 = vld [vmem:[#allocation5 + $0x58] sm:$0xff]
    %v2340 = vld [vmem:[#allocation5 + $0x60] sm:$0xff]
    %v2341 = vld [vmem:[#allocation5 + $0x68] sm:$0xff]
    %v2342 = vld [vmem:[#allocation5 + $0x70] sm:$0xff]
    %v2343 = vld [vmem:[#allocation5 + $0x78] sm:$0xff]
    %v2344 = vld [vmem:[#allocation5 + $0x80] sm:$0xff]
    %v2345 = vld [vmem:[#allocation5 + $0x88] sm:$0xff]
    %v2346 = vld [vmem:[#allocation5 + $0x90] sm:$0xff]
    %v2347 = vld [vmem:[#allocation5 + $0x98] sm:$0xff]
    %v2348 = vld [vmem:[#allocation5 + $0xa0] sm:$0xff]
    %v2349 = vld [vmem:[#allocation5 + $0xa8] sm:$0xff]
    %v2350 = vld [vmem:[#allocation5 + $0xb0] sm:$0xff]
    %v2351 = vld [vmem:[#allocation5 + $0xb8] sm:$0xff]
    %v2352 = vld [vmem:[#allocation5 + $0xc0] sm:$0xff]
    %v2353 = vld [vmem:[#allocation5 + $0xc8] sm:$0xff]
    %v2354 = vld [vmem:[#allocation5 + $0xd0] sm:$0xff]
    %v2355 = vld [vmem:[#allocation5 + $0xd8] sm:$0xff]
    %v2356 = vld [vmem:[#allocation5 + $0xe0] sm:$0xff]
    %v2357 = vld [vmem:[#allocation5 + $0xe8] sm:$0xff]
    %v2358 = vld [vmem:[#allocation5 + $0xf0] sm:$0xff]
    %v2359 = vld [vmem:[#allocation5 + $0xf8] sm:$0xff]
    %v2360 = vld [vmem:[#allocation5 + $0x100] sm:$0xff]
    %v2361 = vld [vmem:[#allocation5 + $0x108] sm:$0xff]
    %v2362 = vld [vmem:[#allocation5 + $0x110] sm:$0xff]
    %v2363 = vld [vmem:[#allocation5 + $0x118] sm:$0xff]
    %v2364 = vld [vmem:[#allocation5 + $0x120] sm:$0xff]
    %v2365 = vld [vmem:[#allocation5 + $0x128] sm:$0xff]
    %v2366 = vld [vmem:[#allocation5 + $0x130] sm:$0xff]
    %v2367 = vld [vmem:[#allocation5 + $0x138] sm:$0xff]
    %v2368 = vld [vmem:[#allocation5 + $0x140] sm:$0xff]
    %v2369 = vld [vmem:[#allocation5 + $0x148] sm:$0xff]
    %v2370 = vld [vmem:[#allocation5 + $0x150] sm:$0xff]
    %v2371 = vld [vmem:[#allocation5 + $0x158] sm:$0xff]
    %v2372 = vld [vmem:[#allocation5 + $0x160] sm:$0xff]
    %v2373 = vld [vmem:[#allocation5 + $0x168] sm:$0xff]
    %v2374 = vld [vmem:[#allocation5 + $0x170] sm:$0xff]
    %v2375 = vld [vmem:[#allocation5 + $0x178] sm:$0xff]
    %v2376 = vld [vmem:[#allocation5 + $0x180] sm:$0xff]
    %v2377 = vld [vmem:[#allocation5 + $0x188] sm:$0xff]
    %v2378 = vld [vmem:[#allocation5 + $0x190] sm:$0xff]
    %v2379 = vld [vmem:[#allocation5 + $0x198] sm:$0xff]
    %v2380 = vld [vmem:[#allocation5 + $0x1a0] sm:$0xff]
    %v2381 = vld [vmem:[#allocation5 + $0x1a8] sm:$0xff]
    %v2382 = vld [vmem:[#allocation5 + $0x1b0] sm:$0xff]
    %v2383 = vld [vmem:[#allocation5 + $0x1b8] sm:$0xff]
    %v2384 = vld [vmem:[#allocation5 + $0x1c0] sm:$0xff]
    %v2385 = vld [vmem:[#allocation5 + $0x1c8] sm:$0xff]
    %v2386 = vld [vmem:[#allocation5 + $0x1d0] sm:$0xff]
    %v2387 = vld [vmem:[#allocation5 + $0x1d8] sm:$0xff]
    %v2388 = vld [vmem:[#allocation5 + $0x1e0] sm:$0xff]
    %v2389 = vld [vmem:[#allocation5 + $0x1e8] sm:$0xff]
    %v2390 = vld [vmem:[#allocation5 + $0x1f0] sm:$0xff]
    %v2391 = vld [vmem:[#allocation5 + $0x1f8] sm:$0xff]
    %v2392 = vld [vmem:[#allocation5 + $0x200] sm:$0xff]
    %v2393 = vld [vmem:[#allocation5 + $0x208] sm:$0xff]
    %v2394 = vld [vmem:[#allocation5 + $0x210] sm:$0xff]
    %v2395 = vld [vmem:[#allocation5 + $0x218] sm:$0xff]
    %v2396 = vld [vmem:[#allocation5 + $0x220] sm:$0xff]
    %v2397 = vld [vmem:[#allocation5 + $0x228] sm:$0xff]
    %v2398 = vld [vmem:[#allocation5 + $0x230] sm:$0xff]
    %v2399 = vld [vmem:[#allocation5 + $0x238] sm:$0xff]
    %v2400 = vld [vmem:[#allocation5 + $0x240] sm:$0xff]
    %v2401 = vld [vmem:[#allocation5 + $0x248] sm:$0xff]
    %v2402 = vld [vmem:[#allocation5 + $0x250] sm:$0xff]
    %v2403 = vld [vmem:[#allocation5 + $0x258] sm:$0xff]
    %v2404 = vld [vmem:[#allocation5 + $0x260] sm:$0xff]
    %v2405 = vld [vmem:[#allocation5 + $0x268] sm:$0xff]
    %v2406 = vld [vmem:[#allocation5 + $0x270] sm:$0xff]
    %v2407 = vld [vmem:[#allocation5 + $0x278] sm:$0xff]
    %v2408 = vld [vmem:[#allocation5 + $0x280] sm:$0xff]
    %v2409 = vld [vmem:[#allocation5 + $0x288] sm:$0xff]
    %v2410 = vld [vmem:[#allocation5 + $0x290] sm:$0xff]
    %v2411 = vld [vmem:[#allocation5 + $0x298] sm:$0xff]
    %v2412 = vld [vmem:[#allocation5 + $0x2a0] sm:$0xff]
    %v2413 = vld [vmem:[#allocation5 + $0x2a8] sm:$0xff]
    %v2414 = vld [vmem:[#allocation5 + $0x2b0] sm:$0xff]
    %v2415 = vld [vmem:[#allocation5 + $0x2b8] sm:$0xff]
    %v2416 = vld [vmem:[#allocation5 + $0x2c0] sm:$0xff]
    %v2417 = vld [vmem:[#allocation5 + $0x2c8] sm:$0xff]
    %v2418 = vld [vmem:[#allocation5 + $0x2d0] sm:$0xff]
    %v2419 = vld [vmem:[#allocation5 + $0x2d8] sm:$0xff]
    %v2420 = vld [vmem:[#allocation5 + $0x2e0] sm:$0xff]
    %v2421 = vld [vmem:[#allocation5 + $0x2e8] sm:$0xff]
    %v2422 = vld [vmem:[#allocation5 + $0x2f0] sm:$0xff]
    %v2423 = vld [vmem:[#allocation5 + $0x2f8] sm:$0xff]
    %v2424 = vld [vmem:[#allocation5 + $0x300] sm:$0xff]
    %v2425 = vld [vmem:[#allocation5 + $0x308] sm:$0xff]
    %v2426 = vld [vmem:[#allocation5 + $0x310] sm:$0xff]
    %v2427 = vld [vmem:[#allocation5 + $0x318] sm:$0xff]
    %v2428 = vld [vmem:[#allocation5 + $0x320] sm:$0xff]
    %v2429 = vld [vmem:[#allocation5 + $0x328] sm:$0xff]
    %v2430 = vld [vmem:[#allocation5 + $0x330] sm:$0xff]
    %v2431 = vld [vmem:[#allocation5 + $0x338] sm:$0xff]
    %v2432 = vld [vmem:[#allocation5 + $0x340] sm:$0xff]
    %v2433 = vld [vmem:[#allocation5 + $0x348] sm:$0xff]
    %v2434 = vld [vmem:[#allocation5 + $0x350] sm:$0xff]
    %v2435 = vld [vmem:[#allocation5 + $0x358] sm:$0xff]
    %v2436 = vld [vmem:[#allocation5 + $0x360] sm:$0xff]
    %v2437 = vld [vmem:[#allocation5 + $0x368] sm:$0xff]
    %v2438 = vld [vmem:[#allocation5 + $0x370] sm:$0xff]
    %v2439 = vld [vmem:[#allocation5 + $0x378] sm:$0xff]
    %v2440 = vld [vmem:[#allocation5 + $0x380] sm:$0xff]
    %v2441 = vld [vmem:[#allocation5 + $0x388] sm:$0xff]
    %v2442 = vld [vmem:[#allocation5 + $0x390] sm:$0xff]
    %v2443 = vld [vmem:[#allocation5 + $0x398] sm:$0xff]
    %v2444 = vld [vmem:[#allocation5 + $0x3a0] sm:$0xff]
    %v2445 = vld [vmem:[#allocation5 + $0x3a8] sm:$0xff]
    %v2446 = vld [vmem:[#allocation5 + $0x3b0] sm:$0xff]
    %v2447 = vld [vmem:[#allocation5 + $0x3b8] sm:$0xff]
    %v2448 = vld [vmem:[#allocation5 + $0x3c0] sm:$0xff]
    %v2449 = vld [vmem:[#allocation5 + $0x3c8] sm:$0xff]
    %v2450 = vld [vmem:[#allocation5 + $0x3d0] sm:$0xff]
    %v2451 = vld [vmem:[#allocation5 + $0x3d8] sm:$0xff]
    %v2452 = vld [vmem:[#allocation5 + $0x3e0] sm:$0xff]
    %v2453 = vld [vmem:[#allocation5 + $0x3e8] sm:$0xff]
    %v2454 = vld [vmem:[#allocation5 + $0x3f0] sm:$0xff]
    %v2455 = vld [vmem:[#allocation5 + $0x3f8] sm:$0xff]
    %v2456 = vld [vmem:[#allocation14 + $0x3] ss:$0 sm:$0xff]
    %2457 = vmatprep.subr.bf16.mxu0 0
    %2458 = vmatpush1.bf16.msra.mxu0 %v2328
    %2459 = vmatprep.subr.bf16.mxu0 0
    %2460 = vmatpush1.bf16.msra.mxu0 %v2329
    %2461 = vmatprep.subr.bf16.mxu0 0
    %2462 = vmatpush1.bf16.msra.mxu0 %v2330
    %2463 = vmatprep.subr.bf16.mxu0 0
    %2464 = vmatpush1.bf16.msra.mxu0 %v2331
    %2465 = vmatprep.subr.bf16.mxu0 0
    %2466 = vmatpush1.bf16.msra.mxu0 %v2332
    %2467 = vmatprep.subr.bf16.mxu0 0
    %2468 = vmatpush1.bf16.msra.mxu0 %v2333
    %2469 = vmatprep.subr.bf16.mxu0 0
    %2470 = vmatpush1.bf16.msra.mxu0 %v2334
    %2471 = vmatprep.subr.bf16.mxu0 0
    %2472 = vmatpush1.bf16.msra.mxu0 %v2335
    %2473 = vmatprep.subr.bf16.mxu0 0
    %2474 = vmatpush1.bf16.msra.mxu0 %v2336
    %2475 = vmatprep.subr.bf16.mxu0 0
    %2476 = vmatpush1.bf16.msra.mxu0 %v2337
    %2477 = vmatprep.subr.bf16.mxu0 0
    %2478 = vmatpush1.bf16.msra.mxu0 %v2338
    %2479 = vmatprep.subr.bf16.mxu0 0
    %2480 = vmatpush1.bf16.msra.mxu0 %v2339
    %2481 = vmatprep.subr.bf16.mxu0 0
    %2482 = vmatpush1.bf16.msra.mxu0 %v2340
    %2483 = vmatprep.subr.bf16.mxu0 0
    %2484 = vmatpush1.bf16.msra.mxu0 %v2341
    %2485 = vmatprep.subr.bf16.mxu0 0
    %2486 = vmatpush1.bf16.msra.mxu0 %v2342
    %2487 = vmatprep.subr.bf16.mxu0 0
    %2488 = vmatpush1.bf16.msra.mxu0 %v2343
    %2489 = vmatprep.mubr.bf16.mxu0 %v2309
    %2490 = vmatmul.mubr.bf16.gmra.mrb[0].mxu0 %v2308
    %v2491 = vpop.f32.mrb[0].mxu0
    %v2492 = vadd.f32 %v2456, %v2491
    %v2493 = vpop.f32.mrb[0].mxu0
    %v2494 = vpop.f32.mrb[0].mxu0
    %v2495 = vpop.f32.mrb[0].mxu0
    %2496 = vdwg.mxu0
    %2497 = vmatprep.subr.bf16.mxu0 0
    %2498 = vmatpush1.bf16.msra.mxu0 %v2344
    %2499 = vmatprep.subr.bf16.mxu0 0
    %2500 = vmatpush1.bf16.msra.mxu0 %v2345
    %2501 = vmatprep.subr.bf16.mxu0 0
    %2502 = vmatpush1.bf16.msra.mxu0 %v2346
    %2503 = vmatprep.subr.bf16.mxu0 0
    %2504 = vmatpush1.bf16.msra.mxu0 %v2347
    %2505 = vmatprep.subr.bf16.mxu0 0
    %2506 = vmatpush1.bf16.msra.mxu0 %v2348
    %2507 = vmatprep.subr.bf16.mxu0 0
    %2508 = vmatpush1.bf16.msra.mxu0 %v2349
    %2509 = vmatprep.subr.bf16.mxu0 0
    %2510 = vmatpush1.bf16.msra.mxu0 %v2350
    %2511 = vmatprep.subr.bf16.mxu0 0
    %2512 = vmatpush1.bf16.msra.mxu0 %v2351
    %2513 = vmatprep.subr.bf16.mxu0 0
    %2514 = vmatpush1.bf16.msra.mxu0 %v2352
    %2515 = vmatprep.subr.bf16.mxu0 0
    %2516 = vmatpush1.bf16.msra.mxu0 %v2353
    %2517 = vmatprep.subr.bf16.mxu0 0
    %2518 = vmatpush1.bf16.msra.mxu0 %v2354
    %2519 = vmatprep.subr.bf16.mxu0 0
    %2520 = vmatpush1.bf16.msra.mxu0 %v2355
    %2521 = vmatprep.subr.bf16.mxu0 0
    %2522 = vmatpush1.bf16.msra.mxu0 %v2356
    %2523 = vmatprep.subr.bf16.mxu0 0
    %2524 = vmatpush1.bf16.msra.mxu0 %v2357
    %2525 = vmatprep.subr.bf16.mxu0 0
    %2526 = vmatpush1.bf16.msra.mxu0 %v2358
    %2527 = vmatprep.subr.bf16.mxu0 0
    %2528 = vmatpush1.bf16.msra.mxu0 %v2359
    %2529 = vmatprep.mubr.bf16.mxu0 %v2311
    %2530 = vmatmul.mubr.bf16.gmra.mrb[0].mxu0 %v2310
    %v2531 = vpop.f32.mrb[0].mxu0
    %v2532 = vadd.f32 %v2492, %v2531
    %v2533 = vpop.f32.mrb[0].mxu0
    %v2534 = vpop.f32.mrb[0].mxu0
    %v2535 = vpop.f32.mrb[0].mxu0
    %2536 = vdwg.mxu0
    %2537 = vmatprep.subr.bf16.mxu0 0
    %2538 = vmatpush1.bf16.msra.mxu0 %v2360
    %2539 = vmatprep.subr.bf16.mxu0 0
    %2540 = vmatpush1.bf16.msra.mxu0 %v2361
    %2541 = vmatprep.subr.bf16.mxu0 0
    %2542 = vmatpush1.bf16.msra.mxu0 %v2362
    %2543 = vmatprep.subr.bf16.mxu0 0
    %2544 = vmatpush1.bf16.msra.mxu0 %v2363
    %2545 = vmatprep.subr.bf16.mxu0 0
    %2546 = vmatpush1.bf16.msra.mxu0 %v2364
    %2547 = vmatprep.subr.bf16.mxu0 0
    %2548 = vmatpush1.bf16.msra.mxu0 %v2365
    %2549 = vmatprep.subr.bf16.mxu0 0
    %2550 = vmatpush1.bf16.msra.mxu0 %v2366
    %2551 = vmatprep.subr.bf16.mxu0 0
    %2552 = vmatpush1.bf16.msra.mxu0 %v2367
    %2553 = vmatprep.subr.bf16.mxu0 0
    %2554 = vmatpush1.bf16.msra.mxu0 %v2368
    %2555 = vmatprep.subr.bf16.mxu0 0
    %2556 = vmatpush1.bf16.msra.mxu0 %v2369
    %2557 = vmatprep.subr.bf16.mxu0 0
    %2558 = vmatpush1.bf16.msra.mxu0 %v2370
    %2559 = vmatprep.subr.bf16.mxu0 0
    %2560 = vmatpush1.bf16.msra.mxu0 %v2371
    %2561 = vmatprep.subr.bf16.mxu0 0
    %2562 = vmatpush1.bf16.msra.mxu0 %v2372
    %2563 = vmatprep.subr.bf16.mxu0 0
    %2564 = vmatpush1.bf16.msra.mxu0 %v2373
    %2565 = vmatprep.subr.bf16.mxu0 0
    %2566 = vmatpush1.bf16.msra.mxu0 %v2374
    %2567 = vmatprep.subr.bf16.mxu0 0
    %2568 = vmatpush1.bf16.msra.mxu0 %v2375
    %2569 = vmatprep.mubr.bf16.mxu0 %v2313
    %2570 = vmatmul.mubr.bf16.gmra.mrb[0].mxu0 %v2312
    %v2571 = vpop.f32.mrb[0].mxu0
    %v2572 = vadd.f32 %v2532, %v2571
    %v2573 = vpop.f32.mrb[0].mxu0
    %v2574 = vpop.f32.mrb[0].mxu0
    %v2575 = vpop.f32.mrb[0].mxu0
    %2576 = vdwg.mxu0
    %2577 = vmatprep.subr.bf16.mxu0 0
    %2578 = vmatpush1.bf16.msra.mxu0 %v2376
    %2579 = vmatprep.subr.bf16.mxu0 0
    %2580 = vmatpush1.bf16.msra.mxu0 %v2377
    %2581 = vmatprep.subr.bf16.mxu0 0
    %2582 = vmatpush1.bf16.msra.mxu0 %v2378
    %2583 = vmatprep.subr.bf16.mxu0 0
    %2584 = vmatpush1.bf16.msra.mxu0 %v2379
    %2585 = vmatprep.subr.bf16.mxu0 0
    %2586 = vmatpush1.bf16.msra.mxu0 %v2380
    %2587 = vmatprep.subr.bf16.mxu0 0
    %2588 = vmatpush1.bf16.msra.mxu0 %v2381
    %2589 = vmatprep.subr.bf16.mxu0 0
    %2590 = vmatpush1.bf16.msra.mxu0 %v2382
    %2591 = vmatprep.subr.bf16.mxu0 0
    %2592 = vmatpush1.bf16.msra.mxu0 %v2383
    %2593 = vmatprep.subr.bf16.mxu0 0
    %2594 = vmatpush1.bf16.msra.mxu0 %v2384
    %2595 = vmatprep.subr.bf16.mxu0 0
    %2596 = vmatpush1.bf16.msra.mxu0 %v2385
    %2597 = vmatprep.subr.bf16.mxu0 0
    %2598 = vmatpush1.bf16.msra.mxu0 %v2386
    %2599 = vmatprep.subr.bf16.mxu0 0
    %2600 = vmatpush1.bf16.msra.mxu0 %v2387
    %2601 = vmatprep.subr.bf16.mxu0 0
    %2602 = vmatpush1.bf16.msra.mxu0 %v2388
    %2603 = vmatprep.subr.bf16.mxu0 0
    %2604 = vmatpush1.bf16.msra.mxu0 %v2389
    %2605 = vmatprep.subr.bf16.mxu0 0
    %2606 = vmatpush1.bf16.msra.mxu0 %v2390
    %2607 = vmatprep.subr.bf16.mxu0 0
    %2608 = vmatpush1.bf16.msra.mxu0 %v2391
    %2609 = vmatprep.mubr.bf16.mxu0 %v2315
    %2610 = vmatmul.mubr.bf16.gmra.mrb[0].mxu0 %v2314
    %v2611 = vpop.f32.mrb[0].mxu0
    %v2612 = vadd.f32 %v2572, %v2611
    %v2613 = vpop.f32.mrb[0].mxu0
    %v2614 = vpop.f32.mrb[0].mxu0
    %v2615 = vpop.f32.mrb[0].mxu0
    %2616 = vdwg.mxu0
    %2617 = vmatprep.subr.bf16.mxu0 0
    %2618 = vmatpush1.bf16.msra.mxu0 %v2392
    %2619 = vmatprep.subr.bf16.mxu0 0
    %2620 = vmatpush1.bf16.msra.mxu0 %v2393
    %2621 = vmatprep.subr.bf16.mxu0 0
    %2622 = vmatpush1.bf16.msra.mxu0 %v2394
    %2623 = vmatprep.subr.bf16.mxu0 0
    %2624 = vmatpush1.bf16.msra.mxu0 %v2395
    %2625 = vmatprep.subr.bf16.mxu0 0
    %2626 = vmatpush1.bf16.msra.mxu0 %v2396
    %2627 = vmatprep.subr.bf16.mxu0 0
    %2628 = vmatpush1.bf16.msra.mxu0 %v2397
    %2629 = vmatprep.subr.bf16.mxu0 0
    %2630 = vmatpush1.bf16.msra.mxu0 %v2398
    %2631 = vmatprep.subr.bf16.mxu0 0
    %2632 = vmatpush1.bf16.msra.mxu0 %v2399
    %2633 = vmatprep.subr.bf16.mxu0 0
    %2634 = vmatpush1.bf16.msra.mxu0 %v2400
    %2635 = vmatprep.subr.bf16.mxu0 0
    %2636 = vmatpush1.bf16.msra.mxu0 %v2401
    %2637 = vmatprep.subr.bf16.mxu0 0
    %2638 = vmatpush1.bf16.msra.mxu0 %v2402
    %2639 = vmatprep.subr.bf16.mxu0 0
    %2640 = vmatpush1.bf16.msra.mxu0 %v2403
    %2641 = vmatprep.subr.bf16.mxu0 0
    %2642 = vmatpush1.bf16.msra.mxu0 %v2404
    %2643 = vmatprep.subr.bf16.mxu0 0
    %2644 = vmatpush1.bf16.msra.mxu0 %v2405
    %2645 = vmatprep.subr.bf16.mxu0 0
    %2646 = vmatpush1.bf16.msra.mxu0 %v2406
    %2647 = vmatprep.subr.bf16.mxu0 0
    %2648 = vmatpush1.bf16.msra.mxu0 %v2407
    %2649 = vmatprep.mubr.bf16.mxu0 %v2317
    %2650 = vmatmul.mubr.bf16.gmra.mrb[0].mxu0 %v2316
    %v2651 = vpop.f32.mrb[0].mxu0
    %v2652 = vadd.f32 %v2612, %v2651
    %v2653 = vpop.f32.mrb[0].mxu0
    %v2654 = vpop.f32.mrb[0].mxu0
    %v2655 = vpop.f32.mrb[0].mxu0
    %2656 = vdwg.mxu0
    %2657 = vmatprep.subr.bf16.mxu0 0
    %2658 = vmatpush1.bf16.msra.mxu0 %v2408
    %2659 = vmatprep.subr.bf16.mxu0 0
    %2660 = vmatpush1.bf16.msra.mxu0 %v2409
    %2661 = vmatprep.subr.bf16.mxu0 0
    %2662 = vmatpush1.bf16.msra.mxu0 %v2410
    %2663 = vmatprep.subr.bf16.mxu0 0
    %2664 = vmatpush1.bf16.msra.mxu0 %v2411
    %2665 = vmatprep.subr.bf16.mxu0 0
    %2666 = vmatpush1.bf16.msra.mxu0 %v2412
    %2667 = vmatprep.subr.bf16.mxu0 0
    %2668 = vmatpush1.bf16.msra.mxu0 %v2413
    %2669 = vmatprep.subr.bf16.mxu0 0
    %2670 = vmatpush1.bf16.msra.mxu0 %v2414
    %2671 = vmatprep.subr.bf16.mxu0 0
    %2672 = vmatpush1.bf16.msra.mxu0 %v2415
    %2673 = vmatprep.subr.bf16.mxu0 0
    %2674 = vmatpush1.bf16.msra.mxu0 %v2416
    %2675 = vmatprep.subr.bf16.mxu0 0
    %2676 = vmatpush1.bf16.msra.mxu0 %v2417
    %2677 = vmatprep.subr.bf16.mxu0 0
    %2678 = vmatpush1.bf16.msra.mxu0 %v2418
    %2679 = vmatprep.subr.bf16.mxu0 0
    %2680 = vmatpush1.bf16.msra.mxu0 %v2419
    %2681 = vmatprep.subr.bf16.mxu0 0
    %2682 = vmatpush1.bf16.msra.mxu0 %v2420
    %2683 = vmatprep.subr.bf16.mxu0 0
    %2684 = vmatpush1.bf16.msra.mxu0 %v2421
    %2685 = vmatprep.subr.bf16.mxu0 0
    %2686 = vmatpush1.bf16.msra.mxu0 %v2422
    %2687 = vmatprep.subr.bf16.mxu0 0
    %2688 = vmatpush1.bf16.msra.mxu0 %v2423
    %2689 = vmatprep.mubr.bf16.mxu0 %v2319
    %2690 = vmatmul.mubr.bf16.gmra.mrb[0].mxu0 %v2318
    %v2691 = vpop.f32.mrb[0].mxu0
    %v2692 = vadd.f32 %v2652, %v2691
    %v2693 = vpop.f32.mrb[0].mxu0
    %v2694 = vpop.f32.mrb[0].mxu0
    %v2695 = vpop.f32.mrb[0].mxu0
    %2696 = vdwg.mxu0
    %2697 = vmatprep.subr.bf16.mxu0 0
    %2698 = vmatpush1.bf16.msra.mxu0 %v2424
    %2699 = vmatprep.subr.bf16.mxu0 0
    %2700 = vmatpush1.bf16.msra.mxu0 %v2425
    %2701 = vmatprep.subr.bf16.mxu0 0
    %2702 = vmatpush1.bf16.msra.mxu0 %v2426
    %2703 = vmatprep.subr.bf16.mxu0 0
    %2704 = vmatpush1.bf16.msra.mxu0 %v2427
    %2705 = vmatprep.subr.bf16.mxu0 0
    %2706 = vmatpush1.bf16.msra.mxu0 %v2428
    %2707 = vmatprep.subr.bf16.mxu0 0
    %2708 = vmatpush1.bf16.msra.mxu0 %v2429
    %2709 = vmatprep.subr.bf16.mxu0 0
    %2710 = vmatpush1.bf16.msra.mxu0 %v2430
    %2711 = vmatprep.subr.bf16.mxu0 0
    %2712 = vmatpush1.bf16.msra.mxu0 %v2431
    %2713 = vmatprep.subr.bf16.mxu0 0
    %2714 = vmatpush1.bf16.msra.mxu0 %v2432
    %2715 = vmatprep.subr.bf16.mxu0 0
    %2716 = vmatpush1.bf16.msra.mxu0 %v2433
    %2717 = vmatprep.subr.bf16.mxu0 0
    %2718 = vmatpush1.bf16.msra.mxu0 %v2434
    %2719 = vmatprep.subr.bf16.mxu0 0
    %2720 = vmatpush1.bf16.msra.mxu0 %v2435
    %2721 = vmatprep.subr.bf16.mxu0 0
    %2722 = vmatpush1.bf16.msra.mxu0 %v2436
    %2723 = vmatprep.subr.bf16.mxu0 0
    %2724 = vmatpush1.bf16.msra.mxu0 %v2437
    %2725 = vmatprep.subr.bf16.mxu0 0
    %2726 = vmatpush1.bf16.msra.mxu0 %v2438
    %2727 = vmatprep.subr.bf16.mxu0 0
    %2728 = vmatpush1.bf16.msra.mxu0 %v2439
    %2729 = vmatprep.mubr.bf16.mxu0 %v2321
    %2730 = vmatmul.mubr.bf16.gmra.mrb[0].mxu0 %v2320
    %v2731 = vpop.f32.mrb[0].mxu0
    %v2732 = vadd.f32 %v2692, %v2731
    %v2733 = vpop.f32.mrb[0].mxu0
    %v2734 = vpop.f32.mrb[0].mxu0
    %v2735 = vpop.f32.mrb[0].mxu0
    %2736 = vdwg.mxu0
    %2737 = vmatprep.subr.bf16.mxu0 0
    %2738 = vmatpush1.bf16.msra.mxu0 %v2440
    %2739 = vmatprep.subr.bf16.mxu0 0
    %2740 = vmatpush1.bf16.msra.mxu0 %v2441
    %2741 = vmatprep.subr.bf16.mxu0 0
    %2742 = vmatpush1.bf16.msra.mxu0 %v2442
    %2743 = vmatprep.subr.bf16.mxu0 0
    %2744 = vmatpush1.bf16.msra.mxu0 %v2443
    %2745 = vmatprep.subr.bf16.mxu0 0
    %2746 = vmatpush1.bf16.msra.mxu0 %v2444
    %2747 = vmatprep.subr.bf16.mxu0 0
    %2748 = vmatpush1.bf16.msra.mxu0 %v2445
    %2749 = vmatprep.subr.bf16.mxu0 0
    %2750 = vmatpush1.bf16.msra.mxu0 %v2446
    %2751 = vmatprep.subr.bf16.mxu0 0
    %2752 = vmatpush1.bf16.msra.mxu0 %v2447
    %2753 = vmatprep.subr.bf16.mxu0 0
    %2754 = vmatpush1.bf16.msra.mxu0 %v2448
    %2755 = vmatprep.subr.bf16.mxu0 0
    %2756 = vmatpush1.bf16.msra.mxu0 %v2449
    %2757 = vmatprep.subr.bf16.mxu0 0
    %2758 = vmatpush1.bf16.msra.mxu0 %v2450
    %2759 = vmatprep.subr.bf16.mxu0 0
    %2760 = vmatpush1.bf16.msra.mxu0 %v2451
    %2761 = vmatprep.subr.bf16.mxu0 0
    %2762 = vmatpush1.bf16.msra.mxu0 %v2452
    %2763 = vmatprep.subr.bf16.mxu0 0
    %2764 = vmatpush1.bf16.msra.mxu0 %v2453
    %2765 = vmatprep.subr.bf16.mxu0 0
    %2766 = vmatpush1.bf16.msra.mxu0 %v2454
    %2767 = vmatprep.subr.bf16.mxu0 0
    %2768 = vmatpush1.bf16.msra.mxu0 %v2455
    %2769 = vmatprep.mubr.bf16.mxu0 %v2323
    %2770 = vmatmul.mubr.bf16.gmra.mrb[0].mxu0 %v2322
    %v2771 = vpop.f32.mrb[0].mxu0
    %v2772 = vadd.f32 %v2732, %v2771
    %v2773 = vpop.f32.mrb[0].mxu0
    %v2774 = vpop.f32.mrb[0].mxu0
    %v2775 = vpop.f32.mrb[0].mxu0
    %2776 = vdwg.mxu0
    %vm2777 = vcmask 261120
    %2778 = vst.msk [vmem:[%s10] sm:$0xff] %vm2777, %v2772
    %v2779 = vpack.c.bf16 %v2772, %v2772
    %s2780 = smul.u32 4, 4
    %s2781 = smul.u32 %s2780, 16
    %s2782 = sshll.u32 %s2781, 4
    %2783 = dma.done %s449, %s2782
    %v2784 = vld [vmem:[#allocation6] sm:$0xff]
    %v2785 = vld [vmem:[#allocation6 + $0x8] sm:$0xff]
    %v2786 = vld [vmem:[#allocation6 + $0x10] sm:$0xff]
    %v2787 = vld [vmem:[#allocation6 + $0x18] sm:$0xff]
    %v2788 = vld [vmem:[#allocation6 + $0x20] sm:$0xff]
    %v2789 = vld [vmem:[#allocation6 + $0x28] sm:$0xff]
    %v2790 = vld [vmem:[#allocation6 + $0x30] sm:$0xff]
    %v2791 = vld [vmem:[#allocation6 + $0x38] sm:$0xff]
    %v2792 = vld [vmem:[#allocation6 + $0x40] sm:$0xff]
    %v2793 = vld [vmem:[#allocation6 + $0x48] sm:$0xff]
    %v2794 = vld [vmem:[#allocation6 + $0x50] sm:$0xff]
    %v2795 = vld [vmem:[#allocation6 + $0x58] sm:$0xff]
    %v2796 = vld [vmem:[#allocation6 + $0x60] sm:$0xff]
    %v2797 = vld [vmem:[#allocation6 + $0x68] sm:$0xff]
    %v2798 = vld [vmem:[#allocation6 + $0x70] sm:$0xff]
    %v2799 = vld [vmem:[#allocation6 + $0x78] sm:$0xff]
    %v2800 = vld [vmem:[#allocation6 + $0x80] sm:$0xff]
    %v2801 = vld [vmem:[#allocation6 + $0x88] sm:$0xff]
    %v2802 = vld [vmem:[#allocation6 + $0x90] sm:$0xff]
    %v2803 = vld [vmem:[#allocation6 + $0x98] sm:$0xff]
    %v2804 = vld [vmem:[#allocation6 + $0xa0] sm:$0xff]
    %v2805 = vld [vmem:[#allocation6 + $0xa8] sm:$0xff]
    %v2806 = vld [vmem:[#allocation6 + $0xb0] sm:$0xff]
    %v2807 = vld [vmem:[#allocation6 + $0xb8] sm:$0xff]
    %v2808 = vld [vmem:[#allocation6 + $0xc0] sm:$0xff]
    %v2809 = vld [vmem:[#allocation6 + $0xc8] sm:$0xff]
    %v2810 = vld [vmem:[#allocation6 + $0xd0] sm:$0xff]
    %v2811 = vld [vmem:[#allocation6 + $0xd8] sm:$0xff]
    %v2812 = vld [vmem:[#allocation6 + $0xe0] sm:$0xff]
    %v2813 = vld [vmem:[#allocation6 + $0xe8] sm:$0xff]
    %v2814 = vld [vmem:[#allocation6 + $0xf0] sm:$0xff]
    %v2815 = vld [vmem:[#allocation6 + $0xf8] sm:$0xff]
    %s2816 = scalar_lea.vmem [#allocation14], 4
    %v2817 = vld [vmem:[%s2816] ss:$8 sm:$0xf]
    %v2818 = vld [vmem:[%s2816] ss:$8 sm:$0xf0]
    %v2819 = vor.u32 %v2817, %v2818
    %s2820 = scalar_lea.vmem [#allocation14], 68
    %v2821 = vld [vmem:[%s2820] ss:$8 sm:$0xf]
    %v2822 = vld [vmem:[%s2820] ss:$8 sm:$0xf0]
    %v2823 = vor.u32 %v2821, %v2822
    %v2826 = vlaneseq
    %v2827 = vshrl.u32 %v2826, 7
    %v2828 = vsub.s32 0, %v2827
    %v2829 = vrot.slane %v2819, %v2828
    %v2830 = vlaneseq
    %v2831 = vshrl.u32 %v2830, 7
    %v2832 = vsub.s32 1, %v2831
    %v2833 = vrot.slane %v2819, %v2832
    %v2834 = vlaneseq
    %v2835 = vshrl.u32 %v2834, 7
    %v2836 = vsub.s32 2, %v2835
    %v2837 = vrot.slane %v2819, %v2836
    %v2838 = vlaneseq
    %v2839 = vshrl.u32 %v2838, 7
    %v2840 = vsub.s32 3, %v2839
    %v2841 = vrot.slane %v2819, %v2840
    %v2842 = vlaneseq
    %v2843 = vshrl.u32 %v2842, 7
    %v2844 = vsub.s32 4, %v2843
    %v2845 = vrot.slane %v2819, %v2844
    %v2846 = vlaneseq
    %v2847 = vshrl.u32 %v2846, 7
    %v2848 = vsub.s32 5, %v2847
    %v2849 = vrot.slane %v2819, %v2848
    %v2850 = vlaneseq
    %v2851 = vshrl.u32 %v2850, 7
    %v2852 = vsub.s32 6, %v2851
    %v2853 = vrot.slane %v2819, %v2852
    %v2854 = vlaneseq
    %v2855 = vshrl.u32 %v2854, 7
    %v2856 = vsub.s32 7, %v2855
    %v2857 = vrot.slane %v2819, %v2856
    %v2858 = vlaneseq
    %v2859 = vshrl.u32 %v2858, 7
    %v2860 = vsub.s32 0, %v2859
    %v2861 = vrot.slane %v2823, %v2860
    %v2862 = vlaneseq
    %v2863 = vshrl.u32 %v2862, 7
    %v2864 = vsub.s32 1, %v2863
    %v2865 = vrot.slane %v2823, %v2864
    %v2866 = vlaneseq
    %v2867 = vshrl.u32 %v2866, 7
    %v2868 = vsub.s32 2, %v2867
    %v2869 = vrot.slane %v2823, %v2868
    %v2870 = vlaneseq
    %v2871 = vshrl.u32 %v2870, 7
    %v2872 = vsub.s32 3, %v2871
    %v2873 = vrot.slane %v2823, %v2872
    %v2874 = vlaneseq
    %v2875 = vshrl.u32 %v2874, 7
    %v2876 = vsub.s32 4, %v2875
    %v2877 = vrot.slane %v2823, %v2876
    %v2878 = vlaneseq
    %v2879 = vshrl.u32 %v2878, 7
    %v2880 = vsub.s32 5, %v2879
    %v2881 = vrot.slane %v2823, %v2880
    %v2882 = vlaneseq
    %v2883 = vshrl.u32 %v2882, 7
    %v2884 = vsub.s32 6, %v2883
    %v2885 = vrot.slane %v2823, %v2884
    %v2886 = vlaneseq
    %v2887 = vshrl.u32 %v2886, 7
    %v2888 = vsub.s32 7, %v2887
    %v2889 = vrot.slane %v2823, %v2888
    %v2907 = vsel %vm2777, %v2779, 0
    %2909 = vmatprep.subr.bf16.mxu0 %v2785
    %2910 = vmatpush1.bf16.msra.mxu0 %v2784
    %2911 = vmatprep.subr.bf16.mxu0 %v2801
    %2912 = vmatpush1.bf16.msra.mxu0 %v2800
    %2913 = vmatprep.subr.bf16.mxu0 0
    %2914 = vmatpush1.bf16.msra.mxu0 0
    %2915 = vmatprep.subr.bf16.mxu0 0
    %2916 = vmatpush1.bf16.msra.mxu0 0
    %2917 = vmatprep.subr.bf16.mxu0 0
    %2918 = vmatpush1.bf16.msra.mxu0 0
    %2919 = vmatprep.subr.bf16.mxu0 0
    %2920 = vmatpush1.bf16.msra.mxu0 0
    %2921 = vmatprep.subr.bf16.mxu0 0
    %2922 = vmatpush1.bf16.msra.mxu0 0
    %2923 = vmatprep.subr.bf16.mxu0 0
    %2924 = vmatpush1.bf16.msra.mxu0 0
    %2925 = vmatprep.subr.bf16.mxu0 0
    %2926 = vmatpush1.bf16.msra.mxu0 0
    %2927 = vmatprep.subr.bf16.mxu0 0
    %2928 = vmatpush1.bf16.msra.mxu0 0
    %2929 = vmatprep.subr.bf16.mxu0 0
    %2930 = vmatpush1.bf16.msra.mxu0 0
    %2931 = vmatprep.subr.bf16.mxu0 0
    %2932 = vmatpush1.bf16.msra.mxu0 0
    %2933 = vmatprep.subr.bf16.mxu0 0
    %2934 = vmatpush1.bf16.msra.mxu0 0
    %2935 = vmatprep.subr.bf16.mxu0 0
    %2936 = vmatpush1.bf16.msra.mxu0 0
    %2937 = vmatprep.subr.bf16.mxu0 0
    %2938 = vmatpush1.bf16.msra.mxu0 0
    %2939 = vmatprep.subr.bf16.mxu0 0
    %2940 = vmatpush1.bf16.msra.mxu0 0
    %2941 = vmatprep.mubr.bf16.mxu0 0
    %2942 = vmatmul.mubr.bf16.gmra.mrb[0].mxu0 %v2907
    %v2943 = vpop.f32.mrb[0].mxu0
    %v2944 = vadd.f32 %v2829, %v2943
    %v2945 = vpop.f32.mrb[0].mxu0
    %v2946 = vadd.f32 %v2833, %v2945
    %v2947 = vpop.f32.mrb[0].mxu0
    %v2948 = vpop.f32.mrb[0].mxu0
    %2949 = vdwg.mxu0
    %2950 = vmatprep.subr.bf16.mxu0 %v2787
    %2951 = vmatpush1.bf16.msra.mxu0 %v2786
    %2952 = vmatprep.subr.bf16.mxu0 %v2803
    %2953 = vmatpush1.bf16.msra.mxu0 %v2802
    %2954 = vmatprep.subr.bf16.mxu0 0
    %2955 = vmatpush1.bf16.msra.mxu0 0
    %2956 = vmatprep.subr.bf16.mxu0 0
    %2957 = vmatpush1.bf16.msra.mxu0 0
    %2958 = vmatprep.subr.bf16.mxu0 0
    %2959 = vmatpush1.bf16.msra.mxu0 0
    %2960 = vmatprep.subr.bf16.mxu0 0
    %2961 = vmatpush1.bf16.msra.mxu0 0
    %2962 = vmatprep.subr.bf16.mxu0 0
    %2963 = vmatpush1.bf16.msra.mxu0 0
    %2964 = vmatprep.subr.bf16.mxu0 0
    %2965 = vmatpush1.bf16.msra.mxu0 0
    %2966 = vmatprep.subr.bf16.mxu0 0
    %2967 = vmatpush1.bf16.msra.mxu0 0
    %2968 = vmatprep.subr.bf16.mxu0 0
    %2969 = vmatpush1.bf16.msra.mxu0 0
    %2970 = vmatprep.subr.bf16.mxu0 0
    %2971 = vmatpush1.bf16.msra.mxu0 0
    %2972 = vmatprep.subr.bf16.mxu0 0
    %2973 = vmatpush1.bf16.msra.mxu0 0
    %2974 = vmatprep.subr.bf16.mxu0 0
    %2975 = vmatpush1.bf16.msra.mxu0 0
    %2976 = vmatprep.subr.bf16.mxu0 0
    %2977 = vmatpush1.bf16.msra.mxu0 0
    %2978 = vmatprep.subr.bf16.mxu0 0
    %2979 = vmatpush1.bf16.msra.mxu0 0
    %2980 = vmatprep.subr.bf16.mxu0 0
    %2981 = vmatpush1.bf16.msra.mxu0 0
    %2982 = vmatprep.mubr.bf16.mxu0 0
    %2983 = vmatmul.mubr.bf16.gmra.mrb[0].mxu0 %v2907
    %v2984 = vpop.f32.mrb[0].mxu0
    %v2985 = vadd.f32 %v2837, %v2984
    %v2986 = vpop.f32.mrb[0].mxu0
    %v2987 = vadd.f32 %v2841, %v2986
    %v2988 = vpop.f32.mrb[0].mxu0
    %v2989 = vpop.f32.mrb[0].mxu0
    %2990 = vdwg.mxu0
    %2991 = vmatprep.subr.bf16.mxu0 %v2789
    %2992 = vmatpush1.bf16.msra.mxu0 %v2788
    %2993 = vmatprep.subr.bf16.mxu0 %v2805
    %2994 = vmatpush1.bf16.msra.mxu0 %v2804
    %2995 = vmatprep.subr.bf16.mxu0 0
    %2996 = vmatpush1.bf16.msra.mxu0 0
    %2997 = vmatprep.subr.bf16.mxu0 0
    %2998 = vmatpush1.bf16.msra.mxu0 0
    %2999 = vmatprep.subr.bf16.mxu0 0
    %3000 = vmatpush1.bf16.msra.mxu0 0
    %3001 = vmatprep.subr.bf16.mxu0 0
    %3002 = vmatpush1.bf16.msra.mxu0 0
    %3003 = vmatprep.subr.bf16.mxu0 0
    %3004 = vmatpush1.bf16.msra.mxu0 0
    %3005 = vmatprep.subr.bf16.mxu0 0
    %3006 = vmatpush1.bf16.msra.mxu0 0
    %3007 = vmatprep.subr.bf16.mxu0 0
    %3008 = vmatpush1.bf16.msra.mxu0 0
    %3009 = vmatprep.subr.bf16.mxu0 0
    %3010 = vmatpush1.bf16.msra.mxu0 0
    %3011 = vmatprep.subr.bf16.mxu0 0
    %3012 = vmatpush1.bf16.msra.mxu0 0
    %3013 = vmatprep.subr.bf16.mxu0 0
    %3014 = vmatpush1.bf16.msra.mxu0 0
    %3015 = vmatprep.subr.bf16.mxu0 0
    %3016 = vmatpush1.bf16.msra.mxu0 0
    %3017 = vmatprep.subr.bf16.mxu0 0
    %3018 = vmatpush1.bf16.msra.mxu0 0
    %3019 = vmatprep.subr.bf16.mxu0 0
    %3020 = vmatpush1.bf16.msra.mxu0 0
    %3021 = vmatprep.subr.bf16.mxu0 0
    %3022 = vmatpush1.bf16.msra.mxu0 0
    %3023 = vmatprep.mubr.bf16.mxu0 0
    %3024 = vmatmul.mubr.bf16.gmra.mrb[0].mxu0 %v2907
    %v3025 = vpop.f32.mrb[0].mxu0
    %v3026 = vadd.f32 %v2845, %v3025
    %v3027 = vpop.f32.mrb[0].mxu0
    %v3028 = vadd.f32 %v2849, %v3027
    %v3029 = vpop.f32.mrb[0].mxu0
    %v3030 = vpop.f32.mrb[0].mxu0
    %3031 = vdwg.mxu0
    %3032 = vmatprep.subr.bf16.mxu0 %v2791
    %3033 = vmatpush1.bf16.msra.mxu0 %v2790
    %3034 = vmatprep.subr.bf16.mxu0 %v2807
    %3035 = vmatpush1.bf16.msra.mxu0 %v2806
    %3036 = vmatprep.subr.bf16.mxu0 0
    %3037 = vmatpush1.bf16.msra.mxu0 0
    %3038 = vmatprep.subr.bf16.mxu0 0
    %3039 = vmatpush1.bf16.msra.mxu0 0
    %3040 = vmatprep.subr.bf16.mxu0 0
    %3041 = vmatpush1.bf16.msra.mxu0 0
    %3042 = vmatprep.subr.bf16.mxu0 0
    %3043 = vmatpush1.bf16.msra.mxu0 0
    %3044 = vmatprep.subr.bf16.mxu0 0
    %3045 = vmatpush1.bf16.msra.mxu0 0
    %3046 = vmatprep.subr.bf16.mxu0 0
    %3047 = vmatpush1.bf16.msra.mxu0 0
    %3048 = vmatprep.subr.bf16.mxu0 0
    %3049 = vmatpush1.bf16.msra.mxu0 0
    %3050 = vmatprep.subr.bf16.mxu0 0
    %3051 = vmatpush1.bf16.msra.mxu0 0
    %3052 = vmatprep.subr.bf16.mxu0 0
    %3053 = vmatpush1.bf16.msra.mxu0 0
    %3054 = vmatprep.subr.bf16.mxu0 0
    %3055 = vmatpush1.bf16.msra.mxu0 0
    %3056 = vmatprep.subr.bf16.mxu0 0
    %3057 = vmatpush1.bf16.msra.mxu0 0
    %3058 = vmatprep.subr.bf16.mxu0 0
    %3059 = vmatpush1.bf16.msra.mxu0 0
    %3060 = vmatprep.subr.bf16.mxu0 0
    %3061 = vmatpush1.bf16.msra.mxu0 0
    %3062 = vmatprep.subr.bf16.mxu0 0
    %3063 = vmatpush1.bf16.msra.mxu0 0
    %3064 = vmatprep.mubr.bf16.mxu0 0
    %3065 = vmatmul.mubr.bf16.gmra.mrb[0].mxu0 %v2907
    %v3066 = vpop.f32.mrb[0].mxu0
    %v3067 = vadd.f32 %v2853, %v3066
    %v3068 = vpop.f32.mrb[0].mxu0
    %v3069 = vadd.f32 %v2857, %v3068
    %v3070 = vpop.f32.mrb[0].mxu0
    %v3071 = vpop.f32.mrb[0].mxu0
    %3072 = vdwg.mxu0
    %3073 = vmatprep.subr.bf16.mxu0 %v2793
    %3074 = vmatpush1.bf16.msra.mxu0 %v2792
    %3075 = vmatprep.subr.bf16.mxu0 %v2809
    %3076 = vmatpush1.bf16.msra.mxu0 %v2808
    %3077 = vmatprep.subr.bf16.mxu0 0
    %3078 = vmatpush1.bf16.msra.mxu0 0
    %3079 = vmatprep.subr.bf16.mxu0 0
    %3080 = vmatpush1.bf16.msra.mxu0 0
    %3081 = vmatprep.subr.bf16.mxu0 0
    %3082 = vmatpush1.bf16.msra.mxu0 0
    %3083 = vmatprep.subr.bf16.mxu0 0
    %3084 = vmatpush1.bf16.msra.mxu0 0
    %3085 = vmatprep.subr.bf16.mxu0 0
    %3086 = vmatpush1.bf16.msra.mxu0 0
    %3087 = vmatprep.subr.bf16.mxu0 0
    %3088 = vmatpush1.bf16.msra.mxu0 0
    %3089 = vmatprep.subr.bf16.mxu0 0
    %3090 = vmatpush1.bf16.msra.mxu0 0
    %3091 = vmatprep.subr.bf16.mxu0 0
    %3092 = vmatpush1.bf16.msra.mxu0 0
    %3093 = vmatprep.subr.bf16.mxu0 0
    %3094 = vmatpush1.bf16.msra.mxu0 0
    %3095 = vmatprep.subr.bf16.mxu0 0
    %3096 = vmatpush1.bf16.msra.mxu0 0
    %3097 = vmatprep.subr.bf16.mxu0 0
    %3098 = vmatpush1.bf16.msra.mxu0 0
    %3099 = vmatprep.subr.bf16.mxu0 0
    %3100 = vmatpush1.bf16.msra.mxu0 0
    %3101 = vmatprep.subr.bf16.mxu0 0
    %3102 = vmatpush1.bf16.msra.mxu0 0
    %3103 = vmatprep.subr.bf16.mxu0 0
    %3104 = vmatpush1.bf16.msra.mxu0 0
    %3105 = vmatprep.mubr.bf16.mxu0 0
    %3106 = vmatmul.mubr.bf16.gmra.mrb[0].mxu0 %v2907
    %v3107 = vpop.f32.mrb[0].mxu0
    %v3108 = vadd.f32 %v2861, %v3107
    %v3109 = vpop.f32.mrb[0].mxu0
    %v3110 = vadd.f32 %v2865, %v3109
    %v3111 = vpop.f32.mrb[0].mxu0
    %v3112 = vpop.f32.mrb[0].mxu0
    %3113 = vdwg.mxu0
    %3114 = vmatprep.subr.bf16.mxu0 %v2795
    %3115 = vmatpush1.bf16.msra.mxu0 %v2794
    %3116 = vmatprep.subr.bf16.mxu0 %v2811
    %3117 = vmatpush1.bf16.msra.mxu0 %v2810
    %3118 = vmatprep.subr.bf16.mxu0 0
    %3119 = vmatpush1.bf16.msra.mxu0 0
    %3120 = vmatprep.subr.bf16.mxu0 0
    %3121 = vmatpush1.bf16.msra.mxu0 0
    %3122 = vmatprep.subr.bf16.mxu0 0
    %3123 = vmatpush1.bf16.msra.mxu0 0
    %3124 = vmatprep.subr.bf16.mxu0 0
    %3125 = vmatpush1.bf16.msra.mxu0 0
    %3126 = vmatprep.subr.bf16.mxu0 0
    %3127 = vmatpush1.bf16.msra.mxu0 0
    %3128 = vmatprep.subr.bf16.mxu0 0
    %3129 = vmatpush1.bf16.msra.mxu0 0
    %3130 = vmatprep.subr.bf16.mxu0 0
    %3131 = vmatpush1.bf16.msra.mxu0 0
    %3132 = vmatprep.subr.bf16.mxu0 0
    %3133 = vmatpush1.bf16.msra.mxu0 0
    %3134 = vmatprep.subr.bf16.mxu0 0
    %3135 = vmatpush1.bf16.msra.mxu0 0
    %3136 = vmatprep.subr.bf16.mxu0 0
    %3137 = vmatpush1.bf16.msra.mxu0 0
    %3138 = vmatprep.subr.bf16.mxu0 0
    %3139 = vmatpush1.bf16.msra.mxu0 0
    %3140 = vmatprep.subr.bf16.mxu0 0
    %3141 = vmatpush1.bf16.msra.mxu0 0
    %3142 = vmatprep.subr.bf16.mxu0 0
    %3143 = vmatpush1.bf16.msra.mxu0 0
    %3144 = vmatprep.subr.bf16.mxu0 0
    %3145 = vmatpush1.bf16.msra.mxu0 0
    %3146 = vmatprep.mubr.bf16.mxu0 0
    %3147 = vmatmul.mubr.bf16.gmra.mrb[0].mxu0 %v2907
    %v3148 = vpop.f32.mrb[0].mxu0
    %v3149 = vadd.f32 %v2869, %v3148
    %v3150 = vpop.f32.mrb[0].mxu0
    %v3151 = vadd.f32 %v2873, %v3150
    %v3152 = vpop.f32.mrb[0].mxu0
    %v3153 = vpop.f32.mrb[0].mxu0
    %3154 = vdwg.mxu0
    %3155 = vmatprep.subr.bf16.mxu0 %v2797
    %3156 = vmatpush1.bf16.msra.mxu0 %v2796
    %3157 = vmatprep.subr.bf16.mxu0 %v2813
    %3158 = vmatpush1.bf16.msra.mxu0 %v2812
    %3159 = vmatprep.subr.bf16.mxu0 0
    %3160 = vmatpush1.bf16.msra.mxu0 0
    %3161 = vmatprep.subr.bf16.mxu0 0
    %3162 = vmatpush1.bf16.msra.mxu0 0
    %3163 = vmatprep.subr.bf16.mxu0 0
    %3164 = vmatpush1.bf16.msra.mxu0 0
    %3165 = vmatprep.subr.bf16.mxu0 0
    %3166 = vmatpush1.bf16.msra.mxu0 0
    %3167 = vmatprep.subr.bf16.mxu0 0
    %3168 = vmatpush1.bf16.msra.mxu0 0
    %3169 = vmatprep.subr.bf16.mxu0 0
    %3170 = vmatpush1.bf16.msra.mxu0 0
    %3171 = vmatprep.subr.bf16.mxu0 0
    %3172 = vmatpush1.bf16.msra.mxu0 0
    %3173 = vmatprep.subr.bf16.mxu0 0
    %3174 = vmatpush1.bf16.msra.mxu0 0
    %3175 = vmatprep.subr.bf16.mxu0 0
    %3176 = vmatpush1.bf16.msra.mxu0 0
    %3177 = vmatprep.subr.bf16.mxu0 0
    %3178 = vmatpush1.bf16.msra.mxu0 0
    %3179 = vmatprep.subr.bf16.mxu0 0
    %3180 = vmatpush1.bf16.msra.mxu0 0
    %3181 = vmatprep.subr.bf16.mxu0 0
    %3182 = vmatpush1.bf16.msra.mxu0 0
    %3183 = vmatprep.subr.bf16.mxu0 0
    %3184 = vmatpush1.bf16.msra.mxu0 0
    %3185 = vmatprep.subr.bf16.mxu0 0
    %3186 = vmatpush1.bf16.msra.mxu0 0
    %3187 = vmatprep.mubr.bf16.mxu0 0
    %3188 = vmatmul.mubr.bf16.gmra.mrb[0].mxu0 %v2907
    %v3189 = vpop.f32.mrb[0].mxu0
    %v3190 = vadd.f32 %v2877, %v3189
    %v3191 = vpop.f32.mrb[0].mxu0
    %v3192 = vadd.f32 %v2881, %v3191
    %v3193 = vpop.f32.mrb[0].mxu0
    %v3194 = vpop.f32.mrb[0].mxu0
    %3195 = vdwg.mxu0
    %3196 = vmatprep.subr.bf16.mxu0 %v2799
    %3197 = vmatpush1.bf16.msra.mxu0 %v2798
    %3198 = vmatprep.subr.bf16.mxu0 %v2815
    %3199 = vmatpush1.bf16.msra.mxu0 %v2814
    %3200 = vmatprep.subr.bf16.mxu0 0
    %3201 = vmatpush1.bf16.msra.mxu0 0
    %3202 = vmatprep.subr.bf16.mxu0 0
    %3203 = vmatpush1.bf16.msra.mxu0 0
    %3204 = vmatprep.subr.bf16.mxu0 0
    %3205 = vmatpush1.bf16.msra.mxu0 0
    %3206 = vmatprep.subr.bf16.mxu0 0
    %3207 = vmatpush1.bf16.msra.mxu0 0
    %3208 = vmatprep.subr.bf16.mxu0 0
    %3209 = vmatpush1.bf16.msra.mxu0 0
    %3210 = vmatprep.subr.bf16.mxu0 0
    %3211 = vmatpush1.bf16.msra.mxu0 0
    %3212 = vmatprep.subr.bf16.mxu0 0
    %3213 = vmatpush1.bf16.msra.mxu0 0
    %3214 = vmatprep.subr.bf16.mxu0 0
    %3215 = vmatpush1.bf16.msra.mxu0 0
    %3216 = vmatprep.subr.bf16.mxu0 0
    %3217 = vmatpush1.bf16.msra.mxu0 0
    %3218 = vmatprep.subr.bf16.mxu0 0
    %3219 = vmatpush1.bf16.msra.mxu0 0
    %3220 = vmatprep.subr.bf16.mxu0 0
    %3221 = vmatpush1.bf16.msra.mxu0 0
    %3222 = vmatprep.subr.bf16.mxu0 0
    %3223 = vmatpush1.bf16.msra.mxu0 0
    %3224 = vmatprep.subr.bf16.mxu0 0
    %3225 = vmatpush1.bf16.msra.mxu0 0
    %3226 = vmatprep.subr.bf16.mxu0 0
    %3227 = vmatpush1.bf16.msra.mxu0 0
    %3228 = vmatprep.mubr.bf16.mxu0 0
    %3229 = vmatmul.mubr.bf16.gmra.mrb[0].mxu0 %v2907
    %v3230 = vpop.f32.mrb[0].mxu0
    %v3231 = vadd.f32 %v2885, %v3230
    %v3232 = vpop.f32.mrb[0].mxu0
    %v3233 = vadd.f32 %v2889, %v3232
    %v3234 = vpop.f32.mrb[0].mxu0
    %v3235 = vpop.f32.mrb[0].mxu0
    %3236 = vdwg.mxu0
    %v3237 = vmax.f32 %v2944, 0.0
    %v3238 = vmax.f32 %v2946, 0.0
    %v3239 = vmax.f32 %v2985, 0.0
    %v3240 = vmax.f32 %v2987, 0.0
    %v3241 = vmax.f32 %v3026, 0.0
    %v3242 = vmax.f32 %v3028, 0.0
    %v3243 = vmax.f32 %v3067, 0.0
    %v3244 = vmax.f32 %v3069, 0.0
    %v3245 = vmax.f32 %v3108, 0.0
    %v3246 = vmax.f32 %v3110, 0.0
    %v3247 = vmax.f32 %v3149, 0.0
    %v3248 = vmax.f32 %v3151, 0.0
    %v3249 = vmax.f32 %v3190, 0.0
    %v3250 = vmax.f32 %v3192, 0.0
    %v3251 = vmax.f32 %v3231, 0.0
    %v3252 = vmax.f32 %v3233, 0.0
    %v3253 = vpack.c.bf16 %v3237, %v3237
    %v3254 = vpack.c.bf16 %v3238, %v3238
    %v3255 = vpack.c.bf16 %v3239, %v3239
    %v3256 = vpack.c.bf16 %v3240, %v3240
    %v3257 = vpack.c.bf16 %v3241, %v3241
    %v3258 = vpack.c.bf16 %v3242, %v3242
    %v3259 = vpack.c.bf16 %v3243, %v3243
    %v3260 = vpack.c.bf16 %v3244, %v3244
    %v3261 = vpack.c.bf16 %v3245, %v3245
    %v3262 = vpack.c.bf16 %v3246, %v3246
    %v3263 = vpack.c.bf16 %v3247, %v3247
    %v3264 = vpack.c.bf16 %v3248, %v3248
    %v3265 = vpack.c.bf16 %v3249, %v3249
    %v3266 = vpack.c.bf16 %v3250, %v3250
    %v3267 = vpack.c.bf16 %v3251, %v3251
    %v3268 = vpack.c.bf16 %v3252, %v3252
    %s3269 = smul.u32 %s2324, 4
    %s3270 = sshll.u32 %s3269, 4
    %3271 = dma.done %s484, %s3270
    %v3272 = vld [vmem:[#allocation7] sm:$0xff]
    %v3273 = vld [vmem:[#allocation7 + $0x8] sm:$0xff]
    %v3274 = vld [vmem:[#allocation7 + $0x10] sm:$0xff]
    %v3275 = vld [vmem:[#allocation7 + $0x18] sm:$0xff]
    %v3276 = vld [vmem:[#allocation7 + $0x20] sm:$0xff]
    %v3277 = vld [vmem:[#allocation7 + $0x28] sm:$0xff]
    %v3278 = vld [vmem:[#allocation7 + $0x30] sm:$0xff]
    %v3279 = vld [vmem:[#allocation7 + $0x38] sm:$0xff]
    %v3280 = vld [vmem:[#allocation7 + $0x40] sm:$0xff]
    %v3281 = vld [vmem:[#allocation7 + $0x48] sm:$0xff]
    %v3282 = vld [vmem:[#allocation7 + $0x50] sm:$0xff]
    %v3283 = vld [vmem:[#allocation7 + $0x58] sm:$0xff]
    %v3284 = vld [vmem:[#allocation7 + $0x60] sm:$0xff]
    %v3285 = vld [vmem:[#allocation7 + $0x68] sm:$0xff]
    %v3286 = vld [vmem:[#allocation7 + $0x70] sm:$0xff]
    %v3287 = vld [vmem:[#allocation7 + $0x78] sm:$0xff]
    %v3288 = vld [vmem:[#allocation7 + $0x80] sm:$0xff]
    %v3289 = vld [vmem:[#allocation7 + $0x88] sm:$0xff]
    %v3290 = vld [vmem:[#allocation7 + $0x90] sm:$0xff]
    %v3291 = vld [vmem:[#allocation7 + $0x98] sm:$0xff]
    %v3292 = vld [vmem:[#allocation7 + $0xa0] sm:$0xff]
    %v3293 = vld [vmem:[#allocation7 + $0xa8] sm:$0xff]
    %v3294 = vld [vmem:[#allocation7 + $0xb0] sm:$0xff]
    %v3295 = vld [vmem:[#allocation7 + $0xb8] sm:$0xff]
    %v3296 = vld [vmem:[#allocation7 + $0xc0] sm:$0xff]
    %v3297 = vld [vmem:[#allocation7 + $0xc8] sm:$0xff]
    %v3298 = vld [vmem:[#allocation7 + $0xd0] sm:$0xff]
    %v3299 = vld [vmem:[#allocation7 + $0xd8] sm:$0xff]
    %v3300 = vld [vmem:[#allocation7 + $0xe0] sm:$0xff]
    %v3301 = vld [vmem:[#allocation7 + $0xe8] sm:$0xff]
    %v3302 = vld [vmem:[#allocation7 + $0xf0] sm:$0xff]
    %v3303 = vld [vmem:[#allocation7 + $0xf8] sm:$0xff]
    %v3304 = vld [vmem:[#allocation7 + $0x100] sm:$0xff]
    %v3305 = vld [vmem:[#allocation7 + $0x108] sm:$0xff]
    %v3306 = vld [vmem:[#allocation7 + $0x110] sm:$0xff]
    %v3307 = vld [vmem:[#allocation7 + $0x118] sm:$0xff]
    %v3308 = vld [vmem:[#allocation7 + $0x120] sm:$0xff]
    %v3309 = vld [vmem:[#allocation7 + $0x128] sm:$0xff]
    %v3310 = vld [vmem:[#allocation7 + $0x130] sm:$0xff]
    %v3311 = vld [vmem:[#allocation7 + $0x138] sm:$0xff]
    %v3312 = vld [vmem:[#allocation7 + $0x140] sm:$0xff]
    %v3313 = vld [vmem:[#allocation7 + $0x148] sm:$0xff]
    %v3314 = vld [vmem:[#allocation7 + $0x150] sm:$0xff]
    %v3315 = vld [vmem:[#allocation7 + $0x158] sm:$0xff]
    %v3316 = vld [vmem:[#allocation7 + $0x160] sm:$0xff]
    %v3317 = vld [vmem:[#allocation7 + $0x168] sm:$0xff]
    %v3318 = vld [vmem:[#allocation7 + $0x170] sm:$0xff]
    %v3319 = vld [vmem:[#allocation7 + $0x178] sm:$0xff]
    %v3320 = vld [vmem:[#allocation7 + $0x180] sm:$0xff]
    %v3321 = vld [vmem:[#allocation7 + $0x188] sm:$0xff]
    %v3322 = vld [vmem:[#allocation7 + $0x190] sm:$0xff]
    %v3323 = vld [vmem:[#allocation7 + $0x198] sm:$0xff]
    %v3324 = vld [vmem:[#allocation7 + $0x1a0] sm:$0xff]
    %v3325 = vld [vmem:[#allocation7 + $0x1a8] sm:$0xff]
    %v3326 = vld [vmem:[#allocation7 + $0x1b0] sm:$0xff]
    %v3327 = vld [vmem:[#allocation7 + $0x1b8] sm:$0xff]
    %v3328 = vld [vmem:[#allocation7 + $0x1c0] sm:$0xff]
    %v3329 = vld [vmem:[#allocation7 + $0x1c8] sm:$0xff]
    %v3330 = vld [vmem:[#allocation7 + $0x1d0] sm:$0xff]
    %v3331 = vld [vmem:[#allocation7 + $0x1d8] sm:$0xff]
    %v3332 = vld [vmem:[#allocation7 + $0x1e0] sm:$0xff]
    %v3333 = vld [vmem:[#allocation7 + $0x1e8] sm:$0xff]
    %v3334 = vld [vmem:[#allocation7 + $0x1f0] sm:$0xff]
    %v3335 = vld [vmem:[#allocation7 + $0x1f8] sm:$0xff]
    %v3336 = vld [vmem:[#allocation7 + $0x200] sm:$0xff]
    %v3337 = vld [vmem:[#allocation7 + $0x208] sm:$0xff]
    %v3338 = vld [vmem:[#allocation7 + $0x210] sm:$0xff]
    %v3339 = vld [vmem:[#allocation7 + $0x218] sm:$0xff]
    %v3340 = vld [vmem:[#allocation7 + $0x220] sm:$0xff]
    %v3341 = vld [vmem:[#allocation7 + $0x228] sm:$0xff]
    %v3342 = vld [vmem:[#allocation7 + $0x230] sm:$0xff]
    %v3343 = vld [vmem:[#allocation7 + $0x238] sm:$0xff]
    %v3344 = vld [vmem:[#allocation7 + $0x240] sm:$0xff]
    %v3345 = vld [vmem:[#allocation7 + $0x248] sm:$0xff]
    %v3346 = vld [vmem:[#allocation7 + $0x250] sm:$0xff]
    %v3347 = vld [vmem:[#allocation7 + $0x258] sm:$0xff]
    %v3348 = vld [vmem:[#allocation7 + $0x260] sm:$0xff]
    %v3349 = vld [vmem:[#allocation7 + $0x268] sm:$0xff]
    %v3350 = vld [vmem:[#allocation7 + $0x270] sm:$0xff]
    %v3351 = vld [vmem:[#allocation7 + $0x278] sm:$0xff]
    %v3352 = vld [vmem:[#allocation7 + $0x280] sm:$0xff]
    %v3353 = vld [vmem:[#allocation7 + $0x288] sm:$0xff]
    %v3354 = vld [vmem:[#allocation7 + $0x290] sm:$0xff]
    %v3355 = vld [vmem:[#allocation7 + $0x298] sm:$0xff]
    %v3356 = vld [vmem:[#allocation7 + $0x2a0] sm:$0xff]
    %v3357 = vld [vmem:[#allocation7 + $0x2a8] sm:$0xff]
    %v3358 = vld [vmem:[#allocation7 + $0x2b0] sm:$0xff]
    %v3359 = vld [vmem:[#allocation7 + $0x2b8] sm:$0xff]
    %v3360 = vld [vmem:[#allocation7 + $0x2c0] sm:$0xff]
    %v3361 = vld [vmem:[#allocation7 + $0x2c8] sm:$0xff]
    %v3362 = vld [vmem:[#allocation7 + $0x2d0] sm:$0xff]
    %v3363 = vld [vmem:[#allocation7 + $0x2d8] sm:$0xff]
    %v3364 = vld [vmem:[#allocation7 + $0x2e0] sm:$0xff]
    %v3365 = vld [vmem:[#allocation7 + $0x2e8] sm:$0xff]
    %v3366 = vld [vmem:[#allocation7 + $0x2f0] sm:$0xff]
    %v3367 = vld [vmem:[#allocation7 + $0x2f8] sm:$0xff]
    %v3368 = vld [vmem:[#allocation7 + $0x300] sm:$0xff]
    %v3369 = vld [vmem:[#allocation7 + $0x308] sm:$0xff]
    %v3370 = vld [vmem:[#allocation7 + $0x310] sm:$0xff]
    %v3371 = vld [vmem:[#allocation7 + $0x318] sm:$0xff]
    %v3372 = vld [vmem:[#allocation7 + $0x320] sm:$0xff]
    %v3373 = vld [vmem:[#allocation7 + $0x328] sm:$0xff]
    %v3374 = vld [vmem:[#allocation7 + $0x330] sm:$0xff]
    %v3375 = vld [vmem:[#allocation7 + $0x338] sm:$0xff]
    %v3376 = vld [vmem:[#allocation7 + $0x340] sm:$0xff]
    %v3377 = vld [vmem:[#allocation7 + $0x348] sm:$0xff]
    %v3378 = vld [vmem:[#allocation7 + $0x350] sm:$0xff]
    %v3379 = vld [vmem:[#allocation7 + $0x358] sm:$0xff]
    %v3380 = vld [vmem:[#allocation7 + $0x360] sm:$0xff]
    %v3381 = vld [vmem:[#allocation7 + $0x368] sm:$0xff]
    %v3382 = vld [vmem:[#allocation7 + $0x370] sm:$0xff]
    %v3383 = vld [vmem:[#allocation7 + $0x378] sm:$0xff]
    %v3384 = vld [vmem:[#allocation7 + $0x380] sm:$0xff]
    %v3385 = vld [vmem:[#allocation7 + $0x388] sm:$0xff]
    %v3386 = vld [vmem:[#allocation7 + $0x390] sm:$0xff]
    %v3387 = vld [vmem:[#allocation7 + $0x398] sm:$0xff]
    %v3388 = vld [vmem:[#allocation7 + $0x3a0] sm:$0xff]
    %v3389 = vld [vmem:[#allocation7 + $0x3a8] sm:$0xff]
    %v3390 = vld [vmem:[#allocation7 + $0x3b0] sm:$0xff]
    %v3391 = vld [vmem:[#allocation7 + $0x3b8] sm:$0xff]
    %v3392 = vld [vmem:[#allocation7 + $0x3c0] sm:$0xff]
    %v3393 = vld [vmem:[#allocation7 + $0x3c8] sm:$0xff]
    %v3394 = vld [vmem:[#allocation7 + $0x3d0] sm:$0xff]
    %v3395 = vld [vmem:[#allocation7 + $0x3d8] sm:$0xff]
    %v3396 = vld [vmem:[#allocation7 + $0x3e0] sm:$0xff]
    %v3397 = vld [vmem:[#allocation7 + $0x3e8] sm:$0xff]
    %v3398 = vld [vmem:[#allocation7 + $0x3f0] sm:$0xff]
    %v3399 = vld [vmem:[#allocation7 + $0x3f8] sm:$0xff]
    %v3400 = vld [vmem:[#allocation7 + $0x400] sm:$0xff]
    %v3401 = vld [vmem:[#allocation7 + $0x408] sm:$0xff]
    %v3402 = vld [vmem:[#allocation7 + $0x410] sm:$0xff]
    %v3403 = vld [vmem:[#allocation7 + $0x418] sm:$0xff]
    %v3404 = vld [vmem:[#allocation7 + $0x420] sm:$0xff]
    %v3405 = vld [vmem:[#allocation7 + $0x428] sm:$0xff]
    %v3406 = vld [vmem:[#allocation7 + $0x430] sm:$0xff]
    %v3407 = vld [vmem:[#allocation7 + $0x438] sm:$0xff]
    %v3408 = vld [vmem:[#allocation7 + $0x440] sm:$0xff]
    %v3409 = vld [vmem:[#allocation7 + $0x448] sm:$0xff]
    %v3410 = vld [vmem:[#allocation7 + $0x450] sm:$0xff]
    %v3411 = vld [vmem:[#allocation7 + $0x458] sm:$0xff]
    %v3412 = vld [vmem:[#allocation7 + $0x460] sm:$0xff]
    %v3413 = vld [vmem:[#allocation7 + $0x468] sm:$0xff]
    %v3414 = vld [vmem:[#allocation7 + $0x470] sm:$0xff]
    %v3415 = vld [vmem:[#allocation7 + $0x478] sm:$0xff]
    %v3416 = vld [vmem:[#allocation7 + $0x480] sm:$0xff]
    %v3417 = vld [vmem:[#allocation7 + $0x488] sm:$0xff]
    %v3418 = vld [vmem:[#allocation7 + $0x490] sm:$0xff]
    %v3419 = vld [vmem:[#allocation7 + $0x498] sm:$0xff]
    %v3420 = vld [vmem:[#allocation7 + $0x4a0] sm:$0xff]
    %v3421 = vld [vmem:[#allocation7 + $0x4a8] sm:$0xff]
    %v3422 = vld [vmem:[#allocation7 + $0x4b0] sm:$0xff]
    %v3423 = vld [vmem:[#allocation7 + $0x4b8] sm:$0xff]
    %v3424 = vld [vmem:[#allocation7 + $0x4c0] sm:$0xff]
    %v3425 = vld [vmem:[#allocation7 + $0x4c8] sm:$0xff]
    %v3426 = vld [vmem:[#allocation7 + $0x4d0] sm:$0xff]
    %v3427 = vld [vmem:[#allocation7 + $0x4d8] sm:$0xff]
    %v3428 = vld [vmem:[#allocation7 + $0x4e0] sm:$0xff]
    %v3429 = vld [vmem:[#allocation7 + $0x4e8] sm:$0xff]
    %v3430 = vld [vmem:[#allocation7 + $0x4f0] sm:$0xff]
    %v3431 = vld [vmem:[#allocation7 + $0x4f8] sm:$0xff]
    %v3432 = vld [vmem:[#allocation7 + $0x500] sm:$0xff]
    %v3433 = vld [vmem:[#allocation7 + $0x508] sm:$0xff]
    %v3434 = vld [vmem:[#allocation7 + $0x510] sm:$0xff]
    %v3435 = vld [vmem:[#allocation7 + $0x518] sm:$0xff]
    %v3436 = vld [vmem:[#allocation7 + $0x520] sm:$0xff]
    %v3437 = vld [vmem:[#allocation7 + $0x528] sm:$0xff]
    %v3438 = vld [vmem:[#allocation7 + $0x530] sm:$0xff]
    %v3439 = vld [vmem:[#allocation7 + $0x538] sm:$0xff]
    %v3440 = vld [vmem:[#allocation7 + $0x540] sm:$0xff]
    %v3441 = vld [vmem:[#allocation7 + $0x548] sm:$0xff]
    %v3442 = vld [vmem:[#allocation7 + $0x550] sm:$0xff]
    %v3443 = vld [vmem:[#allocation7 + $0x558] sm:$0xff]
    %v3444 = vld [vmem:[#allocation7 + $0x560] sm:$0xff]
    %v3445 = vld [vmem:[#allocation7 + $0x568] sm:$0xff]
    %v3446 = vld [vmem:[#allocation7 + $0x570] sm:$0xff]
    %v3447 = vld [vmem:[#allocation7 + $0x578] sm:$0xff]
    %v3448 = vld [vmem:[#allocation7 + $0x580] sm:$0xff]
    %v3449 = vld [vmem:[#allocation7 + $0x588] sm:$0xff]
    %v3450 = vld [vmem:[#allocation7 + $0x590] sm:$0xff]
    %v3451 = vld [vmem:[#allocation7 + $0x598] sm:$0xff]
    %v3452 = vld [vmem:[#allocation7 + $0x5a0] sm:$0xff]
    %v3453 = vld [vmem:[#allocation7 + $0x5a8] sm:$0xff]
    %v3454 = vld [vmem:[#allocation7 + $0x5b0] sm:$0xff]
    %v3455 = vld [vmem:[#allocation7 + $0x5b8] sm:$0xff]
    %v3456 = vld [vmem:[#allocation7 + $0x5c0] sm:$0xff]
    %v3457 = vld [vmem:[#allocation7 + $0x5c8] sm:$0xff]
    %v3458 = vld [vmem:[#allocation7 + $0x5d0] sm:$0xff]
    %v3459 = vld [vmem:[#allocation7 + $0x5d8] sm:$0xff]
    %v3460 = vld [vmem:[#allocation7 + $0x5e0] sm:$0xff]
    %v3461 = vld [vmem:[#allocation7 + $0x5e8] sm:$0xff]
    %v3462 = vld [vmem:[#allocation7 + $0x5f0] sm:$0xff]
    %v3463 = vld [vmem:[#allocation7 + $0x5f8] sm:$0xff]
    %v3464 = vld [vmem:[#allocation7 + $0x600] sm:$0xff]
    %v3465 = vld [vmem:[#allocation7 + $0x608] sm:$0xff]
    %v3466 = vld [vmem:[#allocation7 + $0x610] sm:$0xff]
    %v3467 = vld [vmem:[#allocation7 + $0x618] sm:$0xff]
    %v3468 = vld [vmem:[#allocation7 + $0x620] sm:$0xff]
    %v3469 = vld [vmem:[#allocation7 + $0x628] sm:$0xff]
    %v3470 = vld [vmem:[#allocation7 + $0x630] sm:$0xff]
    %v3471 = vld [vmem:[#allocation7 + $0x638] sm:$0xff]
    %v3472 = vld [vmem:[#allocation7 + $0x640] sm:$0xff]
    %v3473 = vld [vmem:[#allocation7 + $0x648] sm:$0xff]
    %v3474 = vld [vmem:[#allocation7 + $0x650] sm:$0xff]
    %v3475 = vld [vmem:[#allocation7 + $0x658] sm:$0xff]
    %v3476 = vld [vmem:[#allocation7 + $0x660] sm:$0xff]
    %v3477 = vld [vmem:[#allocation7 + $0x668] sm:$0xff]
    %v3478 = vld [vmem:[#allocation7 + $0x670] sm:$0xff]
    %v3479 = vld [vmem:[#allocation7 + $0x678] sm:$0xff]
    %v3480 = vld [vmem:[#allocation7 + $0x680] sm:$0xff]
    %v3481 = vld [vmem:[#allocation7 + $0x688] sm:$0xff]
    %v3482 = vld [vmem:[#allocation7 + $0x690] sm:$0xff]
    %v3483 = vld [vmem:[#allocation7 + $0x698] sm:$0xff]
    %v3484 = vld [vmem:[#allocation7 + $0x6a0] sm:$0xff]
    %v3485 = vld [vmem:[#allocation7 + $0x6a8] sm:$0xff]
    %v3486 = vld [vmem:[#allocation7 + $0x6b0] sm:$0xff]
    %v3487 = vld [vmem:[#allocation7 + $0x6b8] sm:$0xff]
    %v3488 = vld [vmem:[#allocation7 + $0x6c0] sm:$0xff]
    %v3489 = vld [vmem:[#allocation7 + $0x6c8] sm:$0xff]
    %v3490 = vld [vmem:[#allocation7 + $0x6d0] sm:$0xff]
    %v3491 = vld [vmem:[#allocation7 + $0x6d8] sm:$0xff]
    %v3492 = vld [vmem:[#allocation7 + $0x6e0] sm:$0xff]
    %v3493 = vld [vmem:[#allocation7 + $0x6e8] sm:$0xff]
    %v3494 = vld [vmem:[#allocation7 + $0x6f0] sm:$0xff]
    %v3495 = vld [vmem:[#allocation7 + $0x6f8] sm:$0xff]
    %v3496 = vld [vmem:[#allocation7 + $0x700] sm:$0xff]
    %v3497 = vld [vmem:[#allocation7 + $0x708] sm:$0xff]
    %v3498 = vld [vmem:[#allocation7 + $0x710] sm:$0xff]
    %v3499 = vld [vmem:[#allocation7 + $0x718] sm:$0xff]
    %v3500 = vld [vmem:[#allocation7 + $0x720] sm:$0xff]
    %v3501 = vld [vmem:[#allocation7 + $0x728] sm:$0xff]
    %v3502 = vld [vmem:[#allocation7 + $0x730] sm:$0xff]
    %v3503 = vld [vmem:[#allocation7 + $0x738] sm:$0xff]
    %v3504 = vld [vmem:[#allocation7 + $0x740] sm:$0xff]
    %v3505 = vld [vmem:[#allocation7 + $0x748] sm:$0xff]
    %v3506 = vld [vmem:[#allocation7 + $0x750] sm:$0xff]
    %v3507 = vld [vmem:[#allocation7 + $0x758] sm:$0xff]
    %v3508 = vld [vmem:[#allocation7 + $0x760] sm:$0xff]
    %v3509 = vld [vmem:[#allocation7 + $0x768] sm:$0xff]
    %v3510 = vld [vmem:[#allocation7 + $0x770] sm:$0xff]
    %v3511 = vld [vmem:[#allocation7 + $0x778] sm:$0xff]
    %v3512 = vld [vmem:[#allocation7 + $0x780] sm:$0xff]
    %v3513 = vld [vmem:[#allocation7 + $0x788] sm:$0xff]
    %v3514 = vld [vmem:[#allocation7 + $0x790] sm:$0xff]
    %v3515 = vld [vmem:[#allocation7 + $0x798] sm:$0xff]
    %v3516 = vld [vmem:[#allocation7 + $0x7a0] sm:$0xff]
    %v3517 = vld [vmem:[#allocation7 + $0x7a8] sm:$0xff]
    %v3518 = vld [vmem:[#allocation7 + $0x7b0] sm:$0xff]
    %v3519 = vld [vmem:[#allocation7 + $0x7b8] sm:$0xff]
    %v3520 = vld [vmem:[#allocation7 + $0x7c0] sm:$0xff]
    %v3521 = vld [vmem:[#allocation7 + $0x7c8] sm:$0xff]
    %v3522 = vld [vmem:[#allocation7 + $0x7d0] sm:$0xff]
    %v3523 = vld [vmem:[#allocation7 + $0x7d8] sm:$0xff]
    %v3524 = vld [vmem:[#allocation7 + $0x7e0] sm:$0xff]
    %v3525 = vld [vmem:[#allocation7 + $0x7e8] sm:$0xff]
    %v3526 = vld [vmem:[#allocation7 + $0x7f0] sm:$0xff]
    %v3527 = vld [vmem:[#allocation7 + $0x7f8] sm:$0xff]
    %v3528 = vld [vmem:[#allocation7 + $0x800] sm:$0xff]
    %v3529 = vld [vmem:[#allocation7 + $0x808] sm:$0xff]
    %v3530 = vld [vmem:[#allocation7 + $0x810] sm:$0xff]
    %v3531 = vld [vmem:[#allocation7 + $0x818] sm:$0xff]
    %v3532 = vld [vmem:[#allocation7 + $0x820] sm:$0xff]
    %v3533 = vld [vmem:[#allocation7 + $0x828] sm:$0xff]
    %v3534 = vld [vmem:[#allocation7 + $0x830] sm:$0xff]
    %v3535 = vld [vmem:[#allocation7 + $0x838] sm:$0xff]
    %v3536 = vld [vmem:[#allocation7 + $0x840] sm:$0xff]
    %v3537 = vld [vmem:[#allocation7 + $0x848] sm:$0xff]
    %v3538 = vld [vmem:[#allocation7 + $0x850] sm:$0xff]
    %v3539 = vld [vmem:[#allocation7 + $0x858] sm:$0xff]
    %v3540 = vld [vmem:[#allocation7 + $0x860] sm:$0xff]
    %v3541 = vld [vmem:[#allocation7 + $0x868] sm:$0xff]
    %v3542 = vld [vmem:[#allocation7 + $0x870] sm:$0xff]
    %v3543 = vld [vmem:[#allocation7 + $0x878] sm:$0xff]
    %v3544 = vld [vmem:[#allocation7 + $0x880] sm:$0xff]
    %v3545 = vld [vmem:[#allocation7 + $0x888] sm:$0xff]
    %v3546 = vld [vmem:[#allocation7 + $0x890] sm:$0xff]
    %v3547 = vld [vmem:[#allocation7 + $0x898] sm:$0xff]
    %v3548 = vld [vmem:[#allocation7 + $0x8a0] sm:$0xff]
    %v3549 = vld [vmem:[#allocation7 + $0x8a8] sm:$0xff]
    %v3550 = vld [vmem:[#allocation7 + $0x8b0] sm:$0xff]
    %v3551 = vld [vmem:[#allocation7 + $0x8b8] sm:$0xff]
    %v3552 = vld [vmem:[#allocation7 + $0x8c0] sm:$0xff]
    %v3553 = vld [vmem:[#allocation7 + $0x8c8] sm:$0xff]
    %v3554 = vld [vmem:[#allocation7 + $0x8d0] sm:$0xff]
    %v3555 = vld [vmem:[#allocation7 + $0x8d8] sm:$0xff]
    %v3556 = vld [vmem:[#allocation7 + $0x8e0] sm:$0xff]
    %v3557 = vld [vmem:[#allocation7 + $0x8e8] sm:$0xff]
    %v3558 = vld [vmem:[#allocation7 + $0x8f0] sm:$0xff]
    %v3559 = vld [vmem:[#allocation7 + $0x8f8] sm:$0xff]
    %v3560 = vld [vmem:[#allocation7 + $0x900] sm:$0xff]
    %v3561 = vld [vmem:[#allocation7 + $0x908] sm:$0xff]
    %v3562 = vld [vmem:[#allocation7 + $0x910] sm:$0xff]
    %v3563 = vld [vmem:[#allocation7 + $0x918] sm:$0xff]
    %v3564 = vld [vmem:[#allocation7 + $0x920] sm:$0xff]
    %v3565 = vld [vmem:[#allocation7 + $0x928] sm:$0xff]
    %v3566 = vld [vmem:[#allocation7 + $0x930] sm:$0xff]
    %v3567 = vld [vmem:[#allocation7 + $0x938] sm:$0xff]
    %v3568 = vld [vmem:[#allocation7 + $0x940] sm:$0xff]
    %v3569 = vld [vmem:[#allocation7 + $0x948] sm:$0xff]
    %v3570 = vld [vmem:[#allocation7 + $0x950] sm:$0xff]
    %v3571 = vld [vmem:[#allocation7 + $0x958] sm:$0xff]
    %v3572 = vld [vmem:[#allocation7 + $0x960] sm:$0xff]
    %v3573 = vld [vmem:[#allocation7 + $0x968] sm:$0xff]
    %v3574 = vld [vmem:[#allocation7 + $0x970] sm:$0xff]
    %v3575 = vld [vmem:[#allocation7 + $0x978] sm:$0xff]
    %v3576 = vld [vmem:[#allocation7 + $0x980] sm:$0xff]
    %v3577 = vld [vmem:[#allocation7 + $0x988] sm:$0xff]
    %v3578 = vld [vmem:[#allocation7 + $0x990] sm:$0xff]
    %v3579 = vld [vmem:[#allocation7 + $0x998] sm:$0xff]
    %v3580 = vld [vmem:[#allocation7 + $0x9a0] sm:$0xff]
    %v3581 = vld [vmem:[#allocation7 + $0x9a8] sm:$0xff]
    %v3582 = vld [vmem:[#allocation7 + $0x9b0] sm:$0xff]
    %v3583 = vld [vmem:[#allocation7 + $0x9b8] sm:$0xff]
    %v3584 = vld [vmem:[#allocation7 + $0x9c0] sm:$0xff]
    %v3585 = vld [vmem:[#allocation7 + $0x9c8] sm:$0xff]
    %v3586 = vld [vmem:[#allocation7 + $0x9d0] sm:$0xff]
    %v3587 = vld [vmem:[#allocation7 + $0x9d8] sm:$0xff]
    %v3588 = vld [vmem:[#allocation7 + $0x9e0] sm:$0xff]
    %v3589 = vld [vmem:[#allocation7 + $0x9e8] sm:$0xff]
    %v3590 = vld [vmem:[#allocation7 + $0x9f0] sm:$0xff]
    %v3591 = vld [vmem:[#allocation7 + $0x9f8] sm:$0xff]
    %v3592 = vld [vmem:[#allocation7 + $0xa00] sm:$0xff]
    %v3593 = vld [vmem:[#allocation7 + $0xa08] sm:$0xff]
    %v3594 = vld [vmem:[#allocation7 + $0xa10] sm:$0xff]
    %v3595 = vld [vmem:[#allocation7 + $0xa18] sm:$0xff]
    %v3596 = vld [vmem:[#allocation7 + $0xa20] sm:$0xff]
    %v3597 = vld [vmem:[#allocation7 + $0xa28] sm:$0xff]
    %v3598 = vld [vmem:[#allocation7 + $0xa30] sm:$0xff]
    %v3599 = vld [vmem:[#allocation7 + $0xa38] sm:$0xff]
    %v3600 = vld [vmem:[#allocation7 + $0xa40] sm:$0xff]
    %v3601 = vld [vmem:[#allocation7 + $0xa48] sm:$0xff]
    %v3602 = vld [vmem:[#allocation7 + $0xa50] sm:$0xff]
    %v3603 = vld [vmem:[#allocation7 + $0xa58] sm:$0xff]
    %v3604 = vld [vmem:[#allocation7 + $0xa60] sm:$0xff]
    %v3605 = vld [vmem:[#allocation7 + $0xa68] sm:$0xff]
    %v3606 = vld [vmem:[#allocation7 + $0xa70] sm:$0xff]
    %v3607 = vld [vmem:[#allocation7 + $0xa78] sm:$0xff]
    %v3608 = vld [vmem:[#allocation7 + $0xa80] sm:$0xff]
    %v3609 = vld [vmem:[#allocation7 + $0xa88] sm:$0xff]
    %v3610 = vld [vmem:[#allocation7 + $0xa90] sm:$0xff]
    %v3611 = vld [vmem:[#allocation7 + $0xa98] sm:$0xff]
    %v3612 = vld [vmem:[#allocation7 + $0xaa0] sm:$0xff]
    %v3613 = vld [vmem:[#allocation7 + $0xaa8] sm:$0xff]
    %v3614 = vld [vmem:[#allocation7 + $0xab0] sm:$0xff]
    %v3615 = vld [vmem:[#allocation7 + $0xab8] sm:$0xff]
    %v3616 = vld [vmem:[#allocation7 + $0xac0] sm:$0xff]
    %v3617 = vld [vmem:[#allocation7 + $0xac8] sm:$0xff]
    %v3618 = vld [vmem:[#allocation7 + $0xad0] sm:$0xff]
    %v3619 = vld [vmem:[#allocation7 + $0xad8] sm:$0xff]
    %v3620 = vld [vmem:[#allocation7 + $0xae0] sm:$0xff]
    %v3621 = vld [vmem:[#allocation7 + $0xae8] sm:$0xff]
    %v3622 = vld [vmem:[#allocation7 + $0xaf0] sm:$0xff]
    %v3623 = vld [vmem:[#allocation7 + $0xaf8] sm:$0xff]
    %v3624 = vld [vmem:[#allocation7 + $0xb00] sm:$0xff]
    %v3625 = vld [vmem:[#allocation7 + $0xb08] sm:$0xff]
    %v3626 = vld [vmem:[#allocation7 + $0xb10] sm:$0xff]
    %v3627 = vld [vmem:[#allocation7 + $0xb18] sm:$0xff]
    %v3628 = vld [vmem:[#allocation7 + $0xb20] sm:$0xff]
    %v3629 = vld [vmem:[#allocation7 + $0xb28] sm:$0xff]
    %v3630 = vld [vmem:[#allocation7 + $0xb30] sm:$0xff]
    %v3631 = vld [vmem:[#allocation7 + $0xb38] sm:$0xff]
    %v3632 = vld [vmem:[#allocation7 + $0xb40] sm:$0xff]
    %v3633 = vld [vmem:[#allocation7 + $0xb48] sm:$0xff]
    %v3634 = vld [vmem:[#allocation7 + $0xb50] sm:$0xff]
    %v3635 = vld [vmem:[#allocation7 + $0xb58] sm:$0xff]
    %v3636 = vld [vmem:[#allocation7 + $0xb60] sm:$0xff]
    %v3637 = vld [vmem:[#allocation7 + $0xb68] sm:$0xff]
    %v3638 = vld [vmem:[#allocation7 + $0xb70] sm:$0xff]
    %v3639 = vld [vmem:[#allocation7 + $0xb78] sm:$0xff]
    %v3640 = vld [vmem:[#allocation7 + $0xb80] sm:$0xff]
    %v3641 = vld [vmem:[#allocation7 + $0xb88] sm:$0xff]
    %v3642 = vld [vmem:[#allocation7 + $0xb90] sm:$0xff]
    %v3643 = vld [vmem:[#allocation7 + $0xb98] sm:$0xff]
    %v3644 = vld [vmem:[#allocation7 + $0xba0] sm:$0xff]
    %v3645 = vld [vmem:[#allocation7 + $0xba8] sm:$0xff]
    %v3646 = vld [vmem:[#allocation7 + $0xbb0] sm:$0xff]
    %v3647 = vld [vmem:[#allocation7 + $0xbb8] sm:$0xff]
    %v3648 = vld [vmem:[#allocation7 + $0xbc0] sm:$0xff]
    %v3649 = vld [vmem:[#allocation7 + $0xbc8] sm:$0xff]
    %v3650 = vld [vmem:[#allocation7 + $0xbd0] sm:$0xff]
    %v3651 = vld [vmem:[#allocation7 + $0xbd8] sm:$0xff]
    %v3652 = vld [vmem:[#allocation7 + $0xbe0] sm:$0xff]
    %v3653 = vld [vmem:[#allocation7 + $0xbe8] sm:$0xff]
    %v3654 = vld [vmem:[#allocation7 + $0xbf0] sm:$0xff]
    %v3655 = vld [vmem:[#allocation7 + $0xbf8] sm:$0xff]
    %v3656 = vld [vmem:[#allocation7 + $0xc00] sm:$0xff]
    %v3657 = vld [vmem:[#allocation7 + $0xc08] sm:$0xff]
    %v3658 = vld [vmem:[#allocation7 + $0xc10] sm:$0xff]
    %v3659 = vld [vmem:[#allocation7 + $0xc18] sm:$0xff]
    %v3660 = vld [vmem:[#allocation7 + $0xc20] sm:$0xff]
    %v3661 = vld [vmem:[#allocation7 + $0xc28] sm:$0xff]
    %v3662 = vld [vmem:[#allocation7 + $0xc30] sm:$0xff]
    %v3663 = vld [vmem:[#allocation7 + $0xc38] sm:$0xff]
    %v3664 = vld [vmem:[#allocation7 + $0xc40] sm:$0xff]
    %v3665 = vld [vmem:[#allocation7 + $0xc48] sm:$0xff]
    %v3666 = vld [vmem:[#allocation7 + $0xc50] sm:$0xff]
    %v3667 = vld [vmem:[#allocation7 + $0xc58] sm:$0xff]
    %v3668 = vld [vmem:[#allocation7 + $0xc60] sm:$0xff]
    %v3669 = vld [vmem:[#allocation7 + $0xc68] sm:$0xff]
    %v3670 = vld [vmem:[#allocation7 + $0xc70] sm:$0xff]
    %v3671 = vld [vmem:[#allocation7 + $0xc78] sm:$0xff]
    %v3672 = vld [vmem:[#allocation7 + $0xc80] sm:$0xff]
    %v3673 = vld [vmem:[#allocation7 + $0xc88] sm:$0xff]
    %v3674 = vld [vmem:[#allocation7 + $0xc90] sm:$0xff]
    %v3675 = vld [vmem:[#allocation7 + $0xc98] sm:$0xff]
    %v3676 = vld [vmem:[#allocation7 + $0xca0] sm:$0xff]
    %v3677 = vld [vmem:[#allocation7 + $0xca8] sm:$0xff]
    %v3678 = vld [vmem:[#allocation7 + $0xcb0] sm:$0xff]
    %v3679 = vld [vmem:[#allocation7 + $0xcb8] sm:$0xff]
    %v3680 = vld [vmem:[#allocation7 + $0xcc0] sm:$0xff]
    %v3681 = vld [vmem:[#allocation7 + $0xcc8] sm:$0xff]
    %v3682 = vld [vmem:[#allocation7 + $0xcd0] sm:$0xff]
    %v3683 = vld [vmem:[#allocation7 + $0xcd8] sm:$0xff]
    %v3684 = vld [vmem:[#allocation7 + $0xce0] sm:$0xff]
    %v3685 = vld [vmem:[#allocation7 + $0xce8] sm:$0xff]
    %v3686 = vld [vmem:[#allocation7 + $0xcf0] sm:$0xff]
    %v3687 = vld [vmem:[#allocation7 + $0xcf8] sm:$0xff]
    %v3688 = vld [vmem:[#allocation7 + $0xd00] sm:$0xff]
    %v3689 = vld [vmem:[#allocation7 + $0xd08] sm:$0xff]
    %v3690 = vld [vmem:[#allocation7 + $0xd10] sm:$0xff]
    %v3691 = vld [vmem:[#allocation7 + $0xd18] sm:$0xff]
    %v3692 = vld [vmem:[#allocation7 + $0xd20] sm:$0xff]
    %v3693 = vld [vmem:[#allocation7 + $0xd28] sm:$0xff]
    %v3694 = vld [vmem:[#allocation7 + $0xd30] sm:$0xff]
    %v3695 = vld [vmem:[#allocation7 + $0xd38] sm:$0xff]
    %v3696 = vld [vmem:[#allocation7 + $0xd40] sm:$0xff]
    %v3697 = vld [vmem:[#allocation7 + $0xd48] sm:$0xff]
    %v3698 = vld [vmem:[#allocation7 + $0xd50] sm:$0xff]
    %v3699 = vld [vmem:[#allocation7 + $0xd58] sm:$0xff]
    %v3700 = vld [vmem:[#allocation7 + $0xd60] sm:$0xff]
    %v3701 = vld [vmem:[#allocation7 + $0xd68] sm:$0xff]
    %v3702 = vld [vmem:[#allocation7 + $0xd70] sm:$0xff]
    %v3703 = vld [vmem:[#allocation7 + $0xd78] sm:$0xff]
    %v3704 = vld [vmem:[#allocation7 + $0xd80] sm:$0xff]
    %v3705 = vld [vmem:[#allocation7 + $0xd88] sm:$0xff]
    %v3706 = vld [vmem:[#allocation7 + $0xd90] sm:$0xff]
    %v3707 = vld [vmem:[#allocation7 + $0xd98] sm:$0xff]
    %v3708 = vld [vmem:[#allocation7 + $0xda0] sm:$0xff]
    %v3709 = vld [vmem:[#allocation7 + $0xda8] sm:$0xff]
    %v3710 = vld [vmem:[#allocation7 + $0xdb0] sm:$0xff]
    %v3711 = vld [vmem:[#allocation7 + $0xdb8] sm:$0xff]
    %v3712 = vld [vmem:[#allocation7 + $0xdc0] sm:$0xff]
    %v3713 = vld [vmem:[#allocation7 + $0xdc8] sm:$0xff]
    %v3714 = vld [vmem:[#allocation7 + $0xdd0] sm:$0xff]
    %v3715 = vld [vmem:[#allocation7 + $0xdd8] sm:$0xff]
    %v3716 = vld [vmem:[#allocation7 + $0xde0] sm:$0xff]
    %v3717 = vld [vmem:[#allocation7 + $0xde8] sm:$0xff]
    %v3718 = vld [vmem:[#allocation7 + $0xdf0] sm:$0xff]
    %v3719 = vld [vmem:[#allocation7 + $0xdf8] sm:$0xff]
    %v3720 = vld [vmem:[#allocation7 + $0xe00] sm:$0xff]
    %v3721 = vld [vmem:[#allocation7 + $0xe08] sm:$0xff]
    %v3722 = vld [vmem:[#allocation7 + $0xe10] sm:$0xff]
    %v3723 = vld [vmem:[#allocation7 + $0xe18] sm:$0xff]
    %v3724 = vld [vmem:[#allocation7 + $0xe20] sm:$0xff]
    %v3725 = vld [vmem:[#allocation7 + $0xe28] sm:$0xff]
    %v3726 = vld [vmem:[#allocation7 + $0xe30] sm:$0xff]
    %v3727 = vld [vmem:[#allocation7 + $0xe38] sm:$0xff]
    %v3728 = vld [vmem:[#allocation7 + $0xe40] sm:$0xff]
    %v3729 = vld [vmem:[#allocation7 + $0xe48] sm:$0xff]
    %v3730 = vld [vmem:[#allocation7 + $0xe50] sm:$0xff]
    %v3731 = vld [vmem:[#allocation7 + $0xe58] sm:$0xff]
    %v3732 = vld [vmem:[#allocation7 + $0xe60] sm:$0xff]
    %v3733 = vld [vmem:[#allocation7 + $0xe68] sm:$0xff]
    %v3734 = vld [vmem:[#allocation7 + $0xe70] sm:$0xff]
    %v3735 = vld [vmem:[#allocation7 + $0xe78] sm:$0xff]
    %v3736 = vld [vmem:[#allocation7 + $0xe80] sm:$0xff]
    %v3737 = vld [vmem:[#allocation7 + $0xe88] sm:$0xff]
    %v3738 = vld [vmem:[#allocation7 + $0xe90] sm:$0xff]
    %v3739 = vld [vmem:[#allocation7 + $0xe98] sm:$0xff]
    %v3740 = vld [vmem:[#allocation7 + $0xea0] sm:$0xff]
    %v3741 = vld [vmem:[#allocation7 + $0xea8] sm:$0xff]
    %v3742 = vld [vmem:[#allocation7 + $0xeb0] sm:$0xff]
    %v3743 = vld [vmem:[#allocation7 + $0xeb8] sm:$0xff]
    %v3744 = vld [vmem:[#allocation7 + $0xec0] sm:$0xff]
    %v3745 = vld [vmem:[#allocation7 + $0xec8] sm:$0xff]
    %v3746 = vld [vmem:[#allocation7 + $0xed0] sm:$0xff]
    %v3747 = vld [vmem:[#allocation7 + $0xed8] sm:$0xff]
    %v3748 = vld [vmem:[#allocation7 + $0xee0] sm:$0xff]
    %v3749 = vld [vmem:[#allocation7 + $0xee8] sm:$0xff]
    %v3750 = vld [vmem:[#allocation7 + $0xef0] sm:$0xff]
    %v3751 = vld [vmem:[#allocation7 + $0xef8] sm:$0xff]
    %v3752 = vld [vmem:[#allocation7 + $0xf00] sm:$0xff]
    %v3753 = vld [vmem:[#allocation7 + $0xf08] sm:$0xff]
    %v3754 = vld [vmem:[#allocation7 + $0xf10] sm:$0xff]
    %v3755 = vld [vmem:[#allocation7 + $0xf18] sm:$0xff]
    %v3756 = vld [vmem:[#allocation7 + $0xf20] sm:$0xff]
    %v3757 = vld [vmem:[#allocation7 + $0xf28] sm:$0xff]
    %v3758 = vld [vmem:[#allocation7 + $0xf30] sm:$0xff]
    %v3759 = vld [vmem:[#allocation7 + $0xf38] sm:$0xff]
    %v3760 = vld [vmem:[#allocation7 + $0xf40] sm:$0xff]
    %v3761 = vld [vmem:[#allocation7 + $0xf48] sm:$0xff]
    %v3762 = vld [vmem:[#allocation7 + $0xf50] sm:$0xff]
    %v3763 = vld [vmem:[#allocation7 + $0xf58] sm:$0xff]
    %v3764 = vld [vmem:[#allocation7 + $0xf60] sm:$0xff]
    %v3765 = vld [vmem:[#allocation7 + $0xf68] sm:$0xff]
    %v3766 = vld [vmem:[#allocation7 + $0xf70] sm:$0xff]
    %v3767 = vld [vmem:[#allocation7 + $0xf78] sm:$0xff]
    %v3768 = vld [vmem:[#allocation7 + $0xf80] sm:$0xff]
    %v3769 = vld [vmem:[#allocation7 + $0xf88] sm:$0xff]
    %v3770 = vld [vmem:[#allocation7 + $0xf90] sm:$0xff]
    %v3771 = vld [vmem:[#allocation7 + $0xf98] sm:$0xff]
    %v3772 = vld [vmem:[#allocation7 + $0xfa0] sm:$0xff]
    %v3773 = vld [vmem:[#allocation7 + $0xfa8] sm:$0xff]
    %v3774 = vld [vmem:[#allocation7 + $0xfb0] sm:$0xff]
    %v3775 = vld [vmem:[#allocation7 + $0xfb8] sm:$0xff]
    %v3776 = vld [vmem:[#allocation7 + $0xfc0] sm:$0xff]
    %v3777 = vld [vmem:[#allocation7 + $0xfc8] sm:$0xff]
    %v3778 = vld [vmem:[#allocation7 + $0xfd0] sm:$0xff]
    %v3779 = vld [vmem:[#allocation7 + $0xfd8] sm:$0xff]
    %v3780 = vld [vmem:[#allocation7 + $0xfe0] sm:$0xff]
    %v3781 = vld [vmem:[#allocation7 + $0xfe8] sm:$0xff]
    %v3782 = vld [vmem:[#allocation7 + $0xff0] sm:$0xff]
    %v3783 = vld [vmem:[#allocation7 + $0xff8] sm:$0xff]
    %s3784 = scalar_lea.vmem [#allocation14], 5
    %v3785 = vld [vmem:[%s3784] ss:$8 sm:$0xf]
    %v3787 = vlaneseq
    %v3788 = vshrl.u32 %v3787, 7
    %v3789 = vsub.s32 0, %v3788
    %v3790 = vrot.slane %v3785, %v3789
    %v3791 = vlaneseq
    %v3792 = vshrl.u32 %v3791, 7
    %v3793 = vsub.s32 1, %v3792
    %v3794 = vrot.slane %v3785, %v3793
    %v3795 = vlaneseq
    %v3796 = vshrl.u32 %v3795, 7
    %v3797 = vsub.s32 2, %v3796
    %v3798 = vrot.slane %v3785, %v3797
    %v3799 = vlaneseq
    %v3800 = vshrl.u32 %v3799, 7
    %v3801 = vsub.s32 3, %v3800
    %v3802 = vrot.slane %v3785, %v3801
    %3807 = vmatprep.subr.bf16.mxu0 %v3273
    %3808 = vmatpush1.bf16.msra.mxu0 %v3272
    %3809 = vmatprep.subr.bf16.mxu0 %v3277
    %3810 = vmatpush1.bf16.msra.mxu0 %v3276
    %3811 = vmatprep.subr.bf16.mxu0 %v3281
    %3812 = vmatpush1.bf16.msra.mxu0 %v3280
    %3813 = vmatprep.subr.bf16.mxu0 %v3285
    %3814 = vmatpush1.bf16.msra.mxu0 %v3284
    %3815 = vmatprep.subr.bf16.mxu0 %v3289
    %3816 = vmatpush1.bf16.msra.mxu0 %v3288
    %3817 = vmatprep.subr.bf16.mxu0 %v3293
    %3818 = vmatpush1.bf16.msra.mxu0 %v3292
    %3819 = vmatprep.subr.bf16.mxu0 %v3297
    %3820 = vmatpush1.bf16.msra.mxu0 %v3296
    %3821 = vmatprep.subr.bf16.mxu0 %v3301
    %3822 = vmatpush1.bf16.msra.mxu0 %v3300
    %3823 = vmatprep.subr.bf16.mxu0 %v3305
    %3824 = vmatpush1.bf16.msra.mxu0 %v3304
    %3825 = vmatprep.subr.bf16.mxu0 %v3309
    %3826 = vmatpush1.bf16.msra.mxu0 %v3308
    %3827 = vmatprep.subr.bf16.mxu0 %v3313
    %3828 = vmatpush1.bf16.msra.mxu0 %v3312
    %3829 = vmatprep.subr.bf16.mxu0 %v3317
    %3830 = vmatpush1.bf16.msra.mxu0 %v3316
    %3831 = vmatprep.subr.bf16.mxu0 %v3321
    %3832 = vmatpush1.bf16.msra.mxu0 %v3320
    %3833 = vmatprep.subr.bf16.mxu0 %v3325
    %3834 = vmatpush1.bf16.msra.mxu0 %v3324
    %3835 = vmatprep.subr.bf16.mxu0 %v3329
    %3836 = vmatpush1.bf16.msra.mxu0 %v3328
    %3837 = vmatprep.subr.bf16.mxu0 %v3333
    %3838 = vmatpush1.bf16.msra.mxu0 %v3332
    %3839 = vmatprep.mubr.bf16.mxu0 %v3254
    %3840 = vmatmul.mubr.bf16.gmra.mrb[0].mxu0 %v3253
    %v3841 = vpop.f32.mrb[0].mxu0
    %v3842 = vadd.f32 %v3790, %v3841
    %v3843 = vpop.f32.mrb[0].mxu0
    %v3844 = vadd.f32 %v3794, %v3843
    %v3845 = vpop.f32.mrb[0].mxu0
    %v3846 = vpop.f32.mrb[0].mxu0
    %3847 = vdwg.mxu0
    %3848 = vmatprep.subr.bf16.mxu0 %v3337
    %3849 = vmatpush1.bf16.msra.mxu0 %v3336
    %3850 = vmatprep.subr.bf16.mxu0 %v3341
    %3851 = vmatpush1.bf16.msra.mxu0 %v3340
    %3852 = vmatprep.subr.bf16.mxu0 %v3345
    %3853 = vmatpush1.bf16.msra.mxu0 %v3344
    %3854 = vmatprep.subr.bf16.mxu0 %v3349
    %3855 = vmatpush1.bf16.msra.mxu0 %v3348
    %3856 = vmatprep.subr.bf16.mxu0 %v3353
    %3857 = vmatpush1.bf16.msra.mxu0 %v3352
    %3858 = vmatprep.subr.bf16.mxu0 %v3357
    %3859 = vmatpush1.bf16.msra.mxu0 %v3356
    %3860 = vmatprep.subr.bf16.mxu0 %v3361
    %3861 = vmatpush1.bf16.msra.mxu0 %v3360
    %3862 = vmatprep.subr.bf16.mxu0 %v3365
    %3863 = vmatpush1.bf16.msra.mxu0 %v3364
    %3864 = vmatprep.subr.bf16.mxu0 %v3369
    %3865 = vmatpush1.bf16.msra.mxu0 %v3368
    %3866 = vmatprep.subr.bf16.mxu0 %v3373
    %3867 = vmatpush1.bf16.msra.mxu0 %v3372
    %3868 = vmatprep.subr.bf16.mxu0 %v3377
    %3869 = vmatpush1.bf16.msra.mxu0 %v3376
    %3870 = vmatprep.subr.bf16.mxu0 %v3381
    %3871 = vmatpush1.bf16.msra.mxu0 %v3380
    %3872 = vmatprep.subr.bf16.mxu0 %v3385
    %3873 = vmatpush1.bf16.msra.mxu0 %v3384
    %3874 = vmatprep.subr.bf16.mxu0 %v3389
    %3875 = vmatpush1.bf16.msra.mxu0 %v3388
    %3876 = vmatprep.subr.bf16.mxu0 %v3393
    %3877 = vmatpush1.bf16.msra.mxu0 %v3392
    %3878 = vmatprep.subr.bf16.mxu0 %v3397
    %3879 = vmatpush1.bf16.msra.mxu0 %v3396
    %3880 = vmatprep.mubr.bf16.mxu0 %v3256
    %3881 = vmatmul.mubr.bf16.gmra.mrb[0].mxu0 %v3255
    %v3882 = vpop.f32.mrb[0].mxu0
    %v3883 = vadd.f32 %v3842, %v3882
    %v3884 = vpop.f32.mrb[0].mxu0
    %v3885 = vadd.f32 %v3844, %v3884
    %v3886 = vpop.f32.mrb[0].mxu0
    %v3887 = vpop.f32.mrb[0].mxu0
    %3888 = vdwg.mxu0
    %3889 = vmatprep.subr.bf16.mxu0 %v3401
    %3890 = vmatpush1.bf16.msra.mxu0 %v3400
    %3891 = vmatprep.subr.bf16.mxu0 %v3405
    %3892 = vmatpush1.bf16.msra.mxu0 %v3404
    %3893 = vmatprep.subr.bf16.mxu0 %v3409
    %3894 = vmatpush1.bf16.msra.mxu0 %v3408
    %3895 = vmatprep.subr.bf16.mxu0 %v3413
    %3896 = vmatpush1.bf16.msra.mxu0 %v3412
    %3897 = vmatprep.subr.bf16.mxu0 %v3417
    %3898 = vmatpush1.bf16.msra.mxu0 %v3416
    %3899 = vmatprep.subr.bf16.mxu0 %v3421
    %3900 = vmatpush1.bf16.msra.mxu0 %v3420
    %3901 = vmatprep.subr.bf16.mxu0 %v3425
    %3902 = vmatpush1.bf16.msra.mxu0 %v3424
    %3903 = vmatprep.subr.bf16.mxu0 %v3429
    %3904 = vmatpush1.bf16.msra.mxu0 %v3428
    %3905 = vmatprep.subr.bf16.mxu0 %v3433
    %3906 = vmatpush1.bf16.msra.mxu0 %v3432
    %3907 = vmatprep.subr.bf16.mxu0 %v3437
    %3908 = vmatpush1.bf16.msra.mxu0 %v3436
    %3909 = vmatprep.subr.bf16.mxu0 %v3441
    %3910 = vmatpush1.bf16.msra.mxu0 %v3440
    %3911 = vmatprep.subr.bf16.mxu0 %v3445
    %3912 = vmatpush1.bf16.msra.mxu0 %v3444
    %3913 = vmatprep.subr.bf16.mxu0 %v3449
    %3914 = vmatpush1.bf16.msra.mxu0 %v3448
    %3915 = vmatprep.subr.bf16.mxu0 %v3453
    %3916 = vmatpush1.bf16.msra.mxu0 %v3452
    %3917 = vmatprep.subr.bf16.mxu0 %v3457
    %3918 = vmatpush1.bf16.msra.mxu0 %v3456
    %3919 = vmatprep.subr.bf16.mxu0 %v3461
    %3920 = vmatpush1.bf16.msra.mxu0 %v3460
    %3921 = vmatprep.mubr.bf16.mxu0 %v3258
    %3922 = vmatmul.mubr.bf16.gmra.mrb[0].mxu0 %v3257
    %v3923 = vpop.f32.mrb[0].mxu0
    %v3924 = vadd.f32 %v3883, %v3923
    %v3925 = vpop.f32.mrb[0].mxu0
    %v3926 = vadd.f32 %v3885, %v3925
    %v3927 = vpop.f32.mrb[0].mxu0
    %v3928 = vpop.f32.mrb[0].mxu0
    %3929 = vdwg.mxu0
    %3930 = vmatprep.subr.bf16.mxu0 %v3465
    %3931 = vmatpush1.bf16.msra.mxu0 %v3464
    %3932 = vmatprep.subr.bf16.mxu0 %v3469
    %3933 = vmatpush1.bf16.msra.mxu0 %v3468
    %3934 = vmatprep.subr.bf16.mxu0 %v3473
    %3935 = vmatpush1.bf16.msra.mxu0 %v3472
    %3936 = vmatprep.subr.bf16.mxu0 %v3477
    %3937 = vmatpush1.bf16.msra.mxu0 %v3476
    %3938 = vmatprep.subr.bf16.mxu0 %v3481
    %3939 = vmatpush1.bf16.msra.mxu0 %v3480
    %3940 = vmatprep.subr.bf16.mxu0 %v3485
    %3941 = vmatpush1.bf16.msra.mxu0 %v3484
    %3942 = vmatprep.subr.bf16.mxu0 %v3489
    %3943 = vmatpush1.bf16.msra.mxu0 %v3488
    %3944 = vmatprep.subr.bf16.mxu0 %v3493
    %3945 = vmatpush1.bf16.msra.mxu0 %v3492
    %3946 = vmatprep.subr.bf16.mxu0 %v3497
    %3947 = vmatpush1.bf16.msra.mxu0 %v3496
    %3948 = vmatprep.subr.bf16.mxu0 %v3501
    %3949 = vmatpush1.bf16.msra.mxu0 %v3500
    %3950 = vmatprep.subr.bf16.mxu0 %v3505
    %3951 = vmatpush1.bf16.msra.mxu0 %v3504
    %3952 = vmatprep.subr.bf16.mxu0 %v3509
    %3953 = vmatpush1.bf16.msra.mxu0 %v3508
    %3954 = vmatprep.subr.bf16.mxu0 %v3513
    %3955 = vmatpush1.bf16.msra.mxu0 %v3512
    %3956 = vmatprep.subr.bf16.mxu0 %v3517
    %3957 = vmatpush1.bf16.msra.mxu0 %v3516
    %3958 = vmatprep.subr.bf16.mxu0 %v3521
    %3959 = vmatpush1.bf16.msra.mxu0 %v3520
    %3960 = vmatprep.subr.bf16.mxu0 %v3525
    %3961 = vmatpush1.bf16.msra.mxu0 %v3524
    %3962 = vmatprep.mubr.bf16.mxu0 %v3260
    %3963 = vmatmul.mubr.bf16.gmra.mrb[0].mxu0 %v3259
    %v3964 = vpop.f32.mrb[0].mxu0
    %v3965 = vadd.f32 %v3924, %v3964
    %v3966 = vpop.f32.mrb[0].mxu0
    %v3967 = vadd.f32 %v3926, %v3966
    %v3968 = vpop.f32.mrb[0].mxu0
    %v3969 = vpop.f32.mrb[0].mxu0
    %3970 = vdwg.mxu0
    %3971 = vmatprep.subr.bf16.mxu0 %v3529
    %3972 = vmatpush1.bf16.msra.mxu0 %v3528
    %3973 = vmatprep.subr.bf16.mxu0 %v3533
    %3974 = vmatpush1.bf16.msra.mxu0 %v3532
    %3975 = vmatprep.subr.bf16.mxu0 %v3537
    %3976 = vmatpush1.bf16.msra.mxu0 %v3536
    %3977 = vmatprep.subr.bf16.mxu0 %v3541
    %3978 = vmatpush1.bf16.msra.mxu0 %v3540
    %3979 = vmatprep.subr.bf16.mxu0 %v3545
    %3980 = vmatpush1.bf16.msra.mxu0 %v3544
    %3981 = vmatprep.subr.bf16.mxu0 %v3549
    %3982 = vmatpush1.bf16.msra.mxu0 %v3548
    %3983 = vmatprep.subr.bf16.mxu0 %v3553
    %3984 = vmatpush1.bf16.msra.mxu0 %v3552
    %3985 = vmatprep.subr.bf16.mxu0 %v3557
    %3986 = vmatpush1.bf16.msra.mxu0 %v3556
    %3987 = vmatprep.subr.bf16.mxu0 %v3561
    %3988 = vmatpush1.bf16.msra.mxu0 %v3560
    %3989 = vmatprep.subr.bf16.mxu0 %v3565
    %3990 = vmatpush1.bf16.msra.mxu0 %v3564
    %3991 = vmatprep.subr.bf16.mxu0 %v3569
    %3992 = vmatpush1.bf16.msra.mxu0 %v3568
    %3993 = vmatprep.subr.bf16.mxu0 %v3573
    %3994 = vmatpush1.bf16.msra.mxu0 %v3572
    %3995 = vmatprep.subr.bf16.mxu0 %v3577
    %3996 = vmatpush1.bf16.msra.mxu0 %v3576
    %3997 = vmatprep.subr.bf16.mxu0 %v3581
    %3998 = vmatpush1.bf16.msra.mxu0 %v3580
    %3999 = vmatprep.subr.bf16.mxu0 %v3585
    %4000 = vmatpush1.bf16.msra.mxu0 %v3584
    %4001 = vmatprep.subr.bf16.mxu0 %v3589
    %4002 = vmatpush1.bf16.msra.mxu0 %v3588
    %4003 = vmatprep.mubr.bf16.mxu0 %v3262
    %4004 = vmatmul.mubr.bf16.gmra.mrb[0].mxu0 %v3261
    %v4005 = vpop.f32.mrb[0].mxu0
    %v4006 = vadd.f32 %v3965, %v4005
    %v4007 = vpop.f32.mrb[0].mxu0
    %v4008 = vadd.f32 %v3967, %v4007
    %v4009 = vpop.f32.mrb[0].mxu0
    %v4010 = vpop.f32.mrb[0].mxu0
    %4011 = vdwg.mxu0
    %4012 = vmatprep.subr.bf16.mxu0 %v3593
    %4013 = vmatpush1.bf16.msra.mxu0 %v3592
    %4014 = vmatprep.subr.bf16.mxu0 %v3597
    %4015 = vmatpush1.bf16.msra.mxu0 %v3596
    %4016 = vmatprep.subr.bf16.mxu0 %v3601
    %4017 = vmatpush1.bf16.msra.mxu0 %v3600
    %4018 = vmatprep.subr.bf16.mxu0 %v3605
    %4019 = vmatpush1.bf16.msra.mxu0 %v3604
    %4020 = vmatprep.subr.bf16.mxu0 %v3609
    %4021 = vmatpush1.bf16.msra.mxu0 %v3608
    %4022 = vmatprep.subr.bf16.mxu0 %v3613
    %4023 = vmatpush1.bf16.msra.mxu0 %v3612
    %4024 = vmatprep.subr.bf16.mxu0 %v3617
    %4025 = vmatpush1.bf16.msra.mxu0 %v3616
    %4026 = vmatprep.subr.bf16.mxu0 %v3621
    %4027 = vmatpush1.bf16.msra.mxu0 %v3620
    %4028 = vmatprep.subr.bf16.mxu0 %v3625
    %4029 = vmatpush1.bf16.msra.mxu0 %v3624
    %4030 = vmatprep.subr.bf16.mxu0 %v3629
    %4031 = vmatpush1.bf16.msra.mxu0 %v3628
    %4032 = vmatprep.subr.bf16.mxu0 %v3633
    %4033 = vmatpush1.bf16.msra.mxu0 %v3632
    %4034 = vmatprep.subr.bf16.mxu0 %v3637
    %4035 = vmatpush1.bf16.msra.mxu0 %v3636
    %4036 = vmatprep.subr.bf16.mxu0 %v3641
    %4037 = vmatpush1.bf16.msra.mxu0 %v3640
    %4038 = vmatprep.subr.bf16.mxu0 %v3645
    %4039 = vmatpush1.bf16.msra.mxu0 %v3644
    %4040 = vmatprep.subr.bf16.mxu0 %v3649
    %4041 = vmatpush1.bf16.msra.mxu0 %v3648
    %4042 = vmatprep.subr.bf16.mxu0 %v3653
    %4043 = vmatpush1.bf16.msra.mxu0 %v3652
    %4044 = vmatprep.mubr.bf16.mxu0 %v3264
    %4045 = vmatmul.mubr.bf16.gmra.mrb[0].mxu0 %v3263
    %v4046 = vpop.f32.mrb[0].mxu0
    %v4047 = vadd.f32 %v4006, %v4046
    %v4048 = vpop.f32.mrb[0].mxu0
    %v4049 = vadd.f32 %v4008, %v4048
    %v4050 = vpop.f32.mrb[0].mxu0
    %v4051 = vpop.f32.mrb[0].mxu0
    %4052 = vdwg.mxu0
    %4053 = vmatprep.subr.bf16.mxu0 %v3657
    %4054 = vmatpush1.bf16.msra.mxu0 %v3656
    %4055 = vmatprep.subr.bf16.mxu0 %v3661
    %4056 = vmatpush1.bf16.msra.mxu0 %v3660
    %4057 = vmatprep.subr.bf16.mxu0 %v3665
    %4058 = vmatpush1.bf16.msra.mxu0 %v3664
    %4059 = vmatprep.subr.bf16.mxu0 %v3669
    %4060 = vmatpush1.bf16.msra.mxu0 %v3668
    %4061 = vmatprep.subr.bf16.mxu0 %v3673
    %4062 = vmatpush1.bf16.msra.mxu0 %v3672
    %4063 = vmatprep.subr.bf16.mxu0 %v3677
    %4064 = vmatpush1.bf16.msra.mxu0 %v3676
    %4065 = vmatprep.subr.bf16.mxu0 %v3681
    %4066 = vmatpush1.bf16.msra.mxu0 %v3680
    %4067 = vmatprep.subr.bf16.mxu0 %v3685
    %4068 = vmatpush1.bf16.msra.mxu0 %v3684
    %4069 = vmatprep.subr.bf16.mxu0 %v3689
    %4070 = vmatpush1.bf16.msra.mxu0 %v3688
    %4071 = vmatprep.subr.bf16.mxu0 %v3693
    %4072 = vmatpush1.bf16.msra.mxu0 %v3692
    %4073 = vmatprep.subr.bf16.mxu0 %v3697
    %4074 = vmatpush1.bf16.msra.mxu0 %v3696
    %4075 = vmatprep.subr.bf16.mxu0 %v3701
    %4076 = vmatpush1.bf16.msra.mxu0 %v3700
    %4077 = vmatprep.subr.bf16.mxu0 %v3705
    %4078 = vmatpush1.bf16.msra.mxu0 %v3704
    %4079 = vmatprep.subr.bf16.mxu0 %v3709
    %4080 = vmatpush1.bf16.msra.mxu0 %v3708
    %4081 = vmatprep.subr.bf16.mxu0 %v3713
    %4082 = vmatpush1.bf16.msra.mxu0 %v3712
    %4083 = vmatprep.subr.bf16.mxu0 %v3717
    %4084 = vmatpush1.bf16.msra.mxu0 %v3716
    %4085 = vmatprep.mubr.bf16.mxu0 %v3266
    %4086 = vmatmul.mubr.bf16.gmra.mrb[0].mxu0 %v3265
    %v4087 = vpop.f32.mrb[0].mxu0
    %v4088 = vadd.f32 %v4047, %v4087
    %v4089 = vpop.f32.mrb[0].mxu0
    %v4090 = vadd.f32 %v4049, %v4089
    %v4091 = vpop.f32.mrb[0].mxu0
    %v4092 = vpop.f32.mrb[0].mxu0
    %4093 = vdwg.mxu0
    %4094 = vmatprep.subr.bf16.mxu0 %v3721
    %4095 = vmatpush1.bf16.msra.mxu0 %v3720
    %4096 = vmatprep.subr.bf16.mxu0 %v3725
    %4097 = vmatpush1.bf16.msra.mxu0 %v3724
    %4098 = vmatprep.subr.bf16.mxu0 %v3729
    %4099 = vmatpush1.bf16.msra.mxu0 %v3728
    %4100 = vmatprep.subr.bf16.mxu0 %v3733
    %4101 = vmatpush1.bf16.msra.mxu0 %v3732
    %4102 = vmatprep.subr.bf16.mxu0 %v3737
    %4103 = vmatpush1.bf16.msra.mxu0 %v3736
    %4104 = vmatprep.subr.bf16.mxu0 %v3741
    %4105 = vmatpush1.bf16.msra.mxu0 %v3740
    %4106 = vmatprep.subr.bf16.mxu0 %v3745
    %4107 = vmatpush1.bf16.msra.mxu0 %v3744
    %4108 = vmatprep.subr.bf16.mxu0 %v3749
    %4109 = vmatpush1.bf16.msra.mxu0 %v3748
    %4110 = vmatprep.subr.bf16.mxu0 %v3753
    %4111 = vmatpush1.bf16.msra.mxu0 %v3752
    %4112 = vmatprep.subr.bf16.mxu0 %v3757
    %4113 = vmatpush1.bf16.msra.mxu0 %v3756
    %4114 = vmatprep.subr.bf16.mxu0 %v3761
    %4115 = vmatpush1.bf16.msra.mxu0 %v3760
    %4116 = vmatprep.subr.bf16.mxu0 %v3765
    %4117 = vmatpush1.bf16.msra.mxu0 %v3764
    %4118 = vmatprep.subr.bf16.mxu0 %v3769
    %4119 = vmatpush1.bf16.msra.mxu0 %v3768
    %4120 = vmatprep.subr.bf16.mxu0 %v3773
    %4121 = vmatpush1.bf16.msra.mxu0 %v3772
    %4122 = vmatprep.subr.bf16.mxu0 %v3777
    %4123 = vmatpush1.bf16.msra.mxu0 %v3776
    %4124 = vmatprep.subr.bf16.mxu0 %v3781
    %4125 = vmatpush1.bf16.msra.mxu0 %v3780
    %4126 = vmatprep.mubr.bf16.mxu0 %v3268
    %4127 = vmatmul.mubr.bf16.gmra.mrb[0].mxu0 %v3267
    %v4128 = vpop.f32.mrb[0].mxu0
    %v4129 = vadd.f32 %v4088, %v4128
    %v4130 = vpop.f32.mrb[0].mxu0
    %v4131 = vadd.f32 %v4090, %v4130
    %v4132 = vpop.f32.mrb[0].mxu0
    %v4133 = vpop.f32.mrb[0].mxu0
    %4134 = vdwg.mxu0
    %4135 = vmatprep.subr.bf16.mxu0 %v3275
    %4136 = vmatpush1.bf16.msra.mxu0 %v3274
    %4137 = vmatprep.subr.bf16.mxu0 %v3279
    %4138 = vmatpush1.bf16.msra.mxu0 %v3278
    %4139 = vmatprep.subr.bf16.mxu0 %v3283
    %4140 = vmatpush1.bf16.msra.mxu0 %v3282
    %4141 = vmatprep.subr.bf16.mxu0 %v3287
    %4142 = vmatpush1.bf16.msra.mxu0 %v3286
    %4143 = vmatprep.subr.bf16.mxu0 %v3291
    %4144 = vmatpush1.bf16.msra.mxu0 %v3290
    %4145 = vmatprep.subr.bf16.mxu0 %v3295
    %4146 = vmatpush1.bf16.msra.mxu0 %v3294
    %4147 = vmatprep.subr.bf16.mxu0 %v3299
    %4148 = vmatpush1.bf16.msra.mxu0 %v3298
    %4149 = vmatprep.subr.bf16.mxu0 %v3303
    %4150 = vmatpush1.bf16.msra.mxu0 %v3302
    %4151 = vmatprep.subr.bf16.mxu0 %v3307
    %4152 = vmatpush1.bf16.msra.mxu0 %v3306
    %4153 = vmatprep.subr.bf16.mxu0 %v3311
    %4154 = vmatpush1.bf16.msra.mxu0 %v3310
    %4155 = vmatprep.subr.bf16.mxu0 %v3315
    %4156 = vmatpush1.bf16.msra.mxu0 %v3314
    %4157 = vmatprep.subr.bf16.mxu0 %v3319
    %4158 = vmatpush1.bf16.msra.mxu0 %v3318
    %4159 = vmatprep.subr.bf16.mxu0 %v3323
    %4160 = vmatpush1.bf16.msra.mxu0 %v3322
    %4161 = vmatprep.subr.bf16.mxu0 %v3327
    %4162 = vmatpush1.bf16.msra.mxu0 %v3326
    %4163 = vmatprep.subr.bf16.mxu0 %v3331
    %4164 = vmatpush1.bf16.msra.mxu0 %v3330
    %4165 = vmatprep.subr.bf16.mxu0 %v3335
    %4166 = vmatpush1.bf16.msra.mxu0 %v3334
    %4167 = vmatprep.mubr.bf16.mxu0 %v3254
    %4168 = vmatmul.mubr.bf16.gmra.mrb[0].mxu0 %v3253
    %v4169 = vpop.f32.mrb[0].mxu0
    %v4170 = vadd.f32 %v3798, %v4169
    %v4171 = vpop.f32.mrb[0].mxu0
    %v4172 = vadd.f32 %v3802, %v4171
    %v4173 = vpop.f32.mrb[0].mxu0
    %v4174 = vpop.f32.mrb[0].mxu0
    %4175 = vdwg.mxu0
    %4176 = vmatprep.subr.bf16.mxu0 %v3339
    %4177 = vmatpush1.bf16.msra.mxu0 %v3338
    %4178 = vmatprep.subr.bf16.mxu0 %v3343
    %4179 = vmatpush1.bf16.msra.mxu0 %v3342
    %4180 = vmatprep.subr.bf16.mxu0 %v3347
    %4181 = vmatpush1.bf16.msra.mxu0 %v3346
    %4182 = vmatprep.subr.bf16.mxu0 %v3351
    %4183 = vmatpush1.bf16.msra.mxu0 %v3350
    %4184 = vmatprep.subr.bf16.mxu0 %v3355
    %4185 = vmatpush1.bf16.msra.mxu0 %v3354
    %4186 = vmatprep.subr.bf16.mxu0 %v3359
    %4187 = vmatpush1.bf16.msra.mxu0 %v3358
    %4188 = vmatprep.subr.bf16.mxu0 %v3363
    %4189 = vmatpush1.bf16.msra.mxu0 %v3362
    %4190 = vmatprep.subr.bf16.mxu0 %v3367
    %4191 = vmatpush1.bf16.msra.mxu0 %v3366
    %4192 = vmatprep.subr.bf16.mxu0 %v3371
    %4193 = vmatpush1.bf16.msra.mxu0 %v3370
    %4194 = vmatprep.subr.bf16.mxu0 %v3375
    %4195 = vmatpush1.bf16.msra.mxu0 %v3374
    %4196 = vmatprep.subr.bf16.mxu0 %v3379
    %4197 = vmatpush1.bf16.msra.mxu0 %v3378
    %4198 = vmatprep.subr.bf16.mxu0 %v3383
    %4199 = vmatpush1.bf16.msra.mxu0 %v3382
    %4200 = vmatprep.subr.bf16.mxu0 %v3387
    %4201 = vmatpush1.bf16.msra.mxu0 %v3386
    %4202 = vmatprep.subr.bf16.mxu0 %v3391
    %4203 = vmatpush1.bf16.msra.mxu0 %v3390
    %4204 = vmatprep.subr.bf16.mxu0 %v3395
    %4205 = vmatpush1.bf16.msra.mxu0 %v3394
    %4206 = vmatprep.subr.bf16.mxu0 %v3399
    %4207 = vmatpush1.bf16.msra.mxu0 %v3398
    %4208 = vmatprep.mubr.bf16.mxu0 %v3256
    %4209 = vmatmul.mubr.bf16.gmra.mrb[0].mxu0 %v3255
    %v4210 = vpop.f32.mrb[0].mxu0
    %v4211 = vadd.f32 %v4170, %v4210
    %v4212 = vpop.f32.mrb[0].mxu0
    %v4213 = vadd.f32 %v4172, %v4212
    %v4214 = vpop.f32.mrb[0].mxu0
    %v4215 = vpop.f32.mrb[0].mxu0
    %4216 = vdwg.mxu0
    %4217 = vmatprep.subr.bf16.mxu0 %v3403
    %4218 = vmatpush1.bf16.msra.mxu0 %v3402
    %4219 = vmatprep.subr.bf16.mxu0 %v3407
    %4220 = vmatpush1.bf16.msra.mxu0 %v3406
    %4221 = vmatprep.subr.bf16.mxu0 %v3411
    %4222 = vmatpush1.bf16.msra.mxu0 %v3410
    %4223 = vmatprep.subr.bf16.mxu0 %v3415
    %4224 = vmatpush1.bf16.msra.mxu0 %v3414
    %4225 = vmatprep.subr.bf16.mxu0 %v3419
    %4226 = vmatpush1.bf16.msra.mxu0 %v3418
    %4227 = vmatprep.subr.bf16.mxu0 %v3423
    %4228 = vmatpush1.bf16.msra.mxu0 %v3422
    %4229 = vmatprep.subr.bf16.mxu0 %v3427
    %4230 = vmatpush1.bf16.msra.mxu0 %v3426
    %4231 = vmatprep.subr.bf16.mxu0 %v3431
    %4232 = vmatpush1.bf16.msra.mxu0 %v3430
    %4233 = vmatprep.subr.bf16.mxu0 %v3435
    %4234 = vmatpush1.bf16.msra.mxu0 %v3434
    %4235 = vmatprep.subr.bf16.mxu0 %v3439
    %4236 = vmatpush1.bf16.msra.mxu0 %v3438
    %4237 = vmatprep.subr.bf16.mxu0 %v3443
    %4238 = vmatpush1.bf16.msra.mxu0 %v3442
    %4239 = vmatprep.subr.bf16.mxu0 %v3447
    %4240 = vmatpush1.bf16.msra.mxu0 %v3446
    %4241 = vmatprep.subr.bf16.mxu0 %v3451
    %4242 = vmatpush1.bf16.msra.mxu0 %v3450
    %4243 = vmatprep.subr.bf16.mxu0 %v3455
    %4244 = vmatpush1.bf16.msra.mxu0 %v3454
    %4245 = vmatprep.subr.bf16.mxu0 %v3459
    %4246 = vmatpush1.bf16.msra.mxu0 %v3458
    %4247 = vmatprep.subr.bf16.mxu0 %v3463
    %4248 = vmatpush1.bf16.msra.mxu0 %v3462
    %4249 = vmatprep.mubr.bf16.mxu0 %v3258
    %4250 = vmatmul.mubr.bf16.gmra.mrb[0].mxu0 %v3257
    %v4251 = vpop.f32.mrb[0].mxu0
    %v4252 = vadd.f32 %v4211, %v4251
    %v4253 = vpop.f32.mrb[0].mxu0
    %v4254 = vadd.f32 %v4213, %v4253
    %v4255 = vpop.f32.mrb[0].mxu0
    %v4256 = vpop.f32.mrb[0].mxu0
    %4257 = vdwg.mxu0
    %4258 = vmatprep.subr.bf16.mxu0 %v3467
    %4259 = vmatpush1.bf16.msra.mxu0 %v3466
    %4260 = vmatprep.subr.bf16.mxu0 %v3471
    %4261 = vmatpush1.bf16.msra.mxu0 %v3470
    %4262 = vmatprep.subr.bf16.mxu0 %v3475
    %4263 = vmatpush1.bf16.msra.mxu0 %v3474
    %4264 = vmatprep.subr.bf16.mxu0 %v3479
    %4265 = vmatpush1.bf16.msra.mxu0 %v3478
    %4266 = vmatprep.subr.bf16.mxu0 %v3483
    %4267 = vmatpush1.bf16.msra.mxu0 %v3482
    %4268 = vmatprep.subr.bf16.mxu0 %v3487
    %4269 = vmatpush1.bf16.msra.mxu0 %v3486
    %4270 = vmatprep.subr.bf16.mxu0 %v3491
    %4271 = vmatpush1.bf16.msra.mxu0 %v3490
    %4272 = vmatprep.subr.bf16.mxu0 %v3495
    %4273 = vmatpush1.bf16.msra.mxu0 %v3494
    %4274 = vmatprep.subr.bf16.mxu0 %v3499
    %4275 = vmatpush1.bf16.msra.mxu0 %v3498
    %4276 = vmatprep.subr.bf16.mxu0 %v3503
    %4277 = vmatpush1.bf16.msra.mxu0 %v3502
    %4278 = vmatprep.subr.bf16.mxu0 %v3507
    %4279 = vmatpush1.bf16.msra.mxu0 %v3506
    %4280 = vmatprep.subr.bf16.mxu0 %v3511
    %4281 = vmatpush1.bf16.msra.mxu0 %v3510
    %4282 = vmatprep.subr.bf16.mxu0 %v3515
    %4283 = vmatpush1.bf16.msra.mxu0 %v3514
    %4284 = vmatprep.subr.bf16.mxu0 %v3519
    %4285 = vmatpush1.bf16.msra.mxu0 %v3518
    %4286 = vmatprep.subr.bf16.mxu0 %v3523
    %4287 = vmatpush1.bf16.msra.mxu0 %v3522
    %4288 = vmatprep.subr.bf16.mxu0 %v3527
    %4289 = vmatpush1.bf16.msra.mxu0 %v3526
    %4290 = vmatprep.mubr.bf16.mxu0 %v3260
    %4291 = vmatmul.mubr.bf16.gmra.mrb[0].mxu0 %v3259
    %v4292 = vpop.f32.mrb[0].mxu0
    %v4293 = vadd.f32 %v4252, %v4292
    %v4294 = vpop.f32.mrb[0].mxu0
    %v4295 = vadd.f32 %v4254, %v4294
    %v4296 = vpop.f32.mrb[0].mxu0
    %v4297 = vpop.f32.mrb[0].mxu0
    %4298 = vdwg.mxu0
    %4299 = vmatprep.subr.bf16.mxu0 %v3531
    %4300 = vmatpush1.bf16.msra.mxu0 %v3530
    %4301 = vmatprep.subr.bf16.mxu0 %v3535
    %4302 = vmatpush1.bf16.msra.mxu0 %v3534
    %4303 = vmatprep.subr.bf16.mxu0 %v3539
    %4304 = vmatpush1.bf16.msra.mxu0 %v3538
    %4305 = vmatprep.subr.bf16.mxu0 %v3543
    %4306 = vmatpush1.bf16.msra.mxu0 %v3542
    %4307 = vmatprep.subr.bf16.mxu0 %v3547
    %4308 = vmatpush1.bf16.msra.mxu0 %v3546
    %4309 = vmatprep.subr.bf16.mxu0 %v3551
    %4310 = vmatpush1.bf16.msra.mxu0 %v3550
    %4311 = vmatprep.subr.bf16.mxu0 %v3555
    %4312 = vmatpush1.bf16.msra.mxu0 %v3554
    %4313 = vmatprep.subr.bf16.mxu0 %v3559
    %4314 = vmatpush1.bf16.msra.mxu0 %v3558
    %4315 = vmatprep.subr.bf16.mxu0 %v3563
    %4316 = vmatpush1.bf16.msra.mxu0 %v3562
    %4317 = vmatprep.subr.bf16.mxu0 %v3567
    %4318 = vmatpush1.bf16.msra.mxu0 %v3566
    %4319 = vmatprep.subr.bf16.mxu0 %v3571
    %4320 = vmatpush1.bf16.msra.mxu0 %v3570
    %4321 = vmatprep.subr.bf16.mxu0 %v3575
    %4322 = vmatpush1.bf16.msra.mxu0 %v3574
    %4323 = vmatprep.subr.bf16.mxu0 %v3579
    %4324 = vmatpush1.bf16.msra.mxu0 %v3578
    %4325 = vmatprep.subr.bf16.mxu0 %v3583
    %4326 = vmatpush1.bf16.msra.mxu0 %v3582
    %4327 = vmatprep.subr.bf16.mxu0 %v3587
    %4328 = vmatpush1.bf16.msra.mxu0 %v3586
    %4329 = vmatprep.subr.bf16.mxu0 %v3591
    %4330 = vmatpush1.bf16.msra.mxu0 %v3590
    %4331 = vmatprep.mubr.bf16.mxu0 %v3262
    %4332 = vmatmul.mubr.bf16.gmra.mrb[0].mxu0 %v3261
    %v4333 = vpop.f32.mrb[0].mxu0
    %v4334 = vadd.f32 %v4293, %v4333
    %v4335 = vpop.f32.mrb[0].mxu0
    %v4336 = vadd.f32 %v4295, %v4335
    %v4337 = vpop.f32.mrb[0].mxu0
    %v4338 = vpop.f32.mrb[0].mxu0
    %4339 = vdwg.mxu0
    %4340 = vmatprep.subr.bf16.mxu0 %v3595
    %4341 = vmatpush1.bf16.msra.mxu0 %v3594
    %4342 = vmatprep.subr.bf16.mxu0 %v3599
    %4343 = vmatpush1.bf16.msra.mxu0 %v3598
    %4344 = vmatprep.subr.bf16.mxu0 %v3603
    %4345 = vmatpush1.bf16.msra.mxu0 %v3602
    %4346 = vmatprep.subr.bf16.mxu0 %v3607
    %4347 = vmatpush1.bf16.msra.mxu0 %v3606
    %4348 = vmatprep.subr.bf16.mxu0 %v3611
    %4349 = vmatpush1.bf16.msra.mxu0 %v3610
    %4350 = vmatprep.subr.bf16.mxu0 %v3615
    %4351 = vmatpush1.bf16.msra.mxu0 %v3614
    %4352 = vmatprep.subr.bf16.mxu0 %v3619
    %4353 = vmatpush1.bf16.msra.mxu0 %v3618
    %4354 = vmatprep.subr.bf16.mxu0 %v3623
    %4355 = vmatpush1.bf16.msra.mxu0 %v3622
    %4356 = vmatprep.subr.bf16.mxu0 %v3627
    %4357 = vmatpush1.bf16.msra.mxu0 %v3626
    %4358 = vmatprep.subr.bf16.mxu0 %v3631
    %4359 = vmatpush1.bf16.msra.mxu0 %v3630
    %4360 = vmatprep.subr.bf16.mxu0 %v3635
    %4361 = vmatpush1.bf16.msra.mxu0 %v3634
    %4362 = vmatprep.subr.bf16.mxu0 %v3639
    %4363 = vmatpush1.bf16.msra.mxu0 %v3638
    %4364 = vmatprep.subr.bf16.mxu0 %v3643
    %4365 = vmatpush1.bf16.msra.mxu0 %v3642
    %4366 = vmatprep.subr.bf16.mxu0 %v3647
    %4367 = vmatpush1.bf16.msra.mxu0 %v3646
    %4368 = vmatprep.subr.bf16.mxu0 %v3651
    %4369 = vmatpush1.bf16.msra.mxu0 %v3650
    %4370 = vmatprep.subr.bf16.mxu0 %v3655
    %4371 = vmatpush1.bf16.msra.mxu0 %v3654
    %4372 = vmatprep.mubr.bf16.mxu0 %v3264
    %4373 = vmatmul.mubr.bf16.gmra.mrb[0].mxu0 %v3263
    %v4374 = vpop.f32.mrb[0].mxu0
    %v4375 = vadd.f32 %v4334, %v4374
    %v4376 = vpop.f32.mrb[0].mxu0
    %v4377 = vadd.f32 %v4336, %v4376
    %v4378 = vpop.f32.mrb[0].mxu0
    %v4379 = vpop.f32.mrb[0].mxu0
    %4380 = vdwg.mxu0
    %4381 = vmatprep.subr.bf16.mxu0 %v3659
    %4382 = vmatpush1.bf16.msra.mxu0 %v3658
    %4383 = vmatprep.subr.bf16.mxu0 %v3663
    %4384 = vmatpush1.bf16.msra.mxu0 %v3662
    %4385 = vmatprep.subr.bf16.mxu0 %v3667
    %4386 = vmatpush1.bf16.msra.mxu0 %v3666
    %4387 = vmatprep.subr.bf16.mxu0 %v3671
    %4388 = vmatpush1.bf16.msra.mxu0 %v3670
    %4389 = vmatprep.subr.bf16.mxu0 %v3675
    %4390 = vmatpush1.bf16.msra.mxu0 %v3674
    %4391 = vmatprep.subr.bf16.mxu0 %v3679
    %4392 = vmatpush1.bf16.msra.mxu0 %v3678
    %4393 = vmatprep.subr.bf16.mxu0 %v3683
    %4394 = vmatpush1.bf16.msra.mxu0 %v3682
    %4395 = vmatprep.subr.bf16.mxu0 %v3687
    %4396 = vmatpush1.bf16.msra.mxu0 %v3686
    %4397 = vmatprep.subr.bf16.mxu0 %v3691
    %4398 = vmatpush1.bf16.msra.mxu0 %v3690
    %4399 = vmatprep.subr.bf16.mxu0 %v3695
    %4400 = vmatpush1.bf16.msra.mxu0 %v3694
    %4401 = vmatprep.subr.bf16.mxu0 %v3699
    %4402 = vmatpush1.bf16.msra.mxu0 %v3698
    %4403 = vmatprep.subr.bf16.mxu0 %v3703
    %4404 = vmatpush1.bf16.msra.mxu0 %v3702
    %4405 = vmatprep.subr.bf16.mxu0 %v3707
    %4406 = vmatpush1.bf16.msra.mxu0 %v3706
    %4407 = vmatprep.subr.bf16.mxu0 %v3711
    %4408 = vmatpush1.bf16.msra.mxu0 %v3710
    %4409 = vmatprep.subr.bf16.mxu0 %v3715
    %4410 = vmatpush1.bf16.msra.mxu0 %v3714
    %4411 = vmatprep.subr.bf16.mxu0 %v3719
    %4412 = vmatpush1.bf16.msra.mxu0 %v3718
    %4413 = vmatprep.mubr.bf16.mxu0 %v3266
    %4414 = vmatmul.mubr.bf16.gmra.mrb[0].mxu0 %v3265
    %v4415 = vpop.f32.mrb[0].mxu0
    %v4416 = vadd.f32 %v4375, %v4415
    %v4417 = vpop.f32.mrb[0].mxu0
    %v4418 = vadd.f32 %v4377, %v4417
    %v4419 = vpop.f32.mrb[0].mxu0
    %v4420 = vpop.f32.mrb[0].mxu0
    %4421 = vdwg.mxu0
    %4422 = vmatprep.subr.bf16.mxu0 %v3723
    %4423 = vmatpush1.bf16.msra.mxu0 %v3722
    %4424 = vmatprep.subr.bf16.mxu0 %v3727
    %4425 = vmatpush1.bf16.msra.mxu0 %v3726
    %4426 = vmatprep.subr.bf16.mxu0 %v3731
    %4427 = vmatpush1.bf16.msra.mxu0 %v3730
    %4428 = vmatprep.subr.bf16.mxu0 %v3735
    %4429 = vmatpush1.bf16.msra.mxu0 %v3734
    %4430 = vmatprep.subr.bf16.mxu0 %v3739
    %4431 = vmatpush1.bf16.msra.mxu0 %v3738
    %4432 = vmatprep.subr.bf16.mxu0 %v3743
    %4433 = vmatpush1.bf16.msra.mxu0 %v3742
    %4434 = vmatprep.subr.bf16.mxu0 %v3747
    %4435 = vmatpush1.bf16.msra.mxu0 %v3746
    %4436 = vmatprep.subr.bf16.mxu0 %v3751
    %4437 = vmatpush1.bf16.msra.mxu0 %v3750
    %4438 = vmatprep.subr.bf16.mxu0 %v3755
    %4439 = vmatpush1.bf16.msra.mxu0 %v3754
    %4440 = vmatprep.subr.bf16.mxu0 %v3759
    %4441 = vmatpush1.bf16.msra.mxu0 %v3758
    %4442 = vmatprep.subr.bf16.mxu0 %v3763
    %4443 = vmatpush1.bf16.msra.mxu0 %v3762
    %4444 = vmatprep.subr.bf16.mxu0 %v3767
    %4445 = vmatpush1.bf16.msra.mxu0 %v3766
    %4446 = vmatprep.subr.bf16.mxu0 %v3771
    %4447 = vmatpush1.bf16.msra.mxu0 %v3770
    %4448 = vmatprep.subr.bf16.mxu0 %v3775
    %4449 = vmatpush1.bf16.msra.mxu0 %v3774
    %4450 = vmatprep.subr.bf16.mxu0 %v3779
    %4451 = vmatpush1.bf16.msra.mxu0 %v3778
    %4452 = vmatprep.subr.bf16.mxu0 %v3783
    %4453 = vmatpush1.bf16.msra.mxu0 %v3782
    %4454 = vmatprep.mubr.bf16.mxu0 %v3268
    %4455 = vmatmul.mubr.bf16.gmra.mrb[0].mxu0 %v3267
    %v4456 = vpop.f32.mrb[0].mxu0
    %v4457 = vadd.f32 %v4416, %v4456
    %v4458 = vpop.f32.mrb[0].mxu0
    %v4459 = vadd.f32 %v4418, %v4458
    %v4460 = vpop.f32.mrb[0].mxu0
    %v4461 = vpop.f32.mrb[0].mxu0
    %4462 = vdwg.mxu0
    %v4463 = vmax.f32 %v4129, 0.0
    %v4464 = vmax.f32 %v4131, 0.0
    %v4465 = vmax.f32 %v4457, 0.0
    %v4466 = vmax.f32 %v4459, 0.0
    %v4467 = vpack.c.bf16 %v4463, %v4463
    %v4468 = vpack.c.bf16 %v4464, %v4464
    %v4469 = vpack.c.bf16 %v4465, %v4465
    %v4470 = vpack.c.bf16 %v4466, %v4466
    %s4471 = sshll.u32 %s705, 4
    %4472 = dma.done %s519, %s4471
    %v4473 = vld [vmem:[#allocation8] sm:$0xff]
    %v4474 = vld [vmem:[#allocation8 + $0x8] sm:$0xff]
    %v4475 = vld [vmem:[#allocation8 + $0x10] sm:$0xff]
    %v4476 = vld [vmem:[#allocation8 + $0x18] sm:$0xff]
    %v4477 = vld [vmem:[#allocation8 + $0x20] sm:$0xff]
    %v4478 = vld [vmem:[#allocation8 + $0x28] sm:$0xff]
    %v4479 = vld [vmem:[#allocation8 + $0x30] sm:$0xff]
    %v4480 = vld [vmem:[#allocation8 + $0x38] sm:$0xff]
    %v4481 = vld [vmem:[#allocation8 + $0x40] sm:$0xff]
    %v4482 = vld [vmem:[#allocation8 + $0x48] sm:$0xff]
    %v4483 = vld [vmem:[#allocation8 + $0x50] sm:$0xff]
    %v4484 = vld [vmem:[#allocation8 + $0x58] sm:$0xff]
    %v4485 = vld [vmem:[#allocation8 + $0x60] sm:$0xff]
    %v4486 = vld [vmem:[#allocation8 + $0x68] sm:$0xff]
    %v4487 = vld [vmem:[#allocation8 + $0x70] sm:$0xff]
    %v4488 = vld [vmem:[#allocation8 + $0x78] sm:$0xff]
    %v4489 = vld [vmem:[#allocation8 + $0x80] sm:$0xff]
    %v4490 = vld [vmem:[#allocation8 + $0x88] sm:$0xff]
    %v4491 = vld [vmem:[#allocation8 + $0x90] sm:$0xff]
    %v4492 = vld [vmem:[#allocation8 + $0x98] sm:$0xff]
    %v4493 = vld [vmem:[#allocation8 + $0xa0] sm:$0xff]
    %v4494 = vld [vmem:[#allocation8 + $0xa8] sm:$0xff]
    %v4495 = vld [vmem:[#allocation8 + $0xb0] sm:$0xff]
    %v4496 = vld [vmem:[#allocation8 + $0xb8] sm:$0xff]
    %v4497 = vld [vmem:[#allocation8 + $0xc0] sm:$0xff]
    %v4498 = vld [vmem:[#allocation8 + $0xc8] sm:$0xff]
    %v4499 = vld [vmem:[#allocation8 + $0xd0] sm:$0xff]
    %v4500 = vld [vmem:[#allocation8 + $0xd8] sm:$0xff]
    %v4501 = vld [vmem:[#allocation8 + $0xe0] sm:$0xff]
    %v4502 = vld [vmem:[#allocation8 + $0xe8] sm:$0xff]
    %v4503 = vld [vmem:[#allocation8 + $0xf0] sm:$0xff]
    %v4504 = vld [vmem:[#allocation8 + $0xf8] sm:$0xff]
    %v4505 = vld [vmem:[#allocation8 + $0x100] sm:$0xff]
    %v4506 = vld [vmem:[#allocation8 + $0x108] sm:$0xff]
    %v4507 = vld [vmem:[#allocation8 + $0x110] sm:$0xff]
    %v4508 = vld [vmem:[#allocation8 + $0x118] sm:$0xff]
    %v4509 = vld [vmem:[#allocation8 + $0x120] sm:$0xff]
    %v4510 = vld [vmem:[#allocation8 + $0x128] sm:$0xff]
    %v4511 = vld [vmem:[#allocation8 + $0x130] sm:$0xff]
    %v4512 = vld [vmem:[#allocation8 + $0x138] sm:$0xff]
    %v4513 = vld [vmem:[#allocation8 + $0x140] sm:$0xff]
    %v4514 = vld [vmem:[#allocation8 + $0x148] sm:$0xff]
    %v4515 = vld [vmem:[#allocation8 + $0x150] sm:$0xff]
    %v4516 = vld [vmem:[#allocation8 + $0x158] sm:$0xff]
    %v4517 = vld [vmem:[#allocation8 + $0x160] sm:$0xff]
    %v4518 = vld [vmem:[#allocation8 + $0x168] sm:$0xff]
    %v4519 = vld [vmem:[#allocation8 + $0x170] sm:$0xff]
    %v4520 = vld [vmem:[#allocation8 + $0x178] sm:$0xff]
    %v4521 = vld [vmem:[#allocation8 + $0x180] sm:$0xff]
    %v4522 = vld [vmem:[#allocation8 + $0x188] sm:$0xff]
    %v4523 = vld [vmem:[#allocation8 + $0x190] sm:$0xff]
    %v4524 = vld [vmem:[#allocation8 + $0x198] sm:$0xff]
    %v4525 = vld [vmem:[#allocation8 + $0x1a0] sm:$0xff]
    %v4526 = vld [vmem:[#allocation8 + $0x1a8] sm:$0xff]
    %v4527 = vld [vmem:[#allocation8 + $0x1b0] sm:$0xff]
    %v4528 = vld [vmem:[#allocation8 + $0x1b8] sm:$0xff]
    %v4529 = vld [vmem:[#allocation8 + $0x1c0] sm:$0xff]
    %v4530 = vld [vmem:[#allocation8 + $0x1c8] sm:$0xff]
    %v4531 = vld [vmem:[#allocation8 + $0x1d0] sm:$0xff]
    %v4532 = vld [vmem:[#allocation8 + $0x1d8] sm:$0xff]
    %v4533 = vld [vmem:[#allocation8 + $0x1e0] sm:$0xff]
    %v4534 = vld [vmem:[#allocation8 + $0x1e8] sm:$0xff]
    %v4535 = vld [vmem:[#allocation8 + $0x1f0] sm:$0xff]
    %v4536 = vld [vmem:[#allocation8 + $0x1f8] sm:$0xff]
    %v4537 = vld [vmem:[#allocation8 + $0x200] sm:$0xff]
    %v4538 = vld [vmem:[#allocation8 + $0x208] sm:$0xff]
    %v4539 = vld [vmem:[#allocation8 + $0x210] sm:$0xff]
    %v4540 = vld [vmem:[#allocation8 + $0x218] sm:$0xff]
    %v4541 = vld [vmem:[#allocation8 + $0x220] sm:$0xff]
    %v4542 = vld [vmem:[#allocation8 + $0x228] sm:$0xff]
    %v4543 = vld [vmem:[#allocation8 + $0x230] sm:$0xff]
    %v4544 = vld [vmem:[#allocation8 + $0x238] sm:$0xff]
    %v4545 = vld [vmem:[#allocation8 + $0x240] sm:$0xff]
    %v4546 = vld [vmem:[#allocation8 + $0x248] sm:$0xff]
    %v4547 = vld [vmem:[#allocation8 + $0x250] sm:$0xff]
    %v4548 = vld [vmem:[#allocation8 + $0x258] sm:$0xff]
    %v4549 = vld [vmem:[#allocation8 + $0x260] sm:$0xff]
    %v4550 = vld [vmem:[#allocation8 + $0x268] sm:$0xff]
    %v4551 = vld [vmem:[#allocation8 + $0x270] sm:$0xff]
    %v4552 = vld [vmem:[#allocation8 + $0x278] sm:$0xff]
    %v4553 = vld [vmem:[#allocation8 + $0x280] sm:$0xff]
    %v4554 = vld [vmem:[#allocation8 + $0x288] sm:$0xff]
    %v4555 = vld [vmem:[#allocation8 + $0x290] sm:$0xff]
    %v4556 = vld [vmem:[#allocation8 + $0x298] sm:$0xff]
    %v4557 = vld [vmem:[#allocation8 + $0x2a0] sm:$0xff]
    %v4558 = vld [vmem:[#allocation8 + $0x2a8] sm:$0xff]
    %v4559 = vld [vmem:[#allocation8 + $0x2b0] sm:$0xff]
    %v4560 = vld [vmem:[#allocation8 + $0x2b8] sm:$0xff]
    %v4561 = vld [vmem:[#allocation8 + $0x2c0] sm:$0xff]
    %v4562 = vld [vmem:[#allocation8 + $0x2c8] sm:$0xff]
    %v4563 = vld [vmem:[#allocation8 + $0x2d0] sm:$0xff]
    %v4564 = vld [vmem:[#allocation8 + $0x2d8] sm:$0xff]
    %v4565 = vld [vmem:[#allocation8 + $0x2e0] sm:$0xff]
    %v4566 = vld [vmem:[#allocation8 + $0x2e8] sm:$0xff]
    %v4567 = vld [vmem:[#allocation8 + $0x2f0] sm:$0xff]
    %v4568 = vld [vmem:[#allocation8 + $0x2f8] sm:$0xff]
    %v4569 = vld [vmem:[#allocation8 + $0x300] sm:$0xff]
    %v4570 = vld [vmem:[#allocation8 + $0x308] sm:$0xff]
    %v4571 = vld [vmem:[#allocation8 + $0x310] sm:$0xff]
    %v4572 = vld [vmem:[#allocation8 + $0x318] sm:$0xff]
    %v4573 = vld [vmem:[#allocation8 + $0x320] sm:$0xff]
    %v4574 = vld [vmem:[#allocation8 + $0x328] sm:$0xff]
    %v4575 = vld [vmem:[#allocation8 + $0x330] sm:$0xff]
    %v4576 = vld [vmem:[#allocation8 + $0x338] sm:$0xff]
    %v4577 = vld [vmem:[#allocation8 + $0x340] sm:$0xff]
    %v4578 = vld [vmem:[#allocation8 + $0x348] sm:$0xff]
    %v4579 = vld [vmem:[#allocation8 + $0x350] sm:$0xff]
    %v4580 = vld [vmem:[#allocation8 + $0x358] sm:$0xff]
    %v4581 = vld [vmem:[#allocation8 + $0x360] sm:$0xff]
    %v4582 = vld [vmem:[#allocation8 + $0x368] sm:$0xff]
    %v4583 = vld [vmem:[#allocation8 + $0x370] sm:$0xff]
    %v4584 = vld [vmem:[#allocation8 + $0x378] sm:$0xff]
    %v4585 = vld [vmem:[#allocation8 + $0x380] sm:$0xff]
    %v4586 = vld [vmem:[#allocation8 + $0x388] sm:$0xff]
    %v4587 = vld [vmem:[#allocation8 + $0x390] sm:$0xff]
    %v4588 = vld [vmem:[#allocation8 + $0x398] sm:$0xff]
    %v4589 = vld [vmem:[#allocation8 + $0x3a0] sm:$0xff]
    %v4590 = vld [vmem:[#allocation8 + $0x3a8] sm:$0xff]
    %v4591 = vld [vmem:[#allocation8 + $0x3b0] sm:$0xff]
    %v4592 = vld [vmem:[#allocation8 + $0x3b8] sm:$0xff]
    %v4593 = vld [vmem:[#allocation8 + $0x3c0] sm:$0xff]
    %v4594 = vld [vmem:[#allocation8 + $0x3c8] sm:$0xff]
    %v4595 = vld [vmem:[#allocation8 + $0x3d0] sm:$0xff]
    %v4596 = vld [vmem:[#allocation8 + $0x3d8] sm:$0xff]
    %v4597 = vld [vmem:[#allocation8 + $0x3e0] sm:$0xff]
    %v4598 = vld [vmem:[#allocation8 + $0x3e8] sm:$0xff]
    %v4599 = vld [vmem:[#allocation8 + $0x3f0] sm:$0xff]
    %v4600 = vld [vmem:[#allocation8 + $0x3f8] sm:$0xff]
    %s4601 = scalar_lea.vmem [#allocation14], 6
    %v4602 = vld [vmem:[%s4601] ss:$8 sm:$0xf]
    %v4604 = vlaneseq
    %v4605 = vshrl.u32 %v4604, 7
    %v4606 = vsub.s32 0, %v4605
    %v4607 = vrot.slane %v4602, %v4606
    %v4608 = vlaneseq
    %v4609 = vshrl.u32 %v4608, 7
    %v4610 = vsub.s32 1, %v4609
    %v4611 = vrot.slane %v4602, %v4610
    %v4612 = vlaneseq
    %v4613 = vshrl.u32 %v4612, 7
    %v4614 = vsub.s32 2, %v4613
    %v4615 = vrot.slane %v4602, %v4614
    %v4616 = vlaneseq
    %v4617 = vshrl.u32 %v4616, 7
    %v4618 = vsub.s32 3, %v4617
    %v4619 = vrot.slane %v4602, %v4618
    %4624 = vmatprep.subr.bf16.mxu0 %v4474
    %4625 = vmatpush1.bf16.msra.mxu0 %v4473
    %4626 = vmatprep.subr.bf16.mxu0 %v4478
    %4627 = vmatpush1.bf16.msra.mxu0 %v4477
    %4628 = vmatprep.subr.bf16.mxu0 %v4482
    %4629 = vmatpush1.bf16.msra.mxu0 %v4481
    %4630 = vmatprep.subr.bf16.mxu0 %v4486
    %4631 = vmatpush1.bf16.msra.mxu0 %v4485
    %4632 = vmatprep.subr.bf16.mxu0 %v4490
    %4633 = vmatpush1.bf16.msra.mxu0 %v4489
    %4634 = vmatprep.subr.bf16.mxu0 %v4494
    %4635 = vmatpush1.bf16.msra.mxu0 %v4493
    %4636 = vmatprep.subr.bf16.mxu0 %v4498
    %4637 = vmatpush1.bf16.msra.mxu0 %v4497
    %4638 = vmatprep.subr.bf16.mxu0 %v4502
    %4639 = vmatpush1.bf16.msra.mxu0 %v4501
    %4640 = vmatprep.subr.bf16.mxu0 %v4506
    %4641 = vmatpush1.bf16.msra.mxu0 %v4505
    %4642 = vmatprep.subr.bf16.mxu0 %v4510
    %4643 = vmatpush1.bf16.msra.mxu0 %v4509
    %4644 = vmatprep.subr.bf16.mxu0 %v4514
    %4645 = vmatpush1.bf16.msra.mxu0 %v4513
    %4646 = vmatprep.subr.bf16.mxu0 %v4518
    %4647 = vmatpush1.bf16.msra.mxu0 %v4517
    %4648 = vmatprep.subr.bf16.mxu0 %v4522
    %4649 = vmatpush1.bf16.msra.mxu0 %v4521
    %4650 = vmatprep.subr.bf16.mxu0 %v4526
    %4651 = vmatpush1.bf16.msra.mxu0 %v4525
    %4652 = vmatprep.subr.bf16.mxu0 %v4530
    %4653 = vmatpush1.bf16.msra.mxu0 %v4529
    %4654 = vmatprep.subr.bf16.mxu0 %v4534
    %4655 = vmatpush1.bf16.msra.mxu0 %v4533
    %4656 = vmatprep.mubr.bf16.mxu0 %v4468
    %4657 = vmatmul.mubr.bf16.gmra.mrb[0].mxu0 %v4467
    %v4658 = vpop.f32.mrb[0].mxu0
    %v4659 = vadd.f32 %v4607, %v4658
    %v4660 = vpop.f32.mrb[0].mxu0
    %v4661 = vadd.f32 %v4611, %v4660
    %v4662 = vpop.f32.mrb[0].mxu0
    %v4663 = vpop.f32.mrb[0].mxu0
    %4664 = vdwg.mxu0
    %4665 = vmatprep.subr.bf16.mxu0 %v4538
    %4666 = vmatpush1.bf16.msra.mxu0 %v4537
    %4667 = vmatprep.subr.bf16.mxu0 %v4542
    %4668 = vmatpush1.bf16.msra.mxu0 %v4541
    %4669 = vmatprep.subr.bf16.mxu0 %v4546
    %4670 = vmatpush1.bf16.msra.mxu0 %v4545
    %4671 = vmatprep.subr.bf16.mxu0 %v4550
    %4672 = vmatpush1.bf16.msra.mxu0 %v4549
    %4673 = vmatprep.subr.bf16.mxu0 %v4554
    %4674 = vmatpush1.bf16.msra.mxu0 %v4553
    %4675 = vmatprep.subr.bf16.mxu0 %v4558
    %4676 = vmatpush1.bf16.msra.mxu0 %v4557
    %4677 = vmatprep.subr.bf16.mxu0 %v4562
    %4678 = vmatpush1.bf16.msra.mxu0 %v4561
    %4679 = vmatprep.subr.bf16.mxu0 %v4566
    %4680 = vmatpush1.bf16.msra.mxu0 %v4565
    %4681 = vmatprep.subr.bf16.mxu0 %v4570
    %4682 = vmatpush1.bf16.msra.mxu0 %v4569
    %4683 = vmatprep.subr.bf16.mxu0 %v4574
    %4684 = vmatpush1.bf16.msra.mxu0 %v4573
    %4685 = vmatprep.subr.bf16.mxu0 %v4578
    %4686 = vmatpush1.bf16.msra.mxu0 %v4577
    %4687 = vmatprep.subr.bf16.mxu0 %v4582
    %4688 = vmatpush1.bf16.msra.mxu0 %v4581
    %4689 = vmatprep.subr.bf16.mxu0 %v4586
    %4690 = vmatpush1.bf16.msra.mxu0 %v4585
    %4691 = vmatprep.subr.bf16.mxu0 %v4590
    %4692 = vmatpush1.bf16.msra.mxu0 %v4589
    %4693 = vmatprep.subr.bf16.mxu0 %v4594
    %4694 = vmatpush1.bf16.msra.mxu0 %v4593
    %4695 = vmatprep.subr.bf16.mxu0 %v4598
    %4696 = vmatpush1.bf16.msra.mxu0 %v4597
    %4697 = vmatprep.mubr.bf16.mxu0 %v4470
    %4698 = vmatmul.mubr.bf16.gmra.mrb[0].mxu0 %v4469
    %v4699 = vpop.f32.mrb[0].mxu0
    %v4700 = vadd.f32 %v4659, %v4699
    %v4701 = vpop.f32.mrb[0].mxu0
    %v4702 = vadd.f32 %v4661, %v4701
    %v4703 = vpop.f32.mrb[0].mxu0
    %v4704 = vpop.f32.mrb[0].mxu0
    %4705 = vdwg.mxu0
    %4706 = vmatprep.subr.bf16.mxu0 %v4476
    %4707 = vmatpush1.bf16.msra.mxu0 %v4475
    %4708 = vmatprep.subr.bf16.mxu0 %v4480
    %4709 = vmatpush1.bf16.msra.mxu0 %v4479
    %4710 = vmatprep.subr.bf16.mxu0 %v4484
    %4711 = vmatpush1.bf16.msra.mxu0 %v4483
    %4712 = vmatprep.subr.bf16.mxu0 %v4488
    %4713 = vmatpush1.bf16.msra.mxu0 %v4487
    %4714 = vmatprep.subr.bf16.mxu0 %v4492
    %4715 = vmatpush1.bf16.msra.mxu0 %v4491
    %4716 = vmatprep.subr.bf16.mxu0 %v4496
    %4717 = vmatpush1.bf16.msra.mxu0 %v4495
    %4718 = vmatprep.subr.bf16.mxu0 %v4500
    %4719 = vmatpush1.bf16.msra.mxu0 %v4499
    %4720 = vmatprep.subr.bf16.mxu0 %v4504
    %4721 = vmatpush1.bf16.msra.mxu0 %v4503
    %4722 = vmatprep.subr.bf16.mxu0 %v4508
    %4723 = vmatpush1.bf16.msra.mxu0 %v4507
    %4724 = vmatprep.subr.bf16.mxu0 %v4512
    %4725 = vmatpush1.bf16.msra.mxu0 %v4511
    %4726 = vmatprep.subr.bf16.mxu0 %v4516
    %4727 = vmatpush1.bf16.msra.mxu0 %v4515
    %4728 = vmatprep.subr.bf16.mxu0 %v4520
    %4729 = vmatpush1.bf16.msra.mxu0 %v4519
    %4730 = vmatprep.subr.bf16.mxu0 %v4524
    %4731 = vmatpush1.bf16.msra.mxu0 %v4523
    %4732 = vmatprep.subr.bf16.mxu0 %v4528
    %4733 = vmatpush1.bf16.msra.mxu0 %v4527
    %4734 = vmatprep.subr.bf16.mxu0 %v4532
    %4735 = vmatpush1.bf16.msra.mxu0 %v4531
    %4736 = vmatprep.subr.bf16.mxu0 %v4536
    %4737 = vmatpush1.bf16.msra.mxu0 %v4535
    %4738 = vmatprep.mubr.bf16.mxu0 %v4468
    %4739 = vmatmul.mubr.bf16.gmra.mrb[0].mxu0 %v4467
    %v4740 = vpop.f32.mrb[0].mxu0
    %v4741 = vadd.f32 %v4615, %v4740
    %v4742 = vpop.f32.mrb[0].mxu0
    %v4743 = vadd.f32 %v4619, %v4742
    %v4744 = vpop.f32.mrb[0].mxu0
    %v4745 = vpop.f32.mrb[0].mxu0
    %4746 = vdwg.mxu0
    %4747 = vmatprep.subr.bf16.mxu0 %v4540
    %4748 = vmatpush1.bf16.msra.mxu0 %v4539
    %4749 = vmatprep.subr.bf16.mxu0 %v4544
    %4750 = vmatpush1.bf16.msra.mxu0 %v4543
    %4751 = vmatprep.subr.bf16.mxu0 %v4548
    %4752 = vmatpush1.bf16.msra.mxu0 %v4547
    %4753 = vmatprep.subr.bf16.mxu0 %v4552
    %4754 = vmatpush1.bf16.msra.mxu0 %v4551
    %4755 = vmatprep.subr.bf16.mxu0 %v4556
    %4756 = vmatpush1.bf16.msra.mxu0 %v4555
    %4757 = vmatprep.subr.bf16.mxu0 %v4560
    %4758 = vmatpush1.bf16.msra.mxu0 %v4559
    %4759 = vmatprep.subr.bf16.mxu0 %v4564
    %4760 = vmatpush1.bf16.msra.mxu0 %v4563
    %4761 = vmatprep.subr.bf16.mxu0 %v4568
    %4762 = vmatpush1.bf16.msra.mxu0 %v4567
    %4763 = vmatprep.subr.bf16.mxu0 %v4572
    %4764 = vmatpush1.bf16.msra.mxu0 %v4571
    %4765 = vmatprep.subr.bf16.mxu0 %v4576
    %4766 = vmatpush1.bf16.msra.mxu0 %v4575
    %4767 = vmatprep.subr.bf16.mxu0 %v4580
    %4768 = vmatpush1.bf16.msra.mxu0 %v4579
    %4769 = vmatprep.subr.bf16.mxu0 %v4584
    %4770 = vmatpush1.bf16.msra.mxu0 %v4583
    %4771 = vmatprep.subr.bf16.mxu0 %v4588
    %4772 = vmatpush1.bf16.msra.mxu0 %v4587
    %4773 = vmatprep.subr.bf16.mxu0 %v4592
    %4774 = vmatpush1.bf16.msra.mxu0 %v4591
    %4775 = vmatprep.subr.bf16.mxu0 %v4596
    %4776 = vmatpush1.bf16.msra.mxu0 %v4595
    %4777 = vmatprep.subr.bf16.mxu0 %v4600
    %4778 = vmatpush1.bf16.msra.mxu0 %v4599
    %4779 = vmatprep.mubr.bf16.mxu0 %v4470
    %4780 = vmatmul.mubr.bf16.gmra.mrb[0].mxu0 %v4469
    %v4781 = vpop.f32.mrb[0].mxu0
    %v4782 = vadd.f32 %v4741, %v4781
    %v4783 = vpop.f32.mrb[0].mxu0
    %v4784 = vadd.f32 %v4743, %v4783
    %v4785 = vpop.f32.mrb[0].mxu0
    %v4786 = vpop.f32.mrb[0].mxu0
    %4787 = vdwg.mxu0
    %v4788 = vmax.f32 %v4700, 0.0
    %v4789 = vmax.f32 %v4702, 0.0
    %v4790 = vmax.f32 %v4782, 0.0
    %v4791 = vmax.f32 %v4784, 0.0
    %v4792 = vpack.c.bf16 %v4788, %v4788
    %v4793 = vpack.c.bf16 %v4789, %v4789
    %v4794 = vpack.c.bf16 %v4790, %v4790
    %v4795 = vpack.c.bf16 %v4791, %v4791
    %s4796 = smul.u32 %s704, 1
    %s4797 = sshll.u32 %s4796, 4
    %4798 = dma.done %s554, %s4797
    %v4799 = vld [vmem:[#allocation9] sm:$0xff]
    %v4800 = vld [vmem:[#allocation9 + $0x8] sm:$0xff]
    %v4801 = vld [vmem:[#allocation9 + $0x10] sm:$0xff]
    %v4802 = vld [vmem:[#allocation9 + $0x18] sm:$0xff]
    %v4803 = vld [vmem:[#allocation9 + $0x20] sm:$0xff]
    %v4804 = vld [vmem:[#allocation9 + $0x28] sm:$0xff]
    %v4805 = vld [vmem:[#allocation9 + $0x30] sm:$0xff]
    %v4806 = vld [vmem:[#allocation9 + $0x38] sm:$0xff]
    %v4807 = vld [vmem:[#allocation9 + $0x40] sm:$0xff]
    %v4808 = vld [vmem:[#allocation9 + $0x48] sm:$0xff]
    %v4809 = vld [vmem:[#allocation9 + $0x50] sm:$0xff]
    %v4810 = vld [vmem:[#allocation9 + $0x58] sm:$0xff]
    %v4811 = vld [vmem:[#allocation9 + $0x60] sm:$0xff]
    %v4812 = vld [vmem:[#allocation9 + $0x68] sm:$0xff]
    %v4813 = vld [vmem:[#allocation9 + $0x70] sm:$0xff]
    %v4814 = vld [vmem:[#allocation9 + $0x78] sm:$0xff]
    %v4815 = vld [vmem:[#allocation9 + $0x80] sm:$0xff]
    %v4816 = vld [vmem:[#allocation9 + $0x88] sm:$0xff]
    %v4817 = vld [vmem:[#allocation9 + $0x90] sm:$0xff]
    %v4818 = vld [vmem:[#allocation9 + $0x98] sm:$0xff]
    %v4819 = vld [vmem:[#allocation9 + $0xa0] sm:$0xff]
    %v4820 = vld [vmem:[#allocation9 + $0xa8] sm:$0xff]
    %v4821 = vld [vmem:[#allocation9 + $0xb0] sm:$0xff]
    %v4822 = vld [vmem:[#allocation9 + $0xb8] sm:$0xff]
    %v4823 = vld [vmem:[#allocation9 + $0xc0] sm:$0xff]
    %v4824 = vld [vmem:[#allocation9 + $0xc8] sm:$0xff]
    %v4825 = vld [vmem:[#allocation9 + $0xd0] sm:$0xff]
    %v4826 = vld [vmem:[#allocation9 + $0xd8] sm:$0xff]
    %v4827 = vld [vmem:[#allocation9 + $0xe0] sm:$0xff]
    %v4828 = vld [vmem:[#allocation9 + $0xe8] sm:$0xff]
    %v4829 = vld [vmem:[#allocation9 + $0xf0] sm:$0xff]
    %v4830 = vld [vmem:[#allocation9 + $0xf8] sm:$0xff]
    %v4831 = vld [vmem:[#allocation14 + $0x7] ss:$0 sm:$0xff]
    %4832 = vmatprep.subr.bf16.mxu0 0
    %4833 = vmatpush1.bf16.msra.mxu0 %v4799
    %4834 = vmatprep.subr.bf16.mxu0 0
    %4835 = vmatpush1.bf16.msra.mxu0 %v4800
    %4836 = vmatprep.subr.bf16.mxu0 0
    %4837 = vmatpush1.bf16.msra.mxu0 %v4801
    %4838 = vmatprep.subr.bf16.mxu0 0
    %4839 = vmatpush1.bf16.msra.mxu0 %v4802
    %4840 = vmatprep.subr.bf16.mxu0 0
    %4841 = vmatpush1.bf16.msra.mxu0 %v4803
    %4842 = vmatprep.subr.bf16.mxu0 0
    %4843 = vmatpush1.bf16.msra.mxu0 %v4804
    %4844 = vmatprep.subr.bf16.mxu0 0
    %4845 = vmatpush1.bf16.msra.mxu0 %v4805
    %4846 = vmatprep.subr.bf16.mxu0 0
    %4847 = vmatpush1.bf16.msra.mxu0 %v4806
    %4848 = vmatprep.subr.bf16.mxu0 0
    %4849 = vmatpush1.bf16.msra.mxu0 %v4807
    %4850 = vmatprep.subr.bf16.mxu0 0
    %4851 = vmatpush1.bf16.msra.mxu0 %v4808
    %4852 = vmatprep.subr.bf16.mxu0 0
    %4853 = vmatpush1.bf16.msra.mxu0 %v4809
    %4854 = vmatprep.subr.bf16.mxu0 0
    %4855 = vmatpush1.bf16.msra.mxu0 %v4810
    %4856 = vmatprep.subr.bf16.mxu0 0
    %4857 = vmatpush1.bf16.msra.mxu0 %v4811
    %4858 = vmatprep.subr.bf16.mxu0 0
    %4859 = vmatpush1.bf16.msra.mxu0 %v4812
    %4860 = vmatprep.subr.bf16.mxu0 0
    %4861 = vmatpush1.bf16.msra.mxu0 %v4813
    %4862 = vmatprep.subr.bf16.mxu0 0
    %4863 = vmatpush1.bf16.msra.mxu0 %v4814
    %4864 = vmatprep.mubr.bf16.mxu0 %v4793
    %4865 = vmatmul.mubr.bf16.gmra.mrb[0].mxu0 %v4792
    %v4866 = vpop.f32.mrb[0].mxu0
    %v4867 = vadd.f32 %v4831, %v4866
    %v4868 = vpop.f32.mrb[0].mxu0
    %v4869 = vpop.f32.mrb[0].mxu0
    %v4870 = vpop.f32.mrb[0].mxu0
    %4871 = vdwg.mxu0
    %4872 = vmatprep.subr.bf16.mxu0 0
    %4873 = vmatpush1.bf16.msra.mxu0 %v4815
    %4874 = vmatprep.subr.bf16.mxu0 0
    %4875 = vmatpush1.bf16.msra.mxu0 %v4816
    %4876 = vmatprep.subr.bf16.mxu0 0
    %4877 = vmatpush1.bf16.msra.mxu0 %v4817
    %4878 = vmatprep.subr.bf16.mxu0 0
    %4879 = vmatpush1.bf16.msra.mxu0 %v4818
    %4880 = vmatprep.subr.bf16.mxu0 0
    %4881 = vmatpush1.bf16.msra.mxu0 %v4819
    %4882 = vmatprep.subr.bf16.mxu0 0
    %4883 = vmatpush1.bf16.msra.mxu0 %v4820
    %4884 = vmatprep.subr.bf16.mxu0 0
    %4885 = vmatpush1.bf16.msra.mxu0 %v4821
    %4886 = vmatprep.subr.bf16.mxu0 0
    %4887 = vmatpush1.bf16.msra.mxu0 %v4822
    %4888 = vmatprep.subr.bf16.mxu0 0
    %4889 = vmatpush1.bf16.msra.mxu0 %v4823
    %4890 = vmatprep.subr.bf16.mxu0 0
    %4891 = vmatpush1.bf16.msra.mxu0 %v4824
    %4892 = vmatprep.subr.bf16.mxu0 0
    %4893 = vmatpush1.bf16.msra.mxu0 %v4825
    %4894 = vmatprep.subr.bf16.mxu0 0
    %4895 = vmatpush1.bf16.msra.mxu0 %v4826
    %4896 = vmatprep.subr.bf16.mxu0 0
    %4897 = vmatpush1.bf16.msra.mxu0 %v4827
    %4898 = vmatprep.subr.bf16.mxu0 0
    %4899 = vmatpush1.bf16.msra.mxu0 %v4828
    %4900 = vmatprep.subr.bf16.mxu0 0
    %4901 = vmatpush1.bf16.msra.mxu0 %v4829
    %4902 = vmatprep.subr.bf16.mxu0 0
    %4903 = vmatpush1.bf16.msra.mxu0 %v4830
    %4904 = vmatprep.mubr.bf16.mxu0 %v4795
    %4905 = vmatmul.mubr.bf16.gmra.mrb[0].mxu0 %v4794
    %v4906 = vpop.f32.mrb[0].mxu0
    %v4907 = vadd.f32 %v4867, %v4906
    %v4908 = vpop.f32.mrb[0].mxu0
    %v4909 = vpop.f32.mrb[0].mxu0
    %v4910 = vpop.f32.mrb[0].mxu0
    %4911 = vdwg.mxu0
    %4912 = vst [vmem:[#allocation16] sm:$0xff] %v4907
    // Predicated region
    $region56: #{aae_forward.1} parent=1 // pred_check
      _
    $region57: #{aae_forward.1} parent=1 // pred_check_branch
      %4914 = sbr.rel (0) target = $region59
    $region58: #{aae_forward.1} parent=1 // pred_region
      _
    $region59: #{aae_forward.1} parent=1 // pred_fallthru
      _
    // Predicated region
    $region60: #{aae_forward.1} parent=1 // pred_check
      _
    $region61: #{aae_forward.1} parent=1 // pred_check_branch
      %4916 = sbr.rel (0) target = $region63
    $region62: #{aae_forward.1} parent=1 // pred_region
      %s4918 = ssub.s32 128, 128
      %4919 = vsyncadd [#allocation13], %s4918
      %s4921 = sshll.u32 [#allocation16], 4
      %s4922 = int_to_ptr.vmem [resolvable:$true] %s4921
      %4924 = dma.vmem_to_hbm [thread:$0]  %s4922, 128, %s11, [#allocation13]
    $region63: #{aae_forward.1} parent=1 // pred_fallthru
      _
    // Predicated region
    $region64: #{aae_forward.1} parent=1 // pred_check
      _
    $region65: #{aae_forward.1} parent=1 // pred_check_branch
      %4926 = sbr.rel (0) target = $region67
    $region66: #{aae_forward.1} parent=1 // pred_region
      _
    $region67: #{aae_forward.1} parent=1 // pred_fallthru
      _
    // Predicated region
    $region68: #{aae_forward.1} parent=1 // pred_check
      _
    $region69: #{aae_forward.1} parent=1 // pred_check_branch
      %4928 = sbr.rel (0) target = $region71
    $region70: #{aae_forward.1} parent=1 // pred_region
      %4929 = dma.done [#allocation13], 128
    $region71: #{aae_forward.1} parent=1 // pred_fallthru
      _
    %4930 = vsyncpa [#allocation12], 1
    %4931 = vsyncpa [#allocation15], 1
    %4932 = vsyncpa [#allocation13], 1
  %4933 = vsyncmov [#allocation10]
  %s4934 = vpop.sfrf %4933
  %p4935 = scmp.eq.s32.totalorder %s4934, 0
  %p4936 = pneg %p4935
  %4938 = shalt.err (%p4936)
  %s4939 = scalar_lea.sflag [#allocation10], 1
  %4940 = vsyncmov %s4939
  %s4941 = vpop.sfrf %4940
  %p4942 = scmp.eq.s32.totalorder %s4941, 0
  %p4943 = pneg %p4942
  %4945 = shalt.err (%p4943)
  %s4946 = scalar_lea.sflag [#allocation10], 2
  %4947 = vsyncmov %s4946
  %s4948 = vpop.sfrf %4947
  %p4949 = scmp.eq.s32.totalorder %s4948, 0
  %p4950 = pneg %p4949
  %4952 = shalt.err (%p4950)
  %s4953 = scalar_lea.sflag [#allocation10], 3
  %4954 = vsyncmov %s4953
  %s4955 = vpop.sfrf %4954
  %p4956 = scmp.eq.s32.totalorder %s4955, 0
  %p4957 = pneg %p4956
  %4959 = shalt.err (%p4957)
  %s4960 = scalar_lea.sflag [#allocation10], 4
  %4961 = vsyncmov %s4960
  %s4962 = vpop.sfrf %4961
  %p4963 = scmp.eq.s32.totalorder %s4962, 0
  %p4964 = pneg %p4963
  %4966 = shalt.err (%p4964)
  %s4967 = scalar_lea.sflag [#allocation10], 5
  %4968 = vsyncmov %s4967
  %s4969 = vpop.sfrf %4968
  %p4970 = scmp.eq.s32.totalorder %s4969, 0
  %p4971 = pneg %p4970
  %4973 = shalt.err (%p4971)
  %s4974 = scalar_lea.sflag [#allocation10], 6
  %4975 = vsyncmov %s4974
  %s4976 = vpop.sfrf %4975
  %p4977 = scmp.eq.s32.totalorder %s4976, 0
  %p4978 = pneg %p4977
  %4980 = shalt.err (%p4978)
  %s4981 = scalar_lea.sflag [#allocation10], 7
  %4982 = vsyncmov %s4981
  %s4983 = vpop.sfrf %4982
  %p4984 = scmp.eq.s32.totalorder %s4983, 0
  %p4985 = pneg %p4984
  %4987 = shalt.err (%p4985)

</llo_original>
